<compile_context>
chip_gen: v7x
topology: tpu7x:2x2x1
jax: 0.10.0
libtpu: 0.0.40
codegen_flags: <defaults>
</compile_context>

<pallas_src>
import numpy as np
import jax
import jax.numpy as jnp
from jax import lax
from jax.experimental import pallas as pl
from jax.experimental.pallas import tpu as pltpu

F32 = jnp.float32
BF16 = jnp.bfloat16
LN_EPS = 1e-5
INV_SQRT2 = float(1.0 / np.sqrt(2.0))
NEG_BIG = -1e30
PARALLEL = pltpu.CompilerParams(dimension_semantics=("parallel",))


# ---------------------------------------------------------------------------
# In-kernel helpers (traced inside kernel bodies, all on (channels, L) tiles)
# ---------------------------------------------------------------------------

def _layernorm_cl(x, w, b):
    """WithBias LayerNorm over the channel (sublane) axis. x:(C,L); w,b:(C,1)."""
    mu = jnp.mean(x, axis=0, keepdims=True)
    xc = x - mu
    var = jnp.mean(xc * xc, axis=0, keepdims=True)
    return xc * lax.rsqrt(var + LN_EPS) * w + b


def _l2norm_rows(x):
    """F.normalize(x, dim=-1): rows normalized, norm clamped at 1e-12."""
    s = jnp.sum(x * x, axis=-1, keepdims=True)
    return x * jnp.minimum(lax.rsqrt(s), 1e12)


def _softmax_rows(x):
    x = x - jnp.max(x, axis=-1, keepdims=True)
    e = jnp.exp(x)
    return e / jnp.sum(e, axis=-1, keepdims=True)      # exact divide


def _tap_stack(y, colmask, Ww):
    """(9*Cin, L) bf16 stack of the nine 3x3-tap shifted copies of y:(Cin,L) f32.

    Tap t = (a+1)*3 + (b+1) (== ky*3 + kx of a Conv2d kernel): row block t holds
    y shifted so column l reads the spatial neighbour (h+a, w+b) with zero
    padding.  Row over/under-run is handled by the zero pad of the flat buffer,
    column wrap by the two column masks.  The stacked result feeds ONE K=9*Cin
    MXU matmul instead of nine shallow K=Cin matmuls.
    """
    cin, L = y.shape
    pad = jnp.zeros((cin, Ww + 1), dtype=y.dtype)
    ypad = jnp.concatenate([pad, y, pad], axis=1)        # (Cin, L + 2*Ww + 2)
    cm_l = jnp.broadcast_to(colmask[0:1, :], (cin, L))   # valid where w-1 >= 0
    cm_r = jnp.broadcast_to(colmask[1:2, :], (cin, L))   # valid where w+1 < Ww
    parts = []
    for a in (-1, 0, 1):
        for b in (-1, 0, 1):
            d = a * Ww + b
            t = y if d == 0 else ypad[:, Ww + 1 + d: Ww + 1 + d + L]
            if b == -1:
                t = t * cm_l
            elif b == 1:
                t = t * cm_r
            parts.append(t.astype(BF16))
    return jnp.concatenate(parts, axis=0)                # (9*Cin, L) bf16


# ---------------------------------------------------------------------------
# Fused Pallas kernels (grid = (B,), "parallel")
# ---------------------------------------------------------------------------

def mask_v_call(x, ln_w, ln_b, w_eff, colmask, Ww):
    """K1: LN1 + folded (qkv 1x1 * dense-3x3 v-slice * project_out) 3x3 conv.

    One (C, 9C) x (9C, L) MXU matmul per image; output emitted in bf16 because
    it is only ever consumed as an MXU operand (the block attention)."""
    B, C, L = x.shape

    def kernel(x_ref, lnw_ref, lnb_ref, w_ref, cm_ref, o_ref):
        y = _layernorm_cl(x_ref[0], lnw_ref[...], lnb_ref[...])
        ys = _tap_stack(y, cm_ref[...], Ww)                        # (9C, L) bf16
        o_ref[0] = jnp.dot(w_ref[...], ys,
                           preferred_element_type=F32).astype(BF16)

    return pl.pallas_call(
        kernel,
        out_shape=jax.ShapeDtypeStruct((B, C, L), BF16),
        grid=(B,),
        in_specs=[
            pl.BlockSpec((1, C, L), lambda i: (i, 0, 0)),
            pl.BlockSpec((C, 1), lambda i: (0, 0)),
            pl.BlockSpec((C, 1), lambda i: (0, 0)),
            pl.BlockSpec((C, 9 * C), lambda i: (0, 0)),
            pl.BlockSpec((2, L), lambda i: (0, 0)),
        ],
        out_specs=pl.BlockSpec((1, C, L), lambda i: (i, 0, 0)),
        compiler_params=PARALLEL,
    )(x, ln_w, ln_b, w_eff, colmask)


def mask_attn_call(m_r, v_r):
    """K2: block attention from the mask applied to all channels at once.

    TODO(synk): Mask's temperature is torch.ones(b,1,1,1) created in forward()
    -> constant 1.0, so the multiply is folded out."""
    B, NN, Lm = m_r.shape
    CLv = v_r.shape[2]

    def kernel(m_ref, v_ref, o_ref):
        mn = _l2norm_rows(m_ref[0])                                # (NN, Lm)
        att = lax.dot_general(mn.astype(BF16), mn.astype(BF16),
                              (((1,), (1,)), ((), ())),
                              preferred_element_type=F32)          # (NN, NN)
        p = _softmax_rows(att)
        o_ref[0] = jnp.dot(p.astype(BF16), v_ref[0],
                           preferred_element_type=F32)             # (NN, C*Lv)

    return pl.pallas_call(
        kernel,
        out_shape=jax.ShapeDtypeStruct((B, NN, CLv), F32),
        grid=(B,),
        in_specs=[
            pl.BlockSpec((1, NN, Lm), lambda i: (i, 0, 0)),
            pl.BlockSpec((1, NN, CLv), lambda i: (i, 0, 0)),
        ],
        out_specs=pl.BlockSpec((1, NN, CLv), lambda i: (i, 0, 0)),
        compiler_params=PARALLEL,
    )(m_r, v_r)


def attn_branch_call(x, mo, ln_w, ln_b, w_qkvdw, w_proj, temp_rows, headmask,
                     colmask, Ww):
    """K3: x1 = x + mask_out ; out = x1 + Attention(LN1(x1)) — fully fused.

    qkv 1x1 + depthwise 3x3 folded into one (3C, 9C) K=144 matmul; both heads
    batched as one (C, C) Gram with a block-diagonal additive mask; project_out
    applied as a single (C, C) x (C, L) matmul."""
    B, C, L = x.shape

    def kernel(x_ref, mo_ref, lnw_ref, lnb_ref, wq_ref, wp_ref, tr_ref,
               hm_ref, cm_ref, o_ref):
        x1 = x_ref[0] + mo_ref[0]                                  # fused residual
        y = _layernorm_cl(x1, lnw_ref[...], lnb_ref[...])
        ys = _tap_stack(y, cm_ref[...], Ww)                        # (9C, L) bf16
        qkv = jnp.dot(wq_ref[...], ys, preferred_element_type=F32) # (3C, L) f32
        q, k, v = qkv[0:C, :], qkv[C:2 * C, :], qkv[2 * C:3 * C, :]
        qn = _l2norm_rows(q) * tr_ref[...]        # per-head temperature folded in
        kn = _l2norm_rows(k)
        att = lax.dot_general(qn.astype(BF16), kn.astype(BF16),
                              (((1,), (1,)), ((), ())),
                              preferred_element_type=F32) + hm_ref[...]
        p = _softmax_rows(att)                                     # (C, C)
        oatt = jnp.dot(p.astype(BF16), v.astype(BF16),
                       preferred_element_type=F32)                 # (C, L)
        out = jnp.dot(wp_ref[...], oatt.astype(BF16),
                      preferred_element_type=F32)                  # project_out
        o_ref[0] = x1 + out                                        # fused residual

    return pl.pallas_call(
        kernel,
        out_shape=jax.ShapeDtypeStruct((B, C, L), F32),
        grid=(B,),
        in_specs=[
            pl.BlockSpec((1, C, L), lambda i: (i, 0, 0)),
            pl.BlockSpec((1, C, L), lambda i: (i, 0, 0)),
            pl.BlockSpec((C, 1), lambda i: (0, 0)),
            pl.BlockSpec((C, 1), lambda i: (0, 0)),
            pl.BlockSpec((3 * C, 9 * C), lambda i: (0, 0)),
            pl.BlockSpec((C, C), lambda i: (0, 0)),
            pl.BlockSpec((C, 1), lambda i: (0, 0)),
            pl.BlockSpec((C, C), lambda i: (0, 0)),
            pl.BlockSpec((2, L), lambda i: (0, 0)),
        ],
        out_specs=pl.BlockSpec((1, C, L), lambda i: (i, 0, 0)),
        compiler_params=PARALLEL,
    )(x, mo, ln_w, ln_b, w_qkvdw, w_proj, temp_rows, headmask, colmask)


def ffn_branch_call(x, ln_w, ln_b, w_indw, w_out, colmask, hidden, Ww):
    """K4: out = x + FeedForward(LN2(x)) — fully fused.

    project_in 1x1 + depthwise 3x3 folded into one (2*hidden, 9C) K=144 matmul,
    exact-erf GELU gate in f32, fused residual."""
    B, C, L = x.shape
    H2 = 2 * hidden

    def kernel(x_ref, lnw_ref, lnb_ref, wi_ref, wo_ref, cm_ref, o_ref):
        xv = x_ref[0]
        y = _layernorm_cl(xv, lnw_ref[...], lnb_ref[...])
        ys = _tap_stack(y, cm_ref[...], Ww)                        # (9C, L) bf16
        g2 = jnp.dot(wi_ref[...], ys, preferred_element_type=F32)  # (2*hidden, L)
        x1, x2 = g2[0:hidden, :], g2[hidden:H2, :]
        g = 0.5 * x1 * (1.0 + lax.erf(x1 * INV_SQRT2)) * x2        # exact GELU gate
        out = jnp.dot(wo_ref[...], g.astype(BF16),
                      preferred_element_type=F32)                  # (C, L)
        o_ref[0] = xv + out                                        # fused residual

    return pl.pallas_call(
        kernel,
        out_shape=jax.ShapeDtypeStruct((B, C, L), F32),
        grid=(B,),
        in_specs=[
            pl.BlockSpec((1, C, L), lambda i: (i, 0, 0)),
            pl.BlockSpec((C, 1), lambda i: (0, 0)),
            pl.BlockSpec((C, 1), lambda i: (0, 0)),
            pl.BlockSpec((H2, 9 * C), lambda i: (0, 0)),
            pl.BlockSpec((C, hidden), lambda i: (0, 0)),
            pl.BlockSpec((2, L), lambda i: (0, 0)),
        ],
        out_specs=pl.BlockSpec((1, C, L), lambda i: (i, 0, 0)),
        compiler_params=PARALLEL,
    )(x, ln_w, ln_b, w_indw, w_out, colmask)


# ---------------------------------------------------------------------------
# Host-side helpers / parameters
# ---------------------------------------------------------------------------

def _col_boundary_masks(Hh, Ww):
    """(2, H*W) f32: row 0 = valid for a (w-1) tap, row 1 = valid for (w+1)."""
    w_idx = np.arange(Hh * Ww, dtype=np.int64) % Ww
    m = np.stack([w_idx >= 1, w_idx <= Ww - 2]).astype(np.float32)
    return jnp.asarray(m)


def init_params(key, dim, heads, ffn_factor):
    # All convs bias=False (as in the Mask module).  TODO(synk): the `bias`
    # flag of the reference module is not implemented (bias terms omitted).
    hidden = int(dim * ffn_factor)
    ks = jax.random.split(key, 9)
    sm, s = 0.15, 0.3
    return {
        'norm1_w': jnp.ones((1, dim), F32),
        'norm1_b': jnp.zeros((1, dim), F32),
        'norm2_w': jnp.ones((1, dim), F32),
        'norm2_b': jnp.zeros((1, dim), F32),
        # Mask sub-module (its own norm1 is unused in forward)
        'mask_qkv_w': jax.random.normal(ks[0], (dim, 3 * dim), F32) * sm,
        'mask_dw_w': jax.random.normal(ks[1], (9, 3 * dim, 3 * dim), F32) * sm,
        'mask_proj_w': jax.random.normal(ks[2], (dim, dim), F32) * sm,
        # Attention sub-module
        'attn_temp': jnp.ones((heads,), F32),
        'attn_qkv_w': jax.random.normal(ks[3], (dim, 3 * dim), F32) * s,
        'attn_dw_w': jax.random.normal(ks[4], (9, 3 * dim), F32) * s,
        'attn_proj_w': jax.random.normal(ks[5], (dim, dim), F32) * s,
        # FeedForward
        'ffn_in_w': jax.random.normal(ks[6], (dim, 2 * hidden), F32) * s,
        'ffn_dw_w': jax.random.normal(ks[7], (9, 2 * hidden), F32) * s,
        'ffn_out_w': jax.random.normal(ks[8], (hidden, dim), F32) * s,
    }


# ---------------------------------------------------------------------------
# Full block forward (Pallas compute; tiny XLA glue only for the NxN re-layout)
# ---------------------------------------------------------------------------

def transformer_block_with_mask(x_nchw, mask_nchw, params, num_heads, N):
    B, C, H, W = x_nchw.shape
    # TODO(synk): the torch reference's mask rearrange requires H % N == 0 and
    # W % N == 0 (its reflect pad of x is then a no-op), so assert instead of
    # implementing a pad path that the reference itself cannot execute.
    assert H % N == 0 and W % N == 0, "H and W must be multiples of N"
    L = H * W
    hidden = params['ffn_out_w'].shape[0]
    cph = C // num_heads
    x = x_nchw.astype(F32).reshape(B, C, L)       # (C, H*W): channels on sublanes

    ln1_w = params['norm1_w'].reshape(C, 1)
    ln1_b = params['norm1_b'].reshape(C, 1)
    ln2_w = params['norm2_w'].reshape(C, 1)
    ln2_b = params['norm2_b'].reshape(C, 1)
    colmask = _col_boundary_masks(H, W)

    # --- folded weights (host side, once per call; MXU operands pre-cast to bf16)
    # TODO(synk): layouts follow init_params' [in, out] / (9, in, out) convention
    # with tap index t = ky*3 + kx; re-verify slices/transposes when importing
    # real PyTorch Conv2d weights ((out, in, 3, 3), depthwise (out, 1, 3, 3)).
    w_mask_eff = jnp.einsum('ic,tcm,mo->oti',
                            params['mask_qkv_w'],
                            params['mask_dw_w'][:, :, 2 * C:],
                            params['mask_proj_w'],
                            precision="highest").reshape(C, 9 * C).astype(BF16)
    w_attn_qkvdw = jnp.einsum('tj,ij->jti', params['attn_dw_w'],
                              params['attn_qkv_w'],
                              precision="highest").reshape(3 * C, 9 * C).astype(BF16)
    w_attn_proj = params['attn_proj_w'].T.astype(BF16)                # (out, in)
    w_ffn_indw = jnp.einsum('tg,ig->gti', params['ffn_dw_w'],
                            params['ffn_in_w'],
                            precision="highest").reshape(2 * hidden, 9 * C).astype(BF16)
    w_ffn_out = params['ffn_out_w'].T.astype(BF16)                    # (out, in)

    temp_rows = jnp.repeat(params['attn_temp'], cph).reshape(C, 1).astype(F32)
    head_id = np.repeat(np.arange(num_heads), cph)
    headmask = jnp.asarray(
        np.where(head_id[:, None] == head_id[None, :], 0.0, NEG_BIG),
        dtype=np.float32)                                             # (C, C)

    # ---- 1) mask branch:  mo = Mask(norm1(x), mask, N) -----------------------
    vproj = mask_v_call(x, ln1_w, ln1_b, w_mask_eff, colmask, W)      # (B,C,L) bf16

    hb, wb = H // N, W // N
    # 'b c (h1 h) (w1 w) -> b (h1 w1) (c h w)' — tiny XLA relayout glue
    v_r = (vproj.reshape(B, C, N, hb, N, wb)
                .transpose(0, 2, 4, 1, 3, 5)
                .reshape(B, N * N, C * hb * wb))
    m_r = (mask_nchw.astype(F32).reshape(B, N, hb, N, wb)
                    .transpose(0, 1, 3, 2, 4)
                    .reshape(B, N * N, hb * wb))
    mo_r = mask_attn_call(m_r, v_r)                                   # (B,NN,C*hb*wb)
    mo = (mo_r.reshape(B, N, N, C, hb, wb)
              .transpose(0, 3, 1, 4, 2, 5)
              .reshape(B, C, L))

    # ---- 2) x = x + mo ; x = x + Attention(norm1(x))  (one fused kernel) -----
    x2 = attn_branch_call(x, mo, ln1_w, ln1_b, w_attn_qkvdw, w_attn_proj,
                          temp_rows, headmask, colmask, W)

    # ---- 3) out = x + FeedForward(norm2(x))  (one fused kernel) --------------
    out = ffn_branch_call(x2, ln2_w, ln2_b, w_ffn_indw, w_ffn_out, colmask,
                          hidden, W)

    return out.reshape(B, C, H, W)                                    # NCHW


# TODO(synk): Attentionshare is instantiated in __init__ but never called in
# TransformerBlockWithMask.forward, so it is not implemented here.
# TODO(synk): at production H*W the (C, H*W) per-batch blocks should be
# row-tiled with a 1-row halo (and vmem_limit_bytes set; v7x has 64 MiB VMEM);
# at these test sizes full-frame blocks are tiny and optimal.


# ---------------------------------------------------------------------------
# Pure-JAX f32 reference (independent implementation, for self-check only)
# ---------------------------------------------------------------------------

def _conv1x1_ref(x, w):                                  # x:(B,Ci,H,W) w:(Ci,Co)
    return jnp.einsum('bihw,io->bohw', x, w, precision="highest")


def _conv3x3_dense_ref(x, w):                            # w:(9,Ci,Co)
    B, Ci, H, W = x.shape
    xp = jnp.pad(x, ((0, 0), (0, 0), (1, 1), (1, 1)))
    out = 0.
    for ky in range(3):
        for kx in range(3):
            out = out + jnp.einsum('bihw,io->bohw',
                                   xp[:, :, ky:ky + H, kx:kx + W],
                                   w[ky * 3 + kx], precision="highest")
    return out


def _conv3x3_dw_ref(x, w):                               # w:(9,C) depthwise
    B, C, H, W = x.shape
    xp = jnp.pad(x, ((0, 0), (0, 0), (1, 1), (1, 1)))
    out = 0.
    for ky in range(3):
        for kx in range(3):
            out = out + (xp[:, :, ky:ky + H, kx:kx + W]
                         * w[ky * 3 + kx][None, :, None, None])
    return out


def _ln_ref(x, w, b):
    mu = jnp.mean(x, axis=1, keepdims=True)
    var = jnp.mean((x - mu) ** 2, axis=1, keepdims=True)
    return ((x - mu) / jnp.sqrt(var + LN_EPS) * w.reshape(1, -1, 1, 1)
            + b.reshape(1, -1, 1, 1))


def _normalize_ref(x):
    n = jnp.sqrt(jnp.sum(x * x, axis=-1, keepdims=True))
    return x / jnp.maximum(n, 1e-12)


def reference_forward(x, mask, params, num_heads, N):
    B, C, H, W = x.shape
    hb, wb = H // N, W // N
    cph = C // num_heads
    hidden = params['ffn_out_w'].shape[0]

    # Mask branch
    y = _ln_ref(x, params['norm1_w'], params['norm1_b'])
    qkv = _conv3x3_dense_ref(_conv1x1_ref(y, params['mask_qkv_w']),
                             params['mask_dw_w'])
    v = qkv[:, 2 * C:]
    v_r = (v.reshape(B, C, N, hb, N, wb).transpose(0, 1, 2, 4, 3, 5)
            .reshape(B, C, N * N, hb * wb))
    m_r = (mask.reshape(B, 1, N, hb, N, wb).transpose(0, 1, 2, 4, 3, 5)
               .reshape(B, N * N, hb * wb))
    mn = _normalize_ref(m_r)
    attn = jax.nn.softmax(jnp.einsum('bps,bqs->bpq', mn, mn,
                                     precision="highest"), axis=-1)
    out = jnp.einsum('bpq,bcqs->bcps', attn, v_r, precision="highest")
    out = (out.reshape(B, C, N, N, hb, wb).transpose(0, 1, 2, 4, 3, 5)
              .reshape(B, C, H, W))
    x1 = x + _conv1x1_ref(out, params['mask_proj_w'])

    # Attention branch
    y = _ln_ref(x1, params['norm1_w'], params['norm1_b'])
    qkv = _conv3x3_dw_ref(_conv1x1_ref(y, params['attn_qkv_w']),
                          params['attn_dw_w'])
    q, k, v = jnp.split(qkv, 3, axis=1)

    def _h(z):
        return z.reshape(B, num_heads, cph, H * W)

    qn, kn, vh = _normalize_ref(_h(q)), _normalize_ref(_h(k)), _h(v)
    att = (jnp.einsum('bhcs,bhds->bhcd', qn, kn, precision="highest")
           * params['attn_temp'].reshape(1, num_heads, 1, 1))
    att = jax.nn.softmax(att, axis=-1)
    o = jnp.einsum('bhcd,bhds->bhcs', att, vh,
                   precision="highest").reshape(B, C, H, W)
    x2 = x1 + _conv1x1_ref(o, params['attn_proj_w'])

    # FFN branch
    y = _ln_ref(x2, params['norm2_w'], params['norm2_b'])
    g = _conv3x3_dw_ref(_conv1x1_ref(y, params['ffn_in_w']), params['ffn_dw_w'])
    g1, g2 = g[:, :hidden], g[:, hidden:]
    gg = jax.nn.gelu(g1, approximate=False) * g2
    return x2 + _conv1x1_ref(gg, params['ffn_out_w'])


if __name__ == "__main__":
    key = jax.random.PRNGKey(0)
    B, dim, H, W = 2, 16, 16, 16
    num_heads, N, ffn_factor = 2, 4, 2.0

    kx, km, kp = jax.random.split(key, 3)
    x = jax.random.normal(kx, (B, dim, H, W), F32)        # NCHW, like PyTorch
    mask = jax.random.normal(km, (B, 1, H, W), F32)       # single-channel mask
    params = init_params(kp, dim, num_heads, ffn_factor)

    fwd = jax.jit(transformer_block_with_mask, static_argnums=(3, 4))
    out = jax.block_until_ready(fwd(x, mask, params, num_heads, N))

    assert out.shape == (B, dim, H, W)
    assert bool(jnp.all(jnp.isfinite(out)))

    # Self-check against an independent pure-JAX f32 reference (loose tolerance:
    # the kernels use bf16 MXU operands with f32 accumulation).
    ref = jax.jit(reference_forward, static_argnums=(3, 4))(
        x, mask, params, num_heads, N)
    max_err = float(jnp.max(jnp.abs(out - ref)))
    assert max_err < 0.35, f"max abs error vs reference too large: {max_err}"

    print("KERNEL_OK")
</pallas_src>

<mosaic_0001>
module attributes {stable_mosaic.version = 11 : i64} {
  func.func @kernel(%arg0: i32, %arg1: memref<1x16x256xf32, #tpu.memory_space<vmem>>, %arg2: memref<16x1xf32, #tpu.memory_space<vmem>>, %arg3: memref<16x1xf32, #tpu.memory_space<vmem>>, %arg4: memref<16x144xbf16, #tpu.memory_space<vmem>>, %arg5: memref<2x256xf32, #tpu.memory_space<vmem>>, %arg6: memref<1x16x256xbf16, #tpu.memory_space<vmem>>) attributes {dimension_semantics = [#tpu.dimension_semantics<parallel>], iteration_bounds = array<i64: 2>, scalar_prefetch = 0 : i64, scratch_operands = 0 : i64, tpu.core_type = #tpu.core_type<tc>, window_params = [{transform_indices = @transform_0, window_bounds = array<i64: 1, 16, 256>}, {pipeline_mode = #tpu.pipeline_mode<synchronous>, transform_indices = @transform_1, window_bounds = array<i64: 16, 1>}, {pipeline_mode = #tpu.pipeline_mode<synchronous>, transform_indices = @transform_2, window_bounds = array<i64: 16, 1>}, {pipeline_mode = #tpu.pipeline_mode<synchronous>, transform_indices = @transform_3, window_bounds = array<i64: 16, 144>}, {pipeline_mode = #tpu.pipeline_mode<synchronous>, transform_indices = @transform_4, window_bounds = array<i64: 2, 256>}, {transform_indices = @transform_5, window_bounds = array<i64: 1, 16, 256>}]} {
    %c0 = arith.constant 0 : index
    %c0_0 = arith.constant 0 : index
    %c0_1 = arith.constant 0 : index
    %0 = vector.load %arg1[%c0, %c0_0, %c0_1] : memref<1x16x256xf32, #tpu.memory_space<vmem>>, vector<1x16x256xf32>
    %1 = vector.shape_cast %0 : vector<1x16x256xf32> to vector<16x256xf32>
    %c0_2 = arith.constant 0 : index
    %c0_3 = arith.constant 0 : index
    %2 = vector.load %arg2[%c0_2, %c0_3] : memref<16x1xf32, #tpu.memory_space<vmem>>, vector<16x1xf32>
    %c0_4 = arith.constant 0 : index
    %c0_5 = arith.constant 0 : index
    %3 = vector.load %arg3[%c0_4, %c0_5] : memref<16x1xf32, #tpu.memory_space<vmem>>, vector<16x1xf32>
    %cst = arith.constant dense<0.000000e+00> : vector<256xf32>
    %4 = vector.multi_reduction <add>, %1, %cst [0] : vector<16x256xf32> to vector<256xf32>
    %5 = vector.shape_cast %4 : vector<256xf32> to vector<1x256xf32>
    %cst_6 = arith.constant 1.600000e+01 : f32
    %6 = vector.broadcast %cst_6 : f32 to vector<1x256xf32>
    %7 = arith.divf %5, %6 : vector<1x256xf32>
    %8 = vector.broadcast %7 : vector<1x256xf32> to vector<16x256xf32>
    %9 = arith.subf %1, %8 : vector<16x256xf32>
    %10 = arith.mulf %9, %9 : vector<16x256xf32>
    %cst_7 = arith.constant dense<0.000000e+00> : vector<256xf32>
    %11 = vector.multi_reduction <add>, %10, %cst_7 [0] : vector<16x256xf32> to vector<256xf32>
    %12 = vector.shape_cast %11 : vector<256xf32> to vector<1x256xf32>
    %cst_8 = arith.constant 1.600000e+01 : f32
    %13 = vector.broadcast %cst_8 : f32 to vector<1x256xf32>
    %14 = arith.divf %12, %13 : vector<1x256xf32>
    %cst_9 = arith.constant 9.99999974E-6 : f32
    %15 = vector.broadcast %cst_9 : f32 to vector<1x256xf32>
    %16 = arith.addf %14, %15 : vector<1x256xf32>
    %17 = math.rsqrt %16 : vector<1x256xf32>
    %18 = vector.broadcast %17 : vector<1x256xf32> to vector<16x256xf32>
    %19 = arith.mulf %9, %18 : vector<16x256xf32>
    %20 = vector.broadcast %2 : vector<16x1xf32> to vector<16x256xf32>
    %21 = arith.mulf %19, %20 : vector<16x256xf32>
    %22 = vector.broadcast %3 : vector<16x1xf32> to vector<16x256xf32>
    %23 = arith.addf %21, %22 : vector<16x256xf32>
    %c0_10 = arith.constant 0 : index
    %c0_11 = arith.constant 0 : index
    %24 = vector.load %arg5[%c0_10, %c0_11] : memref<2x256xf32, #tpu.memory_space<vmem>>, vector<2x256xf32>
    %cst_12 = arith.constant 0.000000e+00 : f32
    %25 = vector.broadcast %cst_12 : f32 to vector<16x17xf32>
    %26 = tpu.concatenate %25, %23, %25 in 1 : vector<16x17xf32>, vector<16x256xf32>, vector<16x17xf32> -> vector<16x290xf32>
    %27 = vector.extract_strided_slice %24 {offsets = [0, 0], sizes = [1, 256], strides = [1, 1]} : vector<2x256xf32> to vector<1x256xf32>
    %28 = vector.shape_cast %27 : vector<1x256xf32> to vector<1x256xf32>
    %29 = vector.broadcast %28 : vector<1x256xf32> to vector<16x256xf32>
    %30 = vector.extract_strided_slice %24 {offsets = [1, 0], sizes = [1, 256], strides = [1, 1]} : vector<2x256xf32> to vector<1x256xf32>
    %31 = vector.shape_cast %30 : vector<1x256xf32> to vector<1x256xf32>
    %32 = vector.broadcast %31 : vector<1x256xf32> to vector<16x256xf32>
    %33 = vector.extract_strided_slice %26 {offsets = [0, 0], sizes = [16, 256], strides = [1, 1]} : vector<16x290xf32> to vector<16x256xf32>
    %34 = arith.mulf %33, %29 : vector<16x256xf32>
    %35 = arith.truncf %34 : vector<16x256xf32> to vector<16x256xbf16>
    %36 = vector.extract_strided_slice %26 {offsets = [0, 1], sizes = [16, 256], strides = [1, 1]} : vector<16x290xf32> to vector<16x256xf32>
    %37 = arith.truncf %36 : vector<16x256xf32> to vector<16x256xbf16>
    %38 = vector.extract_strided_slice %26 {offsets = [0, 2], sizes = [16, 256], strides = [1, 1]} : vector<16x290xf32> to vector<16x256xf32>
    %39 = arith.mulf %38, %32 : vector<16x256xf32>
    %40 = arith.truncf %39 : vector<16x256xf32> to vector<16x256xbf16>
    %41 = vector.extract_strided_slice %26 {offsets = [0, 16], sizes = [16, 256], strides = [1, 1]} : vector<16x290xf32> to vector<16x256xf32>
    %42 = arith.mulf %41, %29 : vector<16x256xf32>
    %43 = arith.truncf %42 : vector<16x256xf32> to vector<16x256xbf16>
    %44 = arith.truncf %23 : vector<16x256xf32> to vector<16x256xbf16>
    %45 = vector.extract_strided_slice %26 {offsets = [0, 18], sizes = [16, 256], strides = [1, 1]} : vector<16x290xf32> to vector<16x256xf32>
    %46 = arith.mulf %45, %32 : vector<16x256xf32>
    %47 = arith.truncf %46 : vector<16x256xf32> to vector<16x256xbf16>
    %48 = vector.extract_strided_slice %26 {offsets = [0, 32], sizes = [16, 256], strides = [1, 1]} : vector<16x290xf32> to vector<16x256xf32>
    %49 = arith.mulf %48, %29 : vector<16x256xf32>
    %50 = arith.truncf %49 : vector<16x256xf32> to vector<16x256xbf16>
    %51 = vector.extract_strided_slice %26 {offsets = [0, 33], sizes = [16, 256], strides = [1, 1]} : vector<16x290xf32> to vector<16x256xf32>
    %52 = arith.truncf %51 : vector<16x256xf32> to vector<16x256xbf16>
    %53 = vector.extract_strided_slice %26 {offsets = [0, 34], sizes = [16, 256], strides = [1, 1]} : vector<16x290xf32> to vector<16x256xf32>
    %54 = arith.mulf %53, %32 : vector<16x256xf32>
    %55 = arith.truncf %54 : vector<16x256xf32> to vector<16x256xbf16>
    %56 = tpu.concatenate %35, %37, %40, %43, %44, %47, %50, %52, %55 in 0 : vector<16x256xbf16>, vector<16x256xbf16>, vector<16x256xbf16>, vector<16x256xbf16>, vector<16x256xbf16>, vector<16x256xbf16>, vector<16x256xbf16>, vector<16x256xbf16>, vector<16x256xbf16> -> vector<144x256xbf16>
    %c0_13 = arith.constant 0 : index
    %c0_14 = arith.constant 0 : index
    %57 = vector.load %arg4[%c0_13, %c0_14] : memref<16x144xbf16, #tpu.memory_space<vmem>>, vector<16x144xbf16>
    %cst_15 = arith.constant dense<0.000000e+00> : vector<16x256xf32>
    %58 = tpu.matmul %57, %56, %cst_15 {dimension_numbers = #tpu.dot_dimension_numbers<[1], [0], [0], [1], [0, 0, 1, 1], [], []>} : vector<16x144xbf16>, vector<144x256xbf16>, vector<16x256xf32> -> vector<16x256xf32>
    %59 = arith.truncf %58 : vector<16x256xf32> to vector<16x256xbf16>
    %c0_16 = arith.constant 0 : index
    %c0_17 = arith.constant 0 : index
    %c0_18 = arith.constant 0 : index
    %60 = vector.load %arg6[%c0_16, %c0_17, %c0_18] : memref<1x16x256xbf16, #tpu.memory_space<vmem>>, vector<1x16x256xbf16>
    %61 = vector.shape_cast %60 : vector<1x16x256xbf16> to vector<16x256xbf16>
    %62 = vector.shape_cast %59 : vector<16x256xbf16> to vector<1x16x256xbf16>
    tpu.vector_store %arg6[%c0_16, %c0_17, %c0_18], %62 {strides = array<i32>} : memref<1x16x256xbf16, #tpu.memory_space<vmem>>, vector<1x16x256xbf16>,
    return
  }
  func.func @transform_0(%arg0: i32) -> (i32, i32, i32) {
    %c0_i32 = arith.constant 0 : i32
    %c0_i32_0 = arith.constant 0 : i32
    %c0_i32_1 = arith.constant 0 : i32
    return %arg0, %c0_i32, %c0_i32_0 : i32, i32, i32
  }
  func.func @transform_1(%arg0: i32) -> (i32, i32) {
    %c0_i32 = arith.constant 0 : i32
    %c0_i32_0 = arith.constant 0 : i32
    %c0_i32_1 = arith.constant 0 : i32
    return %c0_i32, %c0_i32_0 : i32, i32
  }
  func.func @transform_2(%arg0: i32) -> (i32, i32) {
    %c0_i32 = arith.constant 0 : i32
    %c0_i32_0 = arith.constant 0 : i32
    %c0_i32_1 = arith.constant 0 : i32
    return %c0_i32, %c0_i32_0 : i32, i32
  }
  func.func @transform_3(%arg0: i32) -> (i32, i32) {
    %c0_i32 = arith.constant 0 : i32
    %c0_i32_0 = arith.constant 0 : i32
    %c0_i32_1 = arith.constant 0 : i32
    return %c0_i32, %c0_i32_0 : i32, i32
  }
  func.func @transform_4(%arg0: i32) -> (i32, i32) {
    %c0_i32 = arith.constant 0 : i32
    %c0_i32_0 = arith.constant 0 : i32
    %c0_i32_1 = arith.constant 0 : i32
    return %c0_i32, %c0_i32_0 : i32, i32
  }
  func.func @transform_5(%arg0: i32) -> (i32, i32, i32) {
    %c0_i32 = arith.constant 0 : i32
    %c0_i32_0 = arith.constant 0 : i32
    %c0_i32_1 = arith.constant 0 : i32
    return %arg0, %c0_i32, %c0_i32_0 : i32, i32, i32
  }
}

module attributes {stable_mosaic.version = 11 : i64} {
  func.func @kernel(%arg0: i32, %arg1: memref<1x16x16xf32, #tpu.memory_space<vmem>>, %arg2: memref<1x16x256xbf16, #tpu.memory_space<vmem>>, %arg3: memref<1x16x256xf32, #tpu.memory_space<vmem>>) attributes {dimension_semantics = [#tpu.dimension_semantics<parallel>], iteration_bounds = array<i64: 2>, scalar_prefetch = 0 : i64, scratch_operands = 0 : i64, tpu.core_type = #tpu.core_type<tc>, window_params = [{transform_indices = @transform_0, window_bounds = array<i64: 1, 16, 16>}, {transform_indices = @transform_1, window_bounds = array<i64: 1, 16, 256>}, {transform_indices = @transform_2, window_bounds = array<i64: 1, 16, 256>}]} {
    %c0 = arith.constant 0 : index
    %c0_0 = arith.constant 0 : index
    %c0_1 = arith.constant 0 : index
    %0 = vector.load %arg1[%c0, %c0_0, %c0_1] : memref<1x16x16xf32, #tpu.memory_space<vmem>>, vector<1x16x16xf32>
    %1 = vector.shape_cast %0 : vector<1x16x16xf32> to vector<16x16xf32>
    %2 = arith.mulf %1, %1 : vector<16x16xf32>
    %cst = arith.constant dense<0.000000e+00> : vector<16xf32>
    %3 = vector.multi_reduction <add>, %2, %cst [1] : vector<16x16xf32> to vector<16xf32>
    %4 = vector.shape_cast %3 : vector<16xf32> to vector<16x1xf32>
    %5 = math.rsqrt %4 : vector<16x1xf32>
    %cst_2 = arith.constant 9.99999995E+11 : f32
    %6 = vector.broadcast %cst_2 : f32 to vector<16x1xf32>
    %7 = arith.minimumf %5, %6 : vector<16x1xf32>
    %8 = vector.broadcast %7 : vector<16x1xf32> to vector<16x16xf32>
    %9 = arith.mulf %1, %8 : vector<16x16xf32>
    %10 = arith.truncf %9 : vector<16x16xf32> to vector<16x16xbf16>
    %11 = arith.truncf %9 : vector<16x16xf32> to vector<16x16xbf16>
    %cst_3 = arith.constant dense<0.000000e+00> : vector<16x16xf32>
    %12 = tpu.matmul %10, %11, %cst_3 {dimension_numbers = #tpu.dot_dimension_numbers<[1], [1], [0], [0], [0, 0, 1, 0], [], []>} : vector<16x16xbf16>, vector<16x16xbf16>, vector<16x16xf32> -> vector<16x16xf32>
    %cst_4 = arith.constant dense<0xFF800000> : vector<16xf32>
    %13 = vector.multi_reduction <maximumf>, %12, %cst_4 [1] : vector<16x16xf32> to vector<16xf32>
    %14 = vector.shape_cast %13 : vector<16xf32> to vector<16x1xf32>
    %15 = vector.broadcast %14 : vector<16x1xf32> to vector<16x16xf32>
    %16 = arith.subf %12, %15 : vector<16x16xf32>
    %17 = math.exp %16 : vector<16x16xf32>
    %cst_5 = arith.constant dense<0.000000e+00> : vector<16xf32>
    %18 = vector.multi_reduction <add>, %17, %cst_5 [1] : vector<16x16xf32> to vector<16xf32>
    %19 = vector.shape_cast %18 : vector<16xf32> to vector<16x1xf32>
    %20 = vector.broadcast %19 : vector<16x1xf32> to vector<16x16xf32>
    %21 = arith.divf %17, %20 : vector<16x16xf32>
    %22 = arith.truncf %21 : vector<16x16xf32> to vector<16x16xbf16>
    %c0_6 = arith.constant 0 : index
    %c0_7 = arith.constant 0 : index
    %c0_8 = arith.constant 0 : index
    %23 = vector.load %arg2[%c0_6, %c0_7, %c0_8] : memref<1x16x256xbf16, #tpu.memory_space<vmem>>, vector<1x16x256xbf16>
    %24 = vector.shape_cast %23 : vector<1x16x256xbf16> to vector<16x256xbf16>
    %cst_9 = arith.constant dense<0.000000e+00> : vector<16x256xf32>
    %25 = tpu.matmul %22, %24, %cst_9 {dimension_numbers = #tpu.dot_dimension_numbers<[1], [0], [0], [1], [0, 0, 1, 1], [], []>} : vector<16x16xbf16>, vector<16x256xbf16>, vector<16x256xf32> -> vector<16x256xf32>
    %c0_10 = arith.constant 0 : index
    %c0_11 = arith.constant 0 : index
    %c0_12 = arith.constant 0 : index
    %26 = vector.load %arg3[%c0_10, %c0_11, %c0_12] : memref<1x16x256xf32, #tpu.memory_space<vmem>>, vector<1x16x256xf32>
    %27 = vector.shape_cast %26 : vector<1x16x256xf32> to vector<16x256xf32>
    %28 = vector.shape_cast %25 : vector<16x256xf32> to vector<1x16x256xf32>
    tpu.vector_store %arg3[%c0_10, %c0_11, %c0_12], %28 {strides = array<i32>} : memref<1x16x256xf32, #tpu.memory_space<vmem>>, vector<1x16x256xf32>,
    return
  }
  func.func @transform_0(%arg0: i32) -> (i32, i32, i32) {
    %c0_i32 = arith.constant 0 : i32
    %c0_i32_0 = arith.constant 0 : i32
    %c0_i32_1 = arith.constant 0 : i32
    return %arg0, %c0_i32, %c0_i32_0 : i32, i32, i32
  }
  func.func @transform_1(%arg0: i32) -> (i32, i32, i32) {
    %c0_i32 = arith.constant 0 : i32
    %c0_i32_0 = arith.constant 0 : i32
    %c0_i32_1 = arith.constant 0 : i32
    return %arg0, %c0_i32, %c0_i32_0 : i32, i32, i32
  }
  func.func @transform_2(%arg0: i32) -> (i32, i32, i32) {
    %c0_i32 = arith.constant 0 : i32
    %c0_i32_0 = arith.constant 0 : i32
    %c0_i32_1 = arith.constant 0 : i32
    return %arg0, %c0_i32, %c0_i32_0 : i32, i32, i32
  }
}

module attributes {stable_mosaic.version = 11 : i64} {
  func.func @kernel(%arg0: i32, %arg1: memref<1x16x256xf32, #tpu.memory_space<vmem>>, %arg2: memref<1x16x256xf32, #tpu.memory_space<vmem>>, %arg3: memref<16x1xf32, #tpu.memory_space<vmem>>, %arg4: memref<16x1xf32, #tpu.memory_space<vmem>>, %arg5: memref<48x144xbf16, #tpu.memory_space<vmem>>, %arg6: memref<16x16xbf16, #tpu.memory_space<vmem>>, %arg7: memref<16x1xf32, #tpu.memory_space<vmem>>, %arg8: memref<16x16xf32, #tpu.memory_space<vmem>>, %arg9: memref<2x256xf32, #tpu.memory_space<vmem>>, %arg10: memref<1x16x256xf32, #tpu.memory_space<vmem>>) attributes {dimension_semantics = [#tpu.dimension_semantics<parallel>], iteration_bounds = array<i64: 2>, scalar_prefetch = 0 : i64, scratch_operands = 0 : i64, tpu.core_type = #tpu.core_type<tc>, window_params = [{transform_indices = @transform_0, window_bounds = array<i64: 1, 16, 256>}, {transform_indices = @transform_1, window_bounds = array<i64: 1, 16, 256>}, {pipeline_mode = #tpu.pipeline_mode<synchronous>, transform_indices = @transform_2, window_bounds = array<i64: 16, 1>}, {pipeline_mode = #tpu.pipeline_mode<synchronous>, transform_indices = @transform_3, window_bounds = array<i64: 16, 1>}, {pipeline_mode = #tpu.pipeline_mode<synchronous>, transform_indices = @transform_4, window_bounds = array<i64: 48, 144>}, {pipeline_mode = #tpu.pipeline_mode<synchronous>, transform_indices = @transform_5, window_bounds = array<i64: 16, 16>}, {pipeline_mode = #tpu.pipeline_mode<synchronous>, transform_indices = @transform_6, window_bounds = array<i64: 16, 1>}, {pipeline_mode = #tpu.pipeline_mode<synchronous>, transform_indices = @transform_7, window_bounds = array<i64: 16, 16>}, {pipeline_mode = #tpu.pipeline_mode<synchronous>, transform_indices = @transform_8, window_bounds = array<i64: 2, 256>}, {transform_indices = @transform_9, window_bounds = array<i64: 1, 16, 256>}]} {
    %c0 = arith.constant 0 : index
    %c0_0 = arith.constant 0 : index
    %c0_1 = arith.constant 0 : index
    %0 = vector.load %arg1[%c0, %c0_0, %c0_1] : memref<1x16x256xf32, #tpu.memory_space<vmem>>, vector<1x16x256xf32>
    %1 = vector.shape_cast %0 : vector<1x16x256xf32> to vector<16x256xf32>
    %c0_2 = arith.constant 0 : index
    %c0_3 = arith.constant 0 : index
    %c0_4 = arith.constant 0 : index
    %2 = vector.load %arg2[%c0_2, %c0_3, %c0_4] : memref<1x16x256xf32, #tpu.memory_space<vmem>>, vector<1x16x256xf32>
    %3 = vector.shape_cast %2 : vector<1x16x256xf32> to vector<16x256xf32>
    %4 = arith.addf %1, %3 : vector<16x256xf32>
    %c0_5 = arith.constant 0 : index
    %c0_6 = arith.constant 0 : index
    %5 = vector.load %arg3[%c0_5, %c0_6] : memref<16x1xf32, #tpu.memory_space<vmem>>, vector<16x1xf32>
    %c0_7 = arith.constant 0 : index
    %c0_8 = arith.constant 0 : index
    %6 = vector.load %arg4[%c0_7, %c0_8] : memref<16x1xf32, #tpu.memory_space<vmem>>, vector<16x1xf32>
    %cst = arith.constant dense<0.000000e+00> : vector<256xf32>
    %7 = vector.multi_reduction <add>, %4, %cst [0] : vector<16x256xf32> to vector<256xf32>
    %8 = vector.shape_cast %7 : vector<256xf32> to vector<1x256xf32>
    %cst_9 = arith.constant 1.600000e+01 : f32
    %9 = vector.broadcast %cst_9 : f32 to vector<1x256xf32>
    %10 = arith.divf %8, %9 : vector<1x256xf32>
    %11 = vector.broadcast %10 : vector<1x256xf32> to vector<16x256xf32>
    %12 = arith.subf %4, %11 : vector<16x256xf32>
    %13 = arith.mulf %12, %12 : vector<16x256xf32>
    %cst_10 = arith.constant dense<0.000000e+00> : vector<256xf32>
    %14 = vector.multi_reduction <add>, %13, %cst_10 [0] : vector<16x256xf32> to vector<256xf32>
    %15 = vector.shape_cast %14 : vector<256xf32> to vector<1x256xf32>
    %cst_11 = arith.constant 1.600000e+01 : f32
    %16 = vector.broadcast %cst_11 : f32 to vector<1x256xf32>
    %17 = arith.divf %15, %16 : vector<1x256xf32>
    %cst_12 = arith.constant 9.99999974E-6 : f32
    %18 = vector.broadcast %cst_12 : f32 to vector<1x256xf32>
    %19 = arith.addf %17, %18 : vector<1x256xf32>
    %20 = math.rsqrt %19 : vector<1x256xf32>
    %21 = vector.broadcast %20 : vector<1x256xf32> to vector<16x256xf32>
    %22 = arith.mulf %12, %21 : vector<16x256xf32>
    %23 = vector.broadcast %5 : vector<16x1xf32> to vector<16x256xf32>
    %24 = arith.mulf %22, %23 : vector<16x256xf32>
    %25 = vector.broadcast %6 : vector<16x1xf32> to vector<16x256xf32>
    %26 = arith.addf %24, %25 : vector<16x256xf32>
    %c0_13 = arith.constant 0 : index
    %c0_14 = arith.constant 0 : index
    %27 = vector.load %arg9[%c0_13, %c0_14] : memref<2x256xf32, #tpu.memory_space<vmem>>, vector<2x256xf32>
    %cst_15 = arith.constant 0.000000e+00 : f32
    %28 = vector.broadcast %cst_15 : f32 to vector<16x17xf32>
    %29 = tpu.concatenate %28, %26, %28 in 1 : vector<16x17xf32>, vector<16x256xf32>, vector<16x17xf32> -> vector<16x290xf32>
    %30 = vector.extract_strided_slice %27 {offsets = [0, 0], sizes = [1, 256], strides = [1, 1]} : vector<2x256xf32> to vector<1x256xf32>
    %31 = vector.shape_cast %30 : vector<1x256xf32> to vector<1x256xf32>
    %32 = vector.broadcast %31 : vector<1x256xf32> to vector<16x256xf32>
    %33 = vector.extract_strided_slice %27 {offsets = [1, 0], sizes = [1, 256], strides = [1, 1]} : vector<2x256xf32> to vector<1x256xf32>
    %34 = vector.shape_cast %33 : vector<1x256xf32> to vector<1x256xf32>
    %35 = vector.broadcast %34 : vector<1x256xf32> to vector<16x256xf32>
    %36 = vector.extract_strided_slice %29 {offsets = [0, 0], sizes = [16, 256], strides = [1, 1]} : vector<16x290xf32> to vector<16x256xf32>
    %37 = arith.mulf %36, %32 : vector<16x256xf32>
    %38 = arith.truncf %37 : vector<16x256xf32> to vector<16x256xbf16>
    %39 = vector.extract_strided_slice %29 {offsets = [0, 1], sizes = [16, 256], strides = [1, 1]} : vector<16x290xf32> to vector<16x256xf32>
    %40 = arith.truncf %39 : vector<16x256xf32> to vector<16x256xbf16>
    %41 = vector.extract_strided_slice %29 {offsets = [0, 2], sizes = [16, 256], strides = [1, 1]} : vector<16x290xf32> to vector<16x256xf32>
    %42 = arith.mulf %41, %35 : vector<16x256xf32>
    %43 = arith.truncf %42 : vector<16x256xf32> to vector<16x256xbf16>
    %44 = vector.extract_strided_slice %29 {offsets = [0, 16], sizes = [16, 256], strides = [1, 1]} : vector<16x290xf32> to vector<16x256xf32>
    %45 = arith.mulf %44, %32 : vector<16x256xf32>
    %46 = arith.truncf %45 : vector<16x256xf32> to vector<16x256xbf16>
    %47 = arith.truncf %26 : vector<16x256xf32> to vector<16x256xbf16>
    %48 = vector.extract_strided_slice %29 {offsets = [0, 18], sizes = [16, 256], strides = [1, 1]} : vector<16x290xf32> to vector<16x256xf32>
    %49 = arith.mulf %48, %35 : vector<16x256xf32>
    %50 = arith.truncf %49 : vector<16x256xf32> to vector<16x256xbf16>
    %51 = vector.extract_strided_slice %29 {offsets = [0, 32], sizes = [16, 256], strides = [1, 1]} : vector<16x290xf32> to vector<16x256xf32>
    %52 = arith.mulf %51, %32 : vector<16x256xf32>
    %53 = arith.truncf %52 : vector<16x256xf32> to vector<16x256xbf16>
    %54 = vector.extract_strided_slice %29 {offsets = [0, 33], sizes = [16, 256], strides = [1, 1]} : vector<16x290xf32> to vector<16x256xf32>
    %55 = arith.truncf %54 : vector<16x256xf32> to vector<16x256xbf16>
    %56 = vector.extract_strided_slice %29 {offsets = [0, 34], sizes = [16, 256], strides = [1, 1]} : vector<16x290xf32> to vector<16x256xf32>
    %57 = arith.mulf %56, %35 : vector<16x256xf32>
    %58 = arith.truncf %57 : vector<16x256xf32> to vector<16x256xbf16>
    %59 = tpu.concatenate %38, %40, %43, %46, %47, %50, %53, %55, %58 in 0 : vector<16x256xbf16>, vector<16x256xbf16>, vector<16x256xbf16>, vector<16x256xbf16>, vector<16x256xbf16>, vector<16x256xbf16>, vector<16x256xbf16>, vector<16x256xbf16>, vector<16x256xbf16> -> vector<144x256xbf16>
    %c0_16 = arith.constant 0 : index
    %c0_17 = arith.constant 0 : index
    %60 = vector.load %arg5[%c0_16, %c0_17] : memref<48x144xbf16, #tpu.memory_space<vmem>>, vector<48x144xbf16>
    %cst_18 = arith.constant dense<0.000000e+00> : vector<48x256xf32>
    %61 = tpu.matmul %60, %59, %cst_18 {dimension_numbers = #tpu.dot_dimension_numbers<[1], [0], [0], [1], [0, 0, 1, 1], [], []>} : vector<48x144xbf16>, vector<144x256xbf16>, vector<48x256xf32> -> vector<48x256xf32>
    %62 = vector.extract_strided_slice %61 {offsets = [0, 0], sizes = [16, 256], strides = [1, 1]} : vector<48x256xf32> to vector<16x256xf32>
    %63 = vector.extract_strided_slice %61 {offsets = [16, 0], sizes = [16, 256], strides = [1, 1]} : vector<48x256xf32> to vector<16x256xf32>
    %64 = vector.extract_strided_slice %61 {offsets = [32, 0], sizes = [16, 256], strides = [1, 1]} : vector<48x256xf32> to vector<16x256xf32>
    %65 = arith.mulf %62, %62 : vector<16x256xf32>
    %cst_19 = arith.constant dense<0.000000e+00> : vector<16xf32>
    %66 = vector.multi_reduction <add>, %65, %cst_19 [1] : vector<16x256xf32> to vector<16xf32>
    %67 = vector.shape_cast %66 : vector<16xf32> to vector<16x1xf32>
    %68 = math.rsqrt %67 : vector<16x1xf32>
    %cst_20 = arith.constant 9.99999995E+11 : f32
    %69 = vector.broadcast %cst_20 : f32 to vector<16x1xf32>
    %70 = arith.minimumf %68, %69 : vector<16x1xf32>
    %71 = vector.broadcast %70 : vector<16x1xf32> to vector<16x256xf32>
    %72 = arith.mulf %62, %71 : vector<16x256xf32>
    %c0_21 = arith.constant 0 : index
    %c0_22 = arith.constant 0 : index
    %73 = vector.load %arg7[%c0_21, %c0_22] : memref<16x1xf32, #tpu.memory_space<vmem>>, vector<16x1xf32>
    %74 = vector.broadcast %73 : vector<16x1xf32> to vector<16x256xf32>
    %75 = arith.mulf %72, %74 : vector<16x256xf32>
    %76 = arith.mulf %63, %63 : vector<16x256xf32>
    %cst_23 = arith.constant dense<0.000000e+00> : vector<16xf32>
    %77 = vector.multi_reduction <add>, %76, %cst_23 [1] : vector<16x256xf32> to vector<16xf32>
    %78 = vector.shape_cast %77 : vector<16xf32> to vector<16x1xf32>
    %79 = math.rsqrt %78 : vector<16x1xf32>
    %cst_24 = arith.constant 9.99999995E+11 : f32
    %80 = vector.broadcast %cst_24 : f32 to vector<16x1xf32>
    %81 = arith.minimumf %79, %80 : vector<16x1xf32>
    %82 = vector.broadcast %81 : vector<16x1xf32> to vector<16x256xf32>
    %83 = arith.mulf %63, %82 : vector<16x256xf32>
    %84 = arith.truncf %75 : vector<16x256xf32> to vector<16x256xbf16>
    %85 = arith.truncf %83 : vector<16x256xf32> to vector<16x256xbf16>
    %cst_25 = arith.constant dense<0.000000e+00> : vector<16x16xf32>
    %86 = tpu.matmul %84, %85, %cst_25 {dimension_numbers = #tpu.dot_dimension_numbers<[1], [1], [0], [0], [0, 0, 1, 0], [], []>} : vector<16x256xbf16>, vector<16x256xbf16>, vector<16x16xf32> -> vector<16x16xf32>
    %c0_26 = arith.constant 0 : index
    %c0_27 = arith.constant 0 : index
    %87 = vector.load %arg8[%c0_26, %c0_27] : memref<16x16xf32, #tpu.memory_space<vmem>>, vector<16x16xf32>
    %88 = arith.addf %86, %87 : vector<16x16xf32>
    %cst_28 = arith.constant dense<0xFF800000> : vector<16xf32>
    %89 = vector.multi_reduction <maximumf>, %88, %cst_28 [1] : vector<16x16xf32> to vector<16xf32>
    %90 = vector.shape_cast %89 : vector<16xf32> to vector<16x1xf32>
    %91 = vector.broadcast %90 : vector<16x1xf32> to vector<16x16xf32>
    %92 = arith.subf %88, %91 : vector<16x16xf32>
    %93 = math.exp %92 : vector<16x16xf32>
    %cst_29 = arith.constant dense<0.000000e+00> : vector<16xf32>
    %94 = vector.multi_reduction <add>, %93, %cst_29 [1] : vector<16x16xf32> to vector<16xf32>
    %95 = vector.shape_cast %94 : vector<16xf32> to vector<16x1xf32>
    %96 = vector.broadcast %95 : vector<16x1xf32> to vector<16x16xf32>
    %97 = arith.divf %93, %96 : vector<16x16xf32>
    %98 = arith.truncf %97 : vector<16x16xf32> to vector<16x16xbf16>
    %99 = arith.truncf %64 : vector<16x256xf32> to vector<16x256xbf16>
    %cst_30 = arith.constant dense<0.000000e+00> : vector<16x256xf32>
    %100 = tpu.matmul %98, %99, %cst_30 {dimension_numbers = #tpu.dot_dimension_numbers<[1], [0], [0], [1], [0, 0, 1, 1], [], []>} : vector<16x16xbf16>, vector<16x256xbf16>, vector<16x256xf32> -> vector<16x256xf32>
    %c0_31 = arith.constant 0 : index
    %c0_32 = arith.constant 0 : index
    %101 = vector.load %arg6[%c0_31, %c0_32] : memref<16x16xbf16, #tpu.memory_space<vmem>>, vector<16x16xbf16>
    %102 = arith.truncf %100 : vector<16x256xf32> to vector<16x256xbf16>
    %cst_33 = arith.constant dense<0.000000e+00> : vector<16x256xf32>
    %103 = tpu.matmul %101, %102, %cst_33 {dimension_numbers = #tpu.dot_dimension_numbers<[1], [0], [0], [1], [0, 0, 1, 1], [], []>} : vector<16x16xbf16>, vector<16x256xbf16>, vector<16x256xf32> -> vector<16x256xf32>
    %104 = arith.addf %4, %103 : vector<16x256xf32>
    %c0_34 = arith.constant 0 : index
    %c0_35 = arith.constant 0 : index
    %c0_36 = arith.constant 0 : index
    %105 = vector.load %arg10[%c0_34, %c0_35, %c0_36] : memref<1x16x256xf32, #tpu.memory_space<vmem>>, vector<1x16x256xf32>
    %106 = vector.shape_cast %105 : vector<1x16x256xf32> to vector<16x256xf32>
    %107 = vector.shape_cast %104 : vector<16x256xf32> to vector<1x16x256xf32>
    tpu.vector_store %arg10[%c0_34, %c0_35, %c0_36], %107 {strides = array<i32>} : memref<1x16x256xf32, #tpu.memory_space<vmem>>, vector<1x16x256xf32>,
    return
  }
  func.func @transform_0(%arg0: i32) -> (i32, i32, i32) {
    %c0_i32 = arith.constant 0 : i32
    %c0_i32_0 = arith.constant 0 : i32
    %c0_i32_1 = arith.constant 0 : i32
    return %arg0, %c0_i32, %c0_i32_0 : i32, i32, i32
  }
  func.func @transform_1(%arg0: i32) -> (i32, i32, i32) {
    %c0_i32 = arith.constant 0 : i32
    %c0_i32_0 = arith.constant 0 : i32
    %c0_i32_1 = arith.constant 0 : i32
    return %arg0, %c0_i32, %c0_i32_0 : i32, i32, i32
  }
  func.func @transform_2(%arg0: i32) -> (i32, i32) {
    %c0_i32 = arith.constant 0 : i32
    %c0_i32_0 = arith.constant 0 : i32
    %c0_i32_1 = arith.constant 0 : i32
    return %c0_i32, %c0_i32_0 : i32, i32
  }
  func.func @transform_3(%arg0: i32) -> (i32, i32) {
    %c0_i32 = arith.constant 0 : i32
    %c0_i32_0 = arith.constant 0 : i32
    %c0_i32_1 = arith.constant 0 : i32
    return %c0_i32, %c0_i32_0 : i32, i32
  }
  func.func @transform_4(%arg0: i32) -> (i32, i32) {
    %c0_i32 = arith.constant 0 : i32
    %c0_i32_0 = arith.constant 0 : i32
    %c0_i32_1 = arith.constant 0 : i32
    return %c0_i32, %c0_i32_0 : i32, i32
  }
  func.func @transform_5(%arg0: i32) -> (i32, i32) {
    %c0_i32 = arith.constant 0 : i32
    %c0_i32_0 = arith.constant 0 : i32
    %c0_i32_1 = arith.constant 0 : i32
    return %c0_i32, %c0_i32_0 : i32, i32
  }
  func.func @transform_6(%arg0: i32) -> (i32, i32) {
    %c0_i32 = arith.constant 0 : i32
    %c0_i32_0 = arith.constant 0 : i32
    %c0_i32_1 = arith.constant 0 : i32
    return %c0_i32, %c0_i32_0 : i32, i32
  }
  func.func @transform_7(%arg0: i32) -> (i32, i32) {
    %c0_i32 = arith.constant 0 : i32
    %c0_i32_0 = arith.constant 0 : i32
    %c0_i32_1 = arith.constant 0 : i32
    return %c0_i32, %c0_i32_0 : i32, i32
  }
  func.func @transform_8(%arg0: i32) -> (i32, i32) {
    %c0_i32 = arith.constant 0 : i32
    %c0_i32_0 = arith.constant 0 : i32
    %c0_i32_1 = arith.constant 0 : i32
    return %c0_i32, %c0_i32_0 : i32, i32
  }
  func.func @transform_9(%arg0: i32) -> (i32, i32, i32) {
    %c0_i32 = arith.constant 0 : i32
    %c0_i32_0 = arith.constant 0 : i32
    %c0_i32_1 = arith.constant 0 : i32
    return %arg0, %c0_i32, %c0_i32_0 : i32, i32, i32
  }
}

module attributes {stable_mosaic.version = 11 : i64} {
  func.func @kernel(%arg0: i32, %arg1: memref<1x16x256xf32, #tpu.memory_space<vmem>>, %arg2: memref<16x1xf32, #tpu.memory_space<vmem>>, %arg3: memref<16x1xf32, #tpu.memory_space<vmem>>, %arg4: memref<64x144xbf16, #tpu.memory_space<vmem>>, %arg5: memref<16x32xbf16, #tpu.memory_space<vmem>>, %arg6: memref<2x256xf32, #tpu.memory_space<vmem>>, %arg7: memref<1x16x256xf32, #tpu.memory_space<vmem>>) attributes {dimension_semantics = [#tpu.dimension_semantics<parallel>], iteration_bounds = array<i64: 2>, scalar_prefetch = 0 : i64, scratch_operands = 0 : i64, tpu.core_type = #tpu.core_type<tc>, window_params = [{transform_indices = @transform_0, window_bounds = array<i64: 1, 16, 256>}, {pipeline_mode = #tpu.pipeline_mode<synchronous>, transform_indices = @transform_1, window_bounds = array<i64: 16, 1>}, {pipeline_mode = #tpu.pipeline_mode<synchronous>, transform_indices = @transform_2, window_bounds = array<i64: 16, 1>}, {pipeline_mode = #tpu.pipeline_mode<synchronous>, transform_indices = @transform_3, window_bounds = array<i64: 64, 144>}, {pipeline_mode = #tpu.pipeline_mode<synchronous>, transform_indices = @transform_4, window_bounds = array<i64: 16, 32>}, {pipeline_mode = #tpu.pipeline_mode<synchronous>, transform_indices = @transform_5, window_bounds = array<i64: 2, 256>}, {transform_indices = @transform_6, window_bounds = array<i64: 1, 16, 256>}]} {
    %c0 = arith.constant 0 : index
    %c0_0 = arith.constant 0 : index
    %c0_1 = arith.constant 0 : index
    %0 = vector.load %arg1[%c0, %c0_0, %c0_1] : memref<1x16x256xf32, #tpu.memory_space<vmem>>, vector<1x16x256xf32>
    %1 = vector.shape_cast %0 : vector<1x16x256xf32> to vector<16x256xf32>
    %c0_2 = arith.constant 0 : index
    %c0_3 = arith.constant 0 : index
    %2 = vector.load %arg2[%c0_2, %c0_3] : memref<16x1xf32, #tpu.memory_space<vmem>>, vector<16x1xf32>
    %c0_4 = arith.constant 0 : index
    %c0_5 = arith.constant 0 : index
    %3 = vector.load %arg3[%c0_4, %c0_5] : memref<16x1xf32, #tpu.memory_space<vmem>>, vector<16x1xf32>
    %cst = arith.constant dense<0.000000e+00> : vector<256xf32>
    %4 = vector.multi_reduction <add>, %1, %cst [0] : vector<16x256xf32> to vector<256xf32>
    %5 = vector.shape_cast %4 : vector<256xf32> to vector<1x256xf32>
    %cst_6 = arith.constant 1.600000e+01 : f32
    %6 = vector.broadcast %cst_6 : f32 to vector<1x256xf32>
    %7 = arith.divf %5, %6 : vector<1x256xf32>
    %8 = vector.broadcast %7 : vector<1x256xf32> to vector<16x256xf32>
    %9 = arith.subf %1, %8 : vector<16x256xf32>
    %10 = arith.mulf %9, %9 : vector<16x256xf32>
    %cst_7 = arith.constant dense<0.000000e+00> : vector<256xf32>
    %11 = vector.multi_reduction <add>, %10, %cst_7 [0] : vector<16x256xf32> to vector<256xf32>
    %12 = vector.shape_cast %11 : vector<256xf32> to vector<1x256xf32>
    %cst_8 = arith.constant 1.600000e+01 : f32
    %13 = vector.broadcast %cst_8 : f32 to vector<1x256xf32>
    %14 = arith.divf %12, %13 : vector<1x256xf32>
    %cst_9 = arith.constant 9.99999974E-6 : f32
    %15 = vector.broadcast %cst_9 : f32 to vector<1x256xf32>
    %16 = arith.addf %14, %15 : vector<1x256xf32>
    %17 = math.rsqrt %16 : vector<1x256xf32>
    %18 = vector.broadcast %17 : vector<1x256xf32> to vector<16x256xf32>
    %19 = arith.mulf %9, %18 : vector<16x256xf32>
    %20 = vector.broadcast %2 : vector<16x1xf32> to vector<16x256xf32>
    %21 = arith.mulf %19, %20 : vector<16x256xf32>
    %22 = vector.broadcast %3 : vector<16x1xf32> to vector<16x256xf32>
    %23 = arith.addf %21, %22 : vector<16x256xf32>
    %c0_10 = arith.constant 0 : index
    %c0_11 = arith.constant 0 : index
    %24 = vector.load %arg6[%c0_10, %c0_11] : memref<2x256xf32, #tpu.memory_space<vmem>>, vector<2x256xf32>
    %cst_12 = arith.constant 0.000000e+00 : f32
    %25 = vector.broadcast %cst_12 : f32 to vector<16x17xf32>
    %26 = tpu.concatenate %25, %23, %25 in 1 : vector<16x17xf32>, vector<16x256xf32>, vector<16x17xf32> -> vector<16x290xf32>
    %27 = vector.extract_strided_slice %24 {offsets = [0, 0], sizes = [1, 256], strides = [1, 1]} : vector<2x256xf32> to vector<1x256xf32>
    %28 = vector.shape_cast %27 : vector<1x256xf32> to vector<1x256xf32>
    %29 = vector.broadcast %28 : vector<1x256xf32> to vector<16x256xf32>
    %30 = vector.extract_strided_slice %24 {offsets = [1, 0], sizes = [1, 256], strides = [1, 1]} : vector<2x256xf32> to vector<1x256xf32>
    %31 = vector.shape_cast %30 : vector<1x256xf32> to vector<1x256xf32>
    %32 = vector.broadcast %31 : vector<1x256xf32> to vector<16x256xf32>
    %33 = vector.extract_strided_slice %26 {offsets = [0, 0], sizes = [16, 256], strides = [1, 1]} : vector<16x290xf32> to vector<16x256xf32>
    %34 = arith.mulf %33, %29 : vector<16x256xf32>
    %35 = arith.truncf %34 : vector<16x256xf32> to vector<16x256xbf16>
    %36 = vector.extract_strided_slice %26 {offsets = [0, 1], sizes = [16, 256], strides = [1, 1]} : vector<16x290xf32> to vector<16x256xf32>
    %37 = arith.truncf %36 : vector<16x256xf32> to vector<16x256xbf16>
    %38 = vector.extract_strided_slice %26 {offsets = [0, 2], sizes = [16, 256], strides = [1, 1]} : vector<16x290xf32> to vector<16x256xf32>
    %39 = arith.mulf %38, %32 : vector<16x256xf32>
    %40 = arith.truncf %39 : vector<16x256xf32> to vector<16x256xbf16>
    %41 = vector.extract_strided_slice %26 {offsets = [0, 16], sizes = [16, 256], strides = [1, 1]} : vector<16x290xf32> to vector<16x256xf32>
    %42 = arith.mulf %41, %29 : vector<16x256xf32>
    %43 = arith.truncf %42 : vector<16x256xf32> to vector<16x256xbf16>
    %44 = arith.truncf %23 : vector<16x256xf32> to vector<16x256xbf16>
    %45 = vector.extract_strided_slice %26 {offsets = [0, 18], sizes = [16, 256], strides = [1, 1]} : vector<16x290xf32> to vector<16x256xf32>
    %46 = arith.mulf %45, %32 : vector<16x256xf32>
    %47 = arith.truncf %46 : vector<16x256xf32> to vector<16x256xbf16>
    %48 = vector.extract_strided_slice %26 {offsets = [0, 32], sizes = [16, 256], strides = [1, 1]} : vector<16x290xf32> to vector<16x256xf32>
    %49 = arith.mulf %48, %29 : vector<16x256xf32>
    %50 = arith.truncf %49 : vector<16x256xf32> to vector<16x256xbf16>
    %51 = vector.extract_strided_slice %26 {offsets = [0, 33], sizes = [16, 256], strides = [1, 1]} : vector<16x290xf32> to vector<16x256xf32>
    %52 = arith.truncf %51 : vector<16x256xf32> to vector<16x256xbf16>
    %53 = vector.extract_strided_slice %26 {offsets = [0, 34], sizes = [16, 256], strides = [1, 1]} : vector<16x290xf32> to vector<16x256xf32>
    %54 = arith.mulf %53, %32 : vector<16x256xf32>
    %55 = arith.truncf %54 : vector<16x256xf32> to vector<16x256xbf16>
    %56 = tpu.concatenate %35, %37, %40, %43, %44, %47, %50, %52, %55 in 0 : vector<16x256xbf16>, vector<16x256xbf16>, vector<16x256xbf16>, vector<16x256xbf16>, vector<16x256xbf16>, vector<16x256xbf16>, vector<16x256xbf16>, vector<16x256xbf16>, vector<16x256xbf16> -> vector<144x256xbf16>
    %c0_13 = arith.constant 0 : index
    %c0_14 = arith.constant 0 : index
    %57 = vector.load %arg4[%c0_13, %c0_14] : memref<64x144xbf16, #tpu.memory_space<vmem>>, vector<64x144xbf16>
    %cst_15 = arith.constant dense<0.000000e+00> : vector<64x256xf32>
    %58 = tpu.matmul %57, %56, %cst_15 {dimension_numbers = #tpu.dot_dimension_numbers<[1], [0], [0], [1], [0, 0, 1, 1], [], []>} : vector<64x144xbf16>, vector<144x256xbf16>, vector<64x256xf32> -> vector<64x256xf32>
    %59 = vector.extract_strided_slice %58 {offsets = [0, 0], sizes = [32, 256], strides = [1, 1]} : vector<64x256xf32> to vector<32x256xf32>
    %60 = vector.extract_strided_slice %58 {offsets = [32, 0], sizes = [32, 256], strides = [1, 1]} : vector<64x256xf32> to vector<32x256xf32>
    %cst_16 = arith.constant 5.000000e-01 : f32
    %61 = vector.broadcast %cst_16 : f32 to vector<32x256xf32>
    %62 = arith.mulf %61, %59 : vector<32x256xf32>
    %cst_17 = arith.constant 0.707106769 : f32
    %63 = vector.broadcast %cst_17 : f32 to vector<32x256xf32>
    %64 = arith.mulf %59, %63 : vector<32x256xf32>
    %65 = math.erf %64 : vector<32x256xf32>
    %cst_18 = arith.constant 1.000000e+00 : f32
    %66 = vector.broadcast %cst_18 : f32 to vector<32x256xf32>
    %67 = arith.addf %66, %65 : vector<32x256xf32>
    %68 = arith.mulf %62, %67 : vector<32x256xf32>
    %69 = arith.mulf %68, %60 : vector<32x256xf32>
    %c0_19 = arith.constant 0 : index
    %c0_20 = arith.constant 0 : index
    %70 = vector.load %arg5[%c0_19, %c0_20] : memref<16x32xbf16, #tpu.memory_space<vmem>>, vector<16x32xbf16>
    %71 = arith.truncf %69 : vector<32x256xf32> to vector<32x256xbf16>
    %cst_21 = arith.constant dense<0.000000e+00> : vector<16x256xf32>
    %72 = tpu.matmul %70, %71, %cst_21 {dimension_numbers = #tpu.dot_dimension_numbers<[1], [0], [0], [1], [0, 0, 1, 1], [], []>} : vector<16x32xbf16>, vector<32x256xbf16>, vector<16x256xf32> -> vector<16x256xf32>
    %73 = arith.addf %1, %72 : vector<16x256xf32>
    %c0_22 = arith.constant 0 : index
    %c0_23 = arith.constant 0 : index
    %c0_24 = arith.constant 0 : index
    %74 = vector.load %arg7[%c0_22, %c0_23, %c0_24] : memref<1x16x256xf32, #tpu.memory_space<vmem>>, vector<1x16x256xf32>
    %75 = vector.shape_cast %74 : vector<1x16x256xf32> to vector<16x256xf32>
    %76 = vector.shape_cast %73 : vector<16x256xf32> to vector<1x16x256xf32>
    tpu.vector_store %arg7[%c0_22, %c0_23, %c0_24], %76 {strides = array<i32>} : memref<1x16x256xf32, #tpu.memory_space<vmem>>, vector<1x16x256xf32>,
    return
  }
  func.func @transform_0(%arg0: i32) -> (i32, i32, i32) {
    %c0_i32 = arith.constant 0 : i32
    %c0_i32_0 = arith.constant 0 : i32
    %c0_i32_1 = arith.constant 0 : i32
    return %arg0, %c0_i32, %c0_i32_0 : i32, i32, i32
  }
  func.func @transform_1(%arg0: i32) -> (i32, i32) {
    %c0_i32 = arith.constant 0 : i32
    %c0_i32_0 = arith.constant 0 : i32
    %c0_i32_1 = arith.constant 0 : i32
    return %c0_i32, %c0_i32_0 : i32, i32
  }
  func.func @transform_2(%arg0: i32) -> (i32, i32) {
    %c0_i32 = arith.constant 0 : i32
    %c0_i32_0 = arith.constant 0 : i32
    %c0_i32_1 = arith.constant 0 : i32
    return %c0_i32, %c0_i32_0 : i32, i32
  }
  func.func @transform_3(%arg0: i32) -> (i32, i32) {
    %c0_i32 = arith.constant 0 : i32
    %c0_i32_0 = arith.constant 0 : i32
    %c0_i32_1 = arith.constant 0 : i32
    return %c0_i32, %c0_i32_0 : i32, i32
  }
  func.func @transform_4(%arg0: i32) -> (i32, i32) {
    %c0_i32 = arith.constant 0 : i32
    %c0_i32_0 = arith.constant 0 : i32
    %c0_i32_1 = arith.constant 0 : i32
    return %c0_i32, %c0_i32_0 : i32, i32
  }
  func.func @transform_5(%arg0: i32) -> (i32, i32) {
    %c0_i32 = arith.constant 0 : i32
    %c0_i32_0 = arith.constant 0 : i32
    %c0_i32_1 = arith.constant 0 : i32
    return %c0_i32, %c0_i32_0 : i32, i32
  }
  func.func @transform_6(%arg0: i32) -> (i32, i32, i32) {
    %c0_i32 = arith.constant 0 : i32
    %c0_i32_0 = arith.constant 0 : i32
    %c0_i32_1 = arith.constant 0 : i32
    return %arg0, %c0_i32, %c0_i32_0 : i32, i32, i32
  }
}

</mosaic_0001>

<llo_original>
// kernel: transformer_block_with_mask.4
$region0: #{transformer_block_with_mask.4}
  #allocation0 [shape = 'u32[]', space=smem, size = 0x4, offset = 0x4, fixed_abs, tag = 'smem constant byte address 0x4 - core index']
  #allocation1 [shape = 'u32[144,128]{1,0:T(1,128)}', space=vmem, size = 0x12000, scoped, tag = 'internal scratch']
  %s0 = inlined_call_operand.vmem [shape: f32[2,16,256], index: 0, kind: input, shape index: {}]
  %s1 = inlined_call_operand.vmem [shape: f32[16,1], index: 1, kind: input, shape index: {}]
  %s2 = inlined_call_operand.vmem [shape: f32[16,1], index: 2, kind: input, shape index: {}]
  %s3 = inlined_call_operand.vmem [shape: bf16[16,144], index: 3, kind: input, shape index: {}]
  %s4 = inlined_call_operand.vmem [shape: f32[2,256], index: 4, kind: input, shape index: {}]
  %s5 = inlined_call_operand.vmem [shape: bf16[2,16,256], index: 5, kind: output, shape index: {}]
  %s6 = sld [smem:[#allocation0]]
  $region53: #{transformer_block_with_mask.4} parent=0
    _
  %s8 = ssub.s32 1, %s6
  %s9 = scalar_select 0, %s8, %s6
  loop: start=0, step=1, limit=4
  $region2: #{transformer_block_with_mask.4} parent=0 // loop_pre_header
    _
  $region3: #{transformer_block_with_mask.4} parent=0 // loop_header
    %s11 = sphi 0, %s15
    %p12 = scmp.ge.s32.totalorder %s11, 4
    %s21 = sphi 0, %s23
    %s24 = sphi 0, %s21
    %s25 = sphi 0, %s24
    %s41 = sphi 0, %s25
    %s45 = sphi 0, %s45
    %s47 = sphi 0, %s45
    %s48 = sphi 0, %s47
    %s62 = sphi 0, %s48
    %s66 = sphi 0, %s66
    %s68 = sphi 0, %s66
    %s69 = sphi 0, %s68
    %s83 = sphi 0, %s69
    %s87 = sphi 0, %s87
    %s89 = sphi 0, %s87
    %s90 = sphi 0, %s89
    %s104 = sphi 0, %s90
    %s108 = sphi 0, %s108
    %s110 = sphi 0, %s108
    %s111 = sphi 0, %s110
    %s125 = sphi 0, %s111
    %s131 = sphi 0, %s133
    %s134 = sphi 0, %s131
    %s135 = sphi 0, %s134
    %s151 = sphi 0, %s135
  $region4: #{transformer_block_with_mask.4} parent=0 // loop_header_branch
    %14 = sbr.rel (%p12) target = $region8
  $region5: #{transformer_block_with_mask.4} parent=0 // loop_body
    %s16 = ssub.s32 %s11, 1
    %s17 = ssub.s32 %s11, 2
    %s18 = sadd.s32 %s11, 1
    %s19 = ssub.s32 %s11, %s18
    %p20 = scmp.eq.s32.totalorder %s19, 0
    %s22 = sadd.s32 %s21, 1
    %s23 = scalar_select %p20, %s21, %s22
    %p26 = pneg %p20
    %p27 = scmp.eq.s32.totalorder %s11, 1
    %p28 = por %p26, %p27
    %p29 = scmp.ne.s32.totalorder %s21, %s24
    %p30 = scmp.eq.s32.totalorder %s11, 0
    %p31 = por %p29, %p30
    %p32 = scmp.ne.s32.totalorder %s21, %s24
    %p33 = scmp.eq.s32.totalorder %s16, 1
    %p34 = por %p32, %p33
    %p35 = scmp.ne.s32.totalorder %s24, %s25
    %p36 = scmp.eq.s32.totalorder %s16, 0
    %p37 = por %p35, %p36
    %p38 = scmp.ne.s32.totalorder %s24, %s25
    %p39 = scmp.eq.s32.totalorder %s17, 1
    %p40 = por %p38, %p39
    %p42 = scmp.ne.s32.totalorder %s25, %s41
    %p43 = scmp.eq.s32.totalorder %s17, 0
    %p44 = por %p42, %p43
    %s46 = sadd.s32 %s45, 1
    %p49 = scmp.eq.s32.totalorder %s11, 1
    %p50 = scmp.ne.s32.totalorder %s45, %s47
    %p51 = scmp.eq.s32.totalorder %s11, 0
    %p52 = por %p50, %p51
    %p53 = scmp.ne.s32.totalorder %s45, %s47
    %p54 = scmp.eq.s32.totalorder %s16, 1
    %p55 = por %p53, %p54
    %p56 = scmp.ne.s32.totalorder %s47, %s48
    %p57 = scmp.eq.s32.totalorder %s16, 0
    %p58 = por %p56, %p57
    %p59 = scmp.ne.s32.totalorder %s47, %s48
    %p60 = scmp.eq.s32.totalorder %s17, 1
    %p61 = por %p59, %p60
    %p63 = scmp.ne.s32.totalorder %s48, %s62
    %p64 = scmp.eq.s32.totalorder %s17, 0
    %p65 = por %p63, %p64
    %s67 = sadd.s32 %s66, 1
    %p70 = scmp.eq.s32.totalorder %s11, 1
    %p71 = scmp.ne.s32.totalorder %s66, %s68
    %p72 = scmp.eq.s32.totalorder %s11, 0
    %p73 = por %p71, %p72
    %p74 = scmp.ne.s32.totalorder %s66, %s68
    %p75 = scmp.eq.s32.totalorder %s16, 1
    %p76 = por %p74, %p75
    %p77 = scmp.ne.s32.totalorder %s68, %s69
    %p78 = scmp.eq.s32.totalorder %s16, 0
    %p79 = por %p77, %p78
    %p80 = scmp.ne.s32.totalorder %s68, %s69
    %p81 = scmp.eq.s32.totalorder %s17, 1
    %p82 = por %p80, %p81
    %p84 = scmp.ne.s32.totalorder %s69, %s83
    %p85 = scmp.eq.s32.totalorder %s17, 0
    %p86 = por %p84, %p85
    %s88 = sadd.s32 %s87, 1
    %p91 = scmp.eq.s32.totalorder %s11, 1
    %p92 = scmp.ne.s32.totalorder %s87, %s89
    %p93 = scmp.eq.s32.totalorder %s11, 0
    %p94 = por %p92, %p93
    %p95 = scmp.ne.s32.totalorder %s87, %s89
    %p96 = scmp.eq.s32.totalorder %s16, 1
    %p97 = por %p95, %p96
    %p98 = scmp.ne.s32.totalorder %s89, %s90
    %p99 = scmp.eq.s32.totalorder %s16, 0
    %p100 = por %p98, %p99
    %p101 = scmp.ne.s32.totalorder %s89, %s90
    %p102 = scmp.eq.s32.totalorder %s17, 1
    %p103 = por %p101, %p102
    %p105 = scmp.ne.s32.totalorder %s90, %s104
    %p106 = scmp.eq.s32.totalorder %s17, 0
    %p107 = por %p105, %p106
    %s109 = sadd.s32 %s108, 1
    %p112 = scmp.eq.s32.totalorder %s11, 1
    %p113 = scmp.ne.s32.totalorder %s108, %s110
    %p114 = scmp.eq.s32.totalorder %s11, 0
    %p115 = por %p113, %p114
    %p116 = scmp.ne.s32.totalorder %s108, %s110
    %p117 = scmp.eq.s32.totalorder %s16, 1
    %p118 = por %p116, %p117
    %p119 = scmp.ne.s32.totalorder %s110, %s111
    %p120 = scmp.eq.s32.totalorder %s16, 0
    %p121 = por %p119, %p120
    %p122 = scmp.ne.s32.totalorder %s110, %s111
    %p123 = scmp.eq.s32.totalorder %s17, 1
    %p124 = por %p122, %p123
    %p126 = scmp.ne.s32.totalorder %s111, %s125
    %p127 = scmp.eq.s32.totalorder %s17, 0
    %p128 = por %p126, %p127
    %s129 = ssub.s32 %s11, %s18
    %p130 = scmp.eq.s32.totalorder %s129, 0
    %s132 = sadd.s32 %s131, 1
    %s133 = scalar_select %p130, %s131, %s132
    %p136 = pneg %p130
    %p137 = scmp.eq.s32.totalorder %s11, 1
    %p138 = por %p136, %p137
    %p139 = scmp.ne.s32.totalorder %s131, %s134
    %p140 = scmp.eq.s32.totalorder %s11, 0
    %p141 = por %p139, %p140
    %p142 = scmp.ne.s32.totalorder %s131, %s134
    %p143 = scmp.eq.s32.totalorder %s16, 1
    %p144 = por %p142, %p143
    %p145 = scmp.ne.s32.totalorder %s134, %s135
    %p146 = scmp.eq.s32.totalorder %s16, 0
    %p147 = por %p145, %p146
    %p148 = scmp.ne.s32.totalorder %s134, %s135
    %p149 = scmp.eq.s32.totalorder %s17, 1
    %p150 = por %p148, %p149
    %p152 = scmp.ne.s32.totalorder %s135, %s151
    %p153 = scmp.eq.s32.totalorder %s17, 0
    %p154 = por %p152, %p153
    %p155 = scmp.le.s32.totalorder 1, %s11
    %p156 = scmp.lt.s32.totalorder %s11, 3
    %p157 = pnand %p155, %p156
    %p158 = pneg %p157
    // Predicated region
    $region9: #{transformer_block_with_mask.4} parent=5 // pred_check
      _
    $region10: #{transformer_block_with_mask.4} parent=5 // pred_check_branch
      %160 = sbr.rel (%p157) target = $region12
    $region11: #{transformer_block_with_mask.4} parent=5 // pred_region
      %s161 = ssub.s32 %s11, 1
      // Predicated region
      $region13: #{transformer_block_with_mask.4} parent=11 // pred_check
        %p162 = pneg %p58
      $region14: #{transformer_block_with_mask.4} parent=11 // pred_check_branch
        %164 = sbr.rel (%p162) target = $region16
      $region15: #{transformer_block_with_mask.4} parent=11 // pred_region
        _
      $region16: #{transformer_block_with_mask.4} parent=11 // pred_fallthru
        _
      // Predicated region
      $region17: #{transformer_block_with_mask.4} parent=11 // pred_check
        %p165 = pneg %p79
      $region18: #{transformer_block_with_mask.4} parent=11 // pred_check_branch
        %167 = sbr.rel (%p165) target = $region20
      $region19: #{transformer_block_with_mask.4} parent=11 // pred_region
        _
      $region20: #{transformer_block_with_mask.4} parent=11 // pred_fallthru
        _
      // Predicated region
      $region21: #{transformer_block_with_mask.4} parent=11 // pred_check
        %p168 = pneg %p100
      $region22: #{transformer_block_with_mask.4} parent=11 // pred_check_branch
        %170 = sbr.rel (%p168) target = $region24
      $region23: #{transformer_block_with_mask.4} parent=11 // pred_region
        _
      $region24: #{transformer_block_with_mask.4} parent=11 // pred_fallthru
        _
      // Predicated region
      $region25: #{transformer_block_with_mask.4} parent=11 // pred_check
        %p171 = pneg %p121
      $region26: #{transformer_block_with_mask.4} parent=11 // pred_check_branch
        %173 = sbr.rel (%p171) target = $region28
      $region27: #{transformer_block_with_mask.4} parent=11 // pred_region
        _
      $region28: #{transformer_block_with_mask.4} parent=11 // pred_fallthru
        _
    $region12: #{transformer_block_with_mask.4} parent=5 // pred_fallthru
      _
    %p174 = scmp.lt.s32.totalorder %s11, 2
    // Predicated region
    $region29: #{transformer_block_with_mask.4} parent=5 // pred_check
      %p175 = pneg %p174
    $region30: #{transformer_block_with_mask.4} parent=5 // pred_check_branch
      %177 = sbr.rel (%p175) target = $region32
    $region31: #{transformer_block_with_mask.4} parent=5 // pred_region
      // Predicated region
      $region33: #{transformer_block_with_mask.4} parent=31 // pred_check
        %p178 = pneg %p31
      $region34: #{transformer_block_with_mask.4} parent=31 // pred_check_branch
        %180 = sbr.rel (%p178) target = $region36
      $region35: #{transformer_block_with_mask.4} parent=31 // pred_region
        %p181 = scmp.lt.s32.totalorder %s11, 1
        %s182 = scalar_select %p181, %s11, 1
        %s183 = smul.addr %s182, 4
        %s184 = smul.addr %s183, 8
        %s185 = scalar_lea.vmem %s0, %s184
      $region36: #{transformer_block_with_mask.4} parent=31 // pred_fallthru
        _
    $region32: #{transformer_block_with_mask.4} parent=5 // pred_fallthru
      _
    %p186 = scmp.le.s32.totalorder 1, %s11
    %p187 = scmp.lt.s32.totalorder %s11, 3
    %p188 = pnand %p186, %p187
    %p189 = pneg %p188
    // Predicated region
    $region37: #{transformer_block_with_mask.4} parent=5 // pred_check
      _
    $region38: #{transformer_block_with_mask.4} parent=5 // pred_check_branch
      %191 = sbr.rel (%p188) target = $region40
    $region39: #{transformer_block_with_mask.4} parent=5 // pred_region
      %s192 = ssub.s32 %s11, 1
      %p193 = scmp.lt.s32.totalorder %s16, 1
      %s194 = scalar_select %p193, %s16, 1
      %s195 = smul.addr %s194, 4
      %s196 = smul.addr %s195, 8
      %s197 = scalar_lea.vmem %s0, %s196
      %p198 = pneg %p37
      %p199 = pneg %p34
      %p200 = pneg %p58
      %p201 = pneg %p55
      %p202 = pneg %p79
      %p203 = pneg %p76
      %p204 = pneg %p100
      %p205 = pneg %p97
      %p206 = pneg %p121
      %p207 = pneg %p118
      %p208 = pneg %p147
      %p209 = pneg %p144
      %p210 = scmp.lt.s32.totalorder %s16, 1
      %s211 = scalar_select %p210, %s16, 1
      %s212 = smul.addr %s211, 4
      %s213 = smul.addr %s212, 4
      %s214 = scalar_lea.vmem %s5, %s213
      %p215 = scmp.lt.s32.totalorder %s16, 1
      %s216 = scalar_select %p215, %s16, 1
      %s217 = smul.addr %s216, 4
      %s218 = smul.addr %s217, 8
      %s219 = scalar_lea.vmem %s0, %s218
      %p220 = scmp.lt.s32.totalorder %s16, 1
      %s221 = scalar_select %p220, %s16, 1
      %s222 = smul.addr %s221, 4
      %s223 = smul.addr %s222, 4
      %s224 = scalar_lea.vmem %s5, %s223
      %v226 = vld [vmem:[%s219] sm:$0xff]
      %v227 = vld [vmem:[%s219 + $0x8] sm:$0xff]
      %v228 = vld [vmem:[%s219 + $0x10] sm:$0xff]
      %v229 = vld [vmem:[%s219 + $0x18] sm:$0xff]
      %v230 = vld [vmem:[%s1] sm:$0xff]
      %v231 = vld [vmem:[%s1 + $0x8] sm:$0xff]
      %v232 = vld [vmem:[%s2] sm:$0xff]
      %v233 = vld [vmem:[%s2 + $0x8] sm:$0xff]
      %v234 = vadd.f32 %v226, %v228
      %v235 = vrot.slane %v234, 4
      %v236 = vadd.f32 %v234, %v235
      %v237 = vrot.slane %v236, 2
      %v238 = vadd.f32 %v236, %v237
      %v239 = vrot.slane %v238, 1
      %v240 = vadd.f32 %v238, %v239
      %v241 = vadd.f32 %v227, %v229
      %v242 = vrot.slane %v241, 4
      %v243 = vadd.f32 %v241, %v242
      %v244 = vrot.slane %v243, 2
      %v245 = vadd.f32 %v243, %v244
      %v246 = vrot.slane %v245, 1
      %v247 = vadd.f32 %v245, %v246
      %v248 = vrcp.pop 16.0
      %v249 = vmul.f32 %v240, %v248
      %v250 = vmul.f32 %v247, %v248
      %v251 = vsub.f32 %v226, %v249
      %v252 = vsub.f32 %v227, %v250
      %v253 = vsub.f32 %v228, %v249
      %v254 = vsub.f32 %v229, %v250
      %v255 = vmul.f32 %v251, %v251
      %v256 = vmul.f32 %v252, %v252
      %v257 = vmul.f32 %v253, %v253
      %v258 = vmul.f32 %v254, %v254
      %v259 = vadd.f32 %v255, %v257
      %v260 = vrot.slane %v259, 4
      %v261 = vadd.f32 %v259, %v260
      %v262 = vrot.slane %v261, 2
      %v263 = vadd.f32 %v261, %v262
      %v264 = vrot.slane %v263, 1
      %v265 = vadd.f32 %v263, %v264
      %v266 = vadd.f32 %v256, %v258
      %v267 = vrot.slane %v266, 4
      %v268 = vadd.f32 %v266, %v267
      %v269 = vrot.slane %v268, 2
      %v270 = vadd.f32 %v268, %v269
      %v271 = vrot.slane %v270, 1
      %v272 = vadd.f32 %v270, %v271
      %v273 = vmul.f32 %v265, %v248
      %v274 = vmul.f32 %v272, %v248
      %v275 = vadd.f32 %v273, 1e-05
      %v276 = vadd.f32 %v274, 1e-05
      %v277 = vrsqrt.pop %v275
      %v278 = vrsqrt.pop %v276
      %v279 = vmul.f32 %v251, %v277
      %v280 = vmul.f32 %v252, %v278
      %v281 = vmul.f32 %v253, %v277
      %v282 = vmul.f32 %v254, %v278
      %284 = vset.pattern.permute.xlu0 0
      %285 = vperm.xlu0 %284, %v230
      %v286 = vpop.permute.xlu0 %285
      %289 = vset.pattern.permute.xlu0 0
      %290 = vperm.xlu0 %289, %v231
      %v291 = vpop.permute.xlu0 %290
      %v293 = vmul.f32 %v279, %v286
      %v294 = vmul.f32 %v280, %v286
      %v295 = vmul.f32 %v281, %v291
      %v296 = vmul.f32 %v282, %v291
      %298 = vset.pattern.permute.xlu0 0
      %299 = vperm.xlu0 %298, %v232
      %v300 = vpop.permute.xlu0 %299
      %303 = vset.pattern.permute.xlu0 0
      %304 = vperm.xlu0 %303, %v233
      %v305 = vpop.permute.xlu0 %304
      %v307 = vadd.f32 %v293, %v300
      %v308 = vadd.f32 %v294, %v300
      %v309 = vadd.f32 %v295, %v305
      %v310 = vadd.f32 %v296, %v305
      %v311 = vld [vmem:[%s4] sm:$0xf]
      %316 = vrot.lane.b32.xlu0 %v307, 17
      %v317 = vpop.permute.xlu0 %316
      %318 = vrot.lane.b32.xlu0 %v308, 17
      %v319 = vpop.permute.xlu0 %318
      %320 = vrot.lane.b32.xlu0 %v309, 17
      %v321 = vpop.permute.xlu0 %320
      %322 = vrot.lane.b32.xlu0 %v310, 17
      %v323 = vpop.permute.xlu0 %322
      %vm324 = vcmask 138240
      %v325 = vsel %vm324, %v317, %v319
      %v326 = vsel %vm324, %v321, %v323
      %v333 = vsel %vm324, 0.0, %v317
      %v334 = vsel %vm324, 0.0, %v321
      %v335 = vsel %vm324, %v319, 0.0
      %v336 = vsel %vm324, %v323, 0.0
      %v338 = vlaneseq
      %v339 = vshrl.u32 %v338, 7
      %v340 = vsub.s32 0, %v339
      %v341 = vrot.slane %v311, %v340
      %v342 = vlaneseq
      %v343 = vshrl.u32 %v342, 7
      %v344 = vsub.s32 2, %v343
      %v345 = vrot.slane %v311, %v344
      %v348 = vlaneseq
      %v349 = vshrl.u32 %v348, 7
      %v350 = vsub.s32 0, %v349
      %v351 = vrot.slane %v341, %v350
      %v352 = vlaneseq
      %v353 = vshrl.u32 %v352, 7
      %v354 = vsub.s32 0, %v353
      %v355 = vrot.slane %v345, %v354
      %v356 = vlaneseq
      %v357 = vshrl.u32 %v356, 7
      %v358 = vsub.s32 1, %v357
      %v359 = vrot.slane %v311, %v358
      %v360 = vlaneseq
      %v361 = vshrl.u32 %v360, 7
      %v362 = vsub.s32 3, %v361
      %v363 = vrot.slane %v311, %v362
      %v366 = vlaneseq
      %v367 = vshrl.u32 %v366, 7
      %v368 = vsub.s32 1, %v367
      %v369 = vrot.slane %v359, %v368
      %v370 = vlaneseq
      %v371 = vshrl.u32 %v370, 7
      %v372 = vsub.s32 1, %v371
      %v373 = vrot.slane %v363, %v372
      %v374 = vmul.f32 %v333, %v351
      %v375 = vmul.f32 %v325, %v355
      %v376 = vmul.f32 %v334, %v351
      %v377 = vmul.f32 %v326, %v355
      %v378 = vpack.c.bf16 %v376, %v374
      %v379 = vpack.c.bf16 %v377, %v375
      %v380 = vpack.c.bf16 %v334, %v333
      %v381 = vpack.c.bf16 %v326, %v325
      %v382 = vpack.c.bf16 %v336, %v335
      %385 = vrot.lane.b32.xlu0 %v369, 2
      %v386 = vpop.permute.xlu0 %385
      %387 = vrot.lane.b32.xlu0 %v373, 2
      %v388 = vpop.permute.xlu0 %387
      %vm389 = vcmask 15360
      %v390 = vsel %vm389, %v386, %v388
      %v394 = vmul.f32 %v333, %v386
      %v395 = vmul.f32 %v325, %v390
      %v396 = vmul.f32 %v335, %v388
      %v397 = vmul.f32 %v334, %v386
      %v398 = vmul.f32 %v326, %v390
      %v399 = vmul.f32 %v336, %v388
      %v400 = vpack.c.bf16 %v397, %v394
      %v401 = vpack.c.bf16 %v398, %v395
      %v402 = vpack.c.bf16 %v399, %v396
      %405 = vrot.lane.b32.xlu0 %v351, 16
      %v406 = vpop.permute.xlu0 %405
      %407 = vrot.lane.b32.xlu0 %v355, 16
      %v408 = vpop.permute.xlu0 %407
      %vm409 = vcmask 130048
      %v410 = vsel %vm409, %v406, %v408
      %v414 = vmul.f32 %v333, %v406
      %v415 = vmul.f32 %v325, %v410
      %v416 = vmul.f32 %v335, %v408
      %v417 = vmul.f32 %v334, %v406
      %v418 = vmul.f32 %v326, %v410
      %v419 = vmul.f32 %v336, %v408
      %v420 = vpack.c.bf16 %v417, %v414
      %v421 = vpack.c.bf16 %v418, %v415
      %v422 = vpack.c.bf16 %v419, %v416
      %v423 = vpack.c.bf16 %v309, %v307
      %v424 = vpack.c.bf16 %v310, %v308
      %425 = vrot.lane.b32.xlu0 %v369, 18
      %v426 = vpop.permute.xlu0 %425
      %427 = vrot.lane.b32.xlu0 %v373, 18
      %v428 = vpop.permute.xlu0 %427
      %vm429 = vcmask 146432
      %v430 = vsel %vm429, %v426, %v428
      %v434 = vmul.f32 %v333, %v426
      %v435 = vmul.f32 %v325, %v430
      %v436 = vmul.f32 %v335, %v428
      %v437 = vmul.f32 %v334, %v426
      %v438 = vmul.f32 %v326, %v430
      %v439 = vmul.f32 %v336, %v428
      %v440 = vpack.c.bf16 %v437, %v434
      %v441 = vpack.c.bf16 %v438, %v435
      %v442 = vpack.c.bf16 %v439, %v436
      %443 = vrot.lane.b32.xlu0 %v351, 32
      %v444 = vpop.permute.xlu0 %443
      %445 = vrot.lane.b32.xlu0 %v355, 32
      %v446 = vpop.permute.xlu0 %445
      %vm447 = vcmask 261120
      %v448 = vsel %vm447, %v444, %v446
      %v452 = vmul.f32 %v333, %v444
      %v453 = vmul.f32 %v325, %v448
      %v454 = vmul.f32 %v335, %v446
      %v455 = vmul.f32 %v334, %v444
      %v456 = vmul.f32 %v326, %v448
      %v457 = vmul.f32 %v336, %v446
      %v458 = vpack.c.bf16 %v455, %v452
      %v459 = vpack.c.bf16 %v456, %v453
      %v460 = vpack.c.bf16 %v457, %v454
      %461 = vrot.lane.b32.xlu0 %v369, 34
      %v462 = vpop.permute.xlu0 %461
      %463 = vrot.lane.b32.xlu0 %v373, 34
      %v464 = vpop.permute.xlu0 %463
      %vm465 = vcmask 277504
      %v466 = vsel %vm465, %v462, %v464
      %v470 = vmul.f32 %v333, %v462
      %v471 = vmul.f32 %v325, %v466
      %v472 = vmul.f32 %v335, %v464
      %v473 = vmul.f32 %v334, %v462
      %v474 = vmul.f32 %v326, %v466
      %v475 = vmul.f32 %v336, %v464
      %v476 = vpack.c.bf16 %v473, %v470
      %v477 = vpack.c.bf16 %v474, %v471
      %v478 = vpack.c.bf16 %v475, %v472
      %482 = vrot.lane.b32.xlu0 %v380, 127
      %v483 = vpop.permute.xlu0 %482
      %484 = vrot.lane.b32.xlu0 %v381, 127
      %v485 = vpop.permute.xlu0 %484
      %486 = vrot.lane.b32.xlu0 %v382, 127
      %v487 = vpop.permute.xlu0 %486
      %vm488 = vcmask 1039360
      %v489 = vsel %vm488, %v483, %v485
      %v490 = vsel %vm488, %v485, %v487
      %496 = vrot.lane.b32.xlu0 %v400, 126
      %v497 = vpop.permute.xlu0 %496
      %498 = vrot.lane.b32.xlu0 %v401, 126
      %v499 = vpop.permute.xlu0 %498
      %500 = vrot.lane.b32.xlu0 %v402, 126
      %v501 = vpop.permute.xlu0 %500
      %vm502 = vcmask 1031168
      %v503 = vsel %vm502, %v497, %v499
      %v504 = vsel %vm502, %v499, %v501
      %510 = vrot.lane.b32.xlu0 %v420, 112
      %v511 = vpop.permute.xlu0 %510
      %512 = vrot.lane.b32.xlu0 %v421, 112
      %v513 = vpop.permute.xlu0 %512
      %514 = vrot.lane.b32.xlu0 %v422, 112
      %v515 = vpop.permute.xlu0 %514
      %vm516 = vcmask 916480
      %v517 = vsel %vm516, %v511, %v513
      %v518 = vsel %vm516, %v513, %v515
      %524 = vrot.lane.b32.xlu0 %v440, 110
      %v525 = vpop.permute.xlu0 %524
      %526 = vrot.lane.b32.xlu0 %v441, 110
      %v527 = vpop.permute.xlu0 %526
      %528 = vrot.lane.b32.xlu0 %v442, 110
      %v529 = vpop.permute.xlu0 %528
      %vm530 = vcmask 900096
      %v531 = vsel %vm530, %v525, %v527
      %v532 = vsel %vm530, %v527, %v529
      %538 = vrot.lane.b32.xlu0 %v458, 96
      %v539 = vpop.permute.xlu0 %538
      %540 = vrot.lane.b32.xlu0 %v459, 96
      %v541 = vpop.permute.xlu0 %540
      %542 = vrot.lane.b32.xlu0 %v460, 96
      %v543 = vpop.permute.xlu0 %542
      %vm544 = vcmask 785408
      %v545 = vsel %vm544, %v539, %v541
      %v546 = vsel %vm544, %v541, %v543
      %549 = vrot.lane.b32.xlu0 %v380, 95
      %v550 = vpop.permute.xlu0 %549
      %551 = vrot.lane.b32.xlu0 %v381, 95
      %v552 = vpop.permute.xlu0 %551
      %553 = vrot.lane.b32.xlu0 %v382, 95
      %v554 = vpop.permute.xlu0 %553
      %vm555 = vcmask 777216
      %v556 = vsel %vm555, %v550, %v552
      %v557 = vsel %vm555, %v552, %v554
      %563 = vrot.lane.b32.xlu0 %v476, 94
      %v564 = vpop.permute.xlu0 %563
      %565 = vrot.lane.b32.xlu0 %v477, 94
      %v566 = vpop.permute.xlu0 %565
      %567 = vrot.lane.b32.xlu0 %v478, 94
      %v568 = vpop.permute.xlu0 %567
      %vm569 = vcmask 769024
      %v570 = vsel %vm569, %v564, %v566
      %v571 = vsel %vm569, %v566, %v568
      %v574 = vld [vmem:[%s3] sm:$0xff]
      %v575 = vld [vmem:[%s3 + $0x8] sm:$0xff]
      %v578 = vunpack.c.l.b16 %v574
      %v579 = vunpack.c.h.b16 %v574
      %v580 = vunpack.c.l.b16 %v575
      %v581 = vunpack.c.h.b16 %v575
      %v582 = vpack.c.b16 %v580, %v578
      %v583 = vpack.c.b16 %v581, %v579
      %v586 = vsel %vm409, %v583, 0
      %588 = vmatprep.subr.bf16.mxu0 %v379
      %589 = vmatpush1.bf16.msra.mxu0 %v378
      %590 = vmatprep.subr.bf16.mxu0 %v490
      %591 = vmatpush1.bf16.msra.mxu0 %v489
      %592 = vmatprep.subr.bf16.mxu0 %v504
      %593 = vmatpush1.bf16.msra.mxu0 %v503
      %594 = vmatprep.subr.bf16.mxu0 %v518
      %595 = vmatpush1.bf16.msra.mxu0 %v517
      %596 = vmatprep.subr.bf16.mxu0 %v424
      %597 = vmatpush1.bf16.msra.mxu0 %v423
      %598 = vmatprep.subr.bf16.mxu0 %v532
      %599 = vmatpush1.bf16.msra.mxu0 %v531
      %600 = vmatprep.subr.bf16.mxu0 %v546
      %601 = vmatpush1.bf16.msra.mxu0 %v545
      %602 = vmatprep.subr.bf16.mxu0 %v557
      %603 = vmatpush1.bf16.msra.mxu0 %v556
      %604 = vmatprep.subr.bf16.mxu0 %v571
      %605 = vmatpush1.bf16.msra.mxu0 %v570
      %606 = vmatprep.subr.bf16.mxu0 0
      %607 = vmatpush1.bf16.msra.mxu0 0
      %608 = vmatprep.subr.bf16.mxu0 0
      %609 = vmatpush1.bf16.msra.mxu0 0
      %610 = vmatprep.subr.bf16.mxu0 0
      %611 = vmatpush1.bf16.msra.mxu0 0
      %612 = vmatprep.subr.bf16.mxu0 0
      %613 = vmatpush1.bf16.msra.mxu0 0
      %614 = vmatprep.subr.bf16.mxu0 0
      %615 = vmatpush1.bf16.msra.mxu0 0
      %616 = vmatprep.subr.bf16.mxu0 0
      %617 = vmatpush1.bf16.msra.mxu0 0
      %618 = vmatprep.subr.bf16.mxu0 0
      %619 = vmatpush1.bf16.msra.mxu0 0
      %620 = vmatprep.mubr.bf16.mxu0 %v586
      %621 = vmatmul.mubr.bf16.gmra.mrb[0].mxu0 %v582
      %v622 = vpop.f32.mrb[0].mxu0
      %v623 = vadd.f32 0.0, %v622
      %v624 = vpop.f32.mrb[0].mxu0
      %v625 = vadd.f32 0.0, %v624
      %v626 = vpop.f32.mrb[0].mxu0
      %v627 = vadd.f32 0.0, %v626
      %v628 = vpop.f32.mrb[0].mxu0
      %v629 = vadd.f32 0.0, %v628
      %630 = vdwg.mxu0
      %v631 = vpack.c.bf16 %v627, %v623
      %v632 = vpack.c.bf16 %v629, %v625
      %v635 = vunpack.c.l.b16 %v631
      %v636 = vunpack.c.l.b16 %v632
      %v637 = vunpack.c.h.b16 %v631
      %v638 = vunpack.c.h.b16 %v632
      %v639 = vpack.c.b16 %v636, %v635
      %v640 = vpack.c.b16 %v638, %v637
      %643 = vst [vmem:[%s224] sm:$0xff] %v639
      %644 = vst [vmem:[%s224 + $0x8] sm:$0xff] %v640
      %p645 = scmp.lt.s32.totalorder %s16, 1
      %s646 = scalar_select %p645, %s16, 1
      %s647 = smul.addr %s646, 4
      %s648 = smul.addr %s647, 4
      %s649 = scalar_lea.vmem %s5, %s648
      // Predicated region
      $region41: #{transformer_block_with_mask.4} parent=39 // pred_check
        %p650 = pneg %p144
      $region42: #{transformer_block_with_mask.4} parent=39 // pred_check_branch
        %652 = sbr.rel (%p650) target = $region44
      $region43: #{transformer_block_with_mask.4} parent=39 // pred_region
        _
      $region44: #{transformer_block_with_mask.4} parent=39 // pred_fallthru
        _
    $region40: #{transformer_block_with_mask.4} parent=5 // pred_fallthru
      _
    %p653 = scmp.le.s32.totalorder 2, %s11
    // Predicated region
    $region45: #{transformer_block_with_mask.4} parent=5 // pred_check
      %p654 = pneg %p653
    $region46: #{transformer_block_with_mask.4} parent=5 // pred_check_branch
      %656 = sbr.rel (%p654) target = $region48
    $region47: #{transformer_block_with_mask.4} parent=5 // pred_region
      %s657 = ssub.s32 %s11, 2
      // Predicated region
      $region49: #{transformer_block_with_mask.4} parent=47 // pred_check
        %p658 = pneg %p150
      $region50: #{transformer_block_with_mask.4} parent=47 // pred_check_branch
        %660 = sbr.rel (%p658) target = $region52
      $region51: #{transformer_block_with_mask.4} parent=47 // pred_region
        %p661 = scmp.lt.s32.totalorder %s17, 1
        %s662 = scalar_select %p661, %s17, 1
        %s663 = smul.addr %s662, 4
        %s664 = smul.addr %s663, 4
        %s665 = scalar_lea.vmem %s5, %s664
      $region52: #{transformer_block_with_mask.4} parent=47 // pred_fallthru
        _
    $region48: #{transformer_block_with_mask.4} parent=5 // pred_fallthru
      _
  $region6: #{transformer_block_with_mask.4} parent=0 // loop_footer
    %s15 = sadd.s32 1, %s11
  $region7: #{transformer_block_with_mask.4} parent=0 // loop_footer_branch
    %10 = sbr.rel target = $region3
  $region8: #{transformer_block_with_mask.4} parent=0 // loop_exit
    _

// kernel: transformer_block_with_mask.5
$region0: #{transformer_block_with_mask.5}
  #allocation0 [shape = 'u32[]', space=smem, size = 0x4, offset = 0x4, fixed_abs, tag = 'smem constant byte address 0x4 - core index']
  #allocation1 [shape = 'u32[144,128]{1,0:T(1,128)}', space=vmem, size = 0x12000, scoped, tag = 'internal scratch']
  %s0 = inlined_call_operand.vmem [shape: f32[2,16,16], index: 0, kind: input, shape index: {}]
  %s1 = inlined_call_operand.vmem [shape: bf16[2,16,256], index: 1, kind: input, shape index: {}]
  %s2 = inlined_call_operand.vmem [shape: f32[2,16,256], index: 2, kind: output, shape index: {}]
  %s3 = sld [smem:[#allocation0]]
  $region41: #{transformer_block_with_mask.5} parent=0
    _
  %s5 = ssub.s32 1, %s3
  %s6 = scalar_select 0, %s5, %s3
  loop: start=0, step=1, limit=4
  $region2: #{transformer_block_with_mask.5} parent=0 // loop_pre_header
    _
  $region3: #{transformer_block_with_mask.5} parent=0 // loop_header
    %s8 = sphi 0, %s12
    %p9 = scmp.ge.s32.totalorder %s8, 4
    %s18 = sphi 0, %s20
    %s21 = sphi 0, %s18
    %s22 = sphi 0, %s21
    %s38 = sphi 0, %s22
    %s44 = sphi 0, %s46
    %s47 = sphi 0, %s44
    %s48 = sphi 0, %s47
    %s64 = sphi 0, %s48
    %s70 = sphi 0, %s72
    %s73 = sphi 0, %s70
    %s74 = sphi 0, %s73
    %s90 = sphi 0, %s74
  $region4: #{transformer_block_with_mask.5} parent=0 // loop_header_branch
    %11 = sbr.rel (%p9) target = $region8
  $region5: #{transformer_block_with_mask.5} parent=0 // loop_body
    %s13 = ssub.s32 %s8, 1
    %s14 = ssub.s32 %s8, 2
    %s15 = sadd.s32 %s8, 1
    %s16 = ssub.s32 %s8, %s15
    %p17 = scmp.eq.s32.totalorder %s16, 0
    %s19 = sadd.s32 %s18, 1
    %s20 = scalar_select %p17, %s18, %s19
    %p23 = pneg %p17
    %p24 = scmp.eq.s32.totalorder %s8, 1
    %p25 = por %p23, %p24
    %p26 = scmp.ne.s32.totalorder %s18, %s21
    %p27 = scmp.eq.s32.totalorder %s8, 0
    %p28 = por %p26, %p27
    %p29 = scmp.ne.s32.totalorder %s18, %s21
    %p30 = scmp.eq.s32.totalorder %s13, 1
    %p31 = por %p29, %p30
    %p32 = scmp.ne.s32.totalorder %s21, %s22
    %p33 = scmp.eq.s32.totalorder %s13, 0
    %p34 = por %p32, %p33
    %p35 = scmp.ne.s32.totalorder %s21, %s22
    %p36 = scmp.eq.s32.totalorder %s14, 1
    %p37 = por %p35, %p36
    %p39 = scmp.ne.s32.totalorder %s22, %s38
    %p40 = scmp.eq.s32.totalorder %s14, 0
    %p41 = por %p39, %p40
    %s42 = ssub.s32 %s8, %s15
    %p43 = scmp.eq.s32.totalorder %s42, 0
    %s45 = sadd.s32 %s44, 1
    %s46 = scalar_select %p43, %s44, %s45
    %p49 = pneg %p43
    %p50 = scmp.eq.s32.totalorder %s8, 1
    %p51 = por %p49, %p50
    %p52 = scmp.ne.s32.totalorder %s44, %s47
    %p53 = scmp.eq.s32.totalorder %s8, 0
    %p54 = por %p52, %p53
    %p55 = scmp.ne.s32.totalorder %s44, %s47
    %p56 = scmp.eq.s32.totalorder %s13, 1
    %p57 = por %p55, %p56
    %p58 = scmp.ne.s32.totalorder %s47, %s48
    %p59 = scmp.eq.s32.totalorder %s13, 0
    %p60 = por %p58, %p59
    %p61 = scmp.ne.s32.totalorder %s47, %s48
    %p62 = scmp.eq.s32.totalorder %s14, 1
    %p63 = por %p61, %p62
    %p65 = scmp.ne.s32.totalorder %s48, %s64
    %p66 = scmp.eq.s32.totalorder %s14, 0
    %p67 = por %p65, %p66
    %s68 = ssub.s32 %s8, %s15
    %p69 = scmp.eq.s32.totalorder %s68, 0
    %s71 = sadd.s32 %s70, 1
    %s72 = scalar_select %p69, %s70, %s71
    %p75 = pneg %p69
    %p76 = scmp.eq.s32.totalorder %s8, 1
    %p77 = por %p75, %p76
    %p78 = scmp.ne.s32.totalorder %s70, %s73
    %p79 = scmp.eq.s32.totalorder %s8, 0
    %p80 = por %p78, %p79
    %p81 = scmp.ne.s32.totalorder %s70, %s73
    %p82 = scmp.eq.s32.totalorder %s13, 1
    %p83 = por %p81, %p82
    %p84 = scmp.ne.s32.totalorder %s73, %s74
    %p85 = scmp.eq.s32.totalorder %s13, 0
    %p86 = por %p84, %p85
    %p87 = scmp.ne.s32.totalorder %s73, %s74
    %p88 = scmp.eq.s32.totalorder %s14, 1
    %p89 = por %p87, %p88
    %p91 = scmp.ne.s32.totalorder %s74, %s90
    %p92 = scmp.eq.s32.totalorder %s14, 0
    %p93 = por %p91, %p92
    %p94 = scmp.le.s32.totalorder 1, %s8
    %p95 = scmp.lt.s32.totalorder %s8, 3
    %p96 = pnand %p94, %p95
    %p97 = pneg %p96
    // Predicated region
    $region9: #{transformer_block_with_mask.5} parent=5 // pred_check
      _
    $region10: #{transformer_block_with_mask.5} parent=5 // pred_check_branch
      %99 = sbr.rel (%p96) target = $region12
    $region11: #{transformer_block_with_mask.5} parent=5 // pred_region
      %s100 = ssub.s32 %s8, 1
    $region12: #{transformer_block_with_mask.5} parent=5 // pred_fallthru
      _
    %p101 = scmp.lt.s32.totalorder %s8, 2
    // Predicated region
    $region13: #{transformer_block_with_mask.5} parent=5 // pred_check
      %p102 = pneg %p101
    $region14: #{transformer_block_with_mask.5} parent=5 // pred_check_branch
      %104 = sbr.rel (%p102) target = $region16
    $region15: #{transformer_block_with_mask.5} parent=5 // pred_region
      // Predicated region
      $region17: #{transformer_block_with_mask.5} parent=15 // pred_check
        %p105 = pneg %p28
      $region18: #{transformer_block_with_mask.5} parent=15 // pred_check_branch
        %107 = sbr.rel (%p105) target = $region20
      $region19: #{transformer_block_with_mask.5} parent=15 // pred_region
        %p108 = scmp.lt.s32.totalorder %s8, 1
        %s109 = scalar_select %p108, %s8, 1
        %s110 = smul.addr %s109, 2
        %s111 = smul.addr %s110, 8
        %s112 = scalar_lea.vmem %s0, %s111
      $region20: #{transformer_block_with_mask.5} parent=15 // pred_fallthru
        _
      // Predicated region
      $region21: #{transformer_block_with_mask.5} parent=15 // pred_check
        %p113 = pneg %p54
      $region22: #{transformer_block_with_mask.5} parent=15 // pred_check_branch
        %115 = sbr.rel (%p113) target = $region24
      $region23: #{transformer_block_with_mask.5} parent=15 // pred_region
        %p116 = scmp.lt.s32.totalorder %s8, 1
        %s117 = scalar_select %p116, %s8, 1
        %s118 = smul.addr %s117, 4
        %s119 = smul.addr %s118, 4
        %s120 = scalar_lea.vmem %s1, %s119
      $region24: #{transformer_block_with_mask.5} parent=15 // pred_fallthru
        _
    $region16: #{transformer_block_with_mask.5} parent=5 // pred_fallthru
      _
    %p121 = scmp.le.s32.totalorder 1, %s8
    %p122 = scmp.lt.s32.totalorder %s8, 3
    %p123 = pnand %p121, %p122
    %p124 = pneg %p123
    // Predicated region
    $region25: #{transformer_block_with_mask.5} parent=5 // pred_check
      _
    $region26: #{transformer_block_with_mask.5} parent=5 // pred_check_branch
      %126 = sbr.rel (%p123) target = $region28
    $region27: #{transformer_block_with_mask.5} parent=5 // pred_region
      %s127 = ssub.s32 %s8, 1
      %p128 = scmp.lt.s32.totalorder %s13, 1
      %s129 = scalar_select %p128, %s13, 1
      %s130 = smul.addr %s129, 2
      %s131 = smul.addr %s130, 8
      %s132 = scalar_lea.vmem %s0, %s131
      %p133 = pneg %p34
      %p134 = pneg %p31
      %p135 = scmp.lt.s32.totalorder %s13, 1
      %s136 = scalar_select %p135, %s13, 1
      %s137 = smul.addr %s136, 4
      %s138 = smul.addr %s137, 4
      %s139 = scalar_lea.vmem %s1, %s138
      %p140 = pneg %p60
      %p141 = pneg %p57
      %p142 = pneg %p86
      %p143 = pneg %p83
      %p144 = scmp.lt.s32.totalorder %s13, 1
      %s145 = scalar_select %p144, %s13, 1
      %s146 = smul.addr %s145, 4
      %s147 = smul.addr %s146, 8
      %s148 = scalar_lea.vmem %s2, %s147
      %p149 = scmp.lt.s32.totalorder %s13, 1
      %s150 = scalar_select %p149, %s13, 1
      %s151 = smul.addr %s150, 2
      %s152 = smul.addr %s151, 8
      %s153 = scalar_lea.vmem %s0, %s152
      %p154 = scmp.lt.s32.totalorder %s13, 1
      %s155 = scalar_select %p154, %s13, 1
      %s156 = smul.addr %s155, 4
      %s157 = smul.addr %s156, 4
      %s158 = scalar_lea.vmem %s1, %s157
      %p159 = scmp.lt.s32.totalorder %s13, 1
      %s160 = scalar_select %p159, %s13, 1
      %s161 = smul.addr %s160, 4
      %s162 = smul.addr %s161, 8
      %s163 = scalar_lea.vmem %s2, %s162
      %v165 = vld [vmem:[%s153] sm:$0xff]
      %v166 = vld [vmem:[%s153 + $0x8] sm:$0xff]
      %v167 = vmul.f32 %v165, %v165
      %v168 = vmul.f32 %v166, %v166
      %vm169 = vcmask 130048
      %v170 = vsel %vm169, %v167, 0.0
      %171 = vadd.xlane.f32.xlu0 %v170
      %v172 = vpop.xlane.xlu0 %171
      %v173 = vsel %vm169, %v168, 0.0
      %174 = vadd.xlane.f32.xlu0 %v173
      %v175 = vpop.xlane.xlu0 %174
      %v176 = vrsqrt.pop %v172
      %v177 = vrsqrt.pop %v175
      %v178 = vmin.f32 %v176, 1e+12
      %v179 = vmin.f32 %v177, 1e+12
      %v180 = vmul.f32 %v165, %v178
      %v181 = vmul.f32 %v166, %v179
      %v182 = vpack.c.bf16 %v181, %v180
      %v184 = vsel %vm169, %v182, 0
      %186 = vmatprep.subr.bf16.mxu0 0
      %187 = vmatpush1.bf16.xpose.msra.mxu0 %v184
      %188 = vmatprep.subr.bf16.mxu0 0
      %189 = vmatpush1.bf16.xpose.msra.mxu0 0
      %190 = vmatprep.subr.bf16.mxu0 0
      %191 = vmatpush1.bf16.xpose.msra.mxu0 0
      %192 = vmatprep.subr.bf16.mxu0 0
      %193 = vmatpush1.bf16.xpose.msra.mxu0 0
      %194 = vmatprep.subr.bf16.mxu0 0
      %195 = vmatpush1.bf16.xpose.msra.mxu0 0
      %196 = vmatprep.subr.bf16.mxu0 0
      %197 = vmatpush1.bf16.xpose.msra.mxu0 0
      %198 = vmatprep.subr.bf16.mxu0 0
      %199 = vmatpush1.bf16.xpose.msra.mxu0 0
      %200 = vmatprep.subr.bf16.mxu0 0
      %201 = vmatpush1.bf16.xpose.msra.mxu0 0
      %202 = vmatprep.subr.bf16.mxu0 0
      %203 = vmatpush1.bf16.xpose.msra.mxu0 0
      %204 = vmatprep.subr.bf16.mxu0 0
      %205 = vmatpush1.bf16.xpose.msra.mxu0 0
      %206 = vmatprep.subr.bf16.mxu0 0
      %207 = vmatpush1.bf16.xpose.msra.mxu0 0
      %208 = vmatprep.subr.bf16.mxu0 0
      %209 = vmatpush1.bf16.xpose.msra.mxu0 0
      %210 = vmatprep.subr.bf16.mxu0 0
      %211 = vmatpush1.bf16.xpose.msra.mxu0 0
      %212 = vmatprep.subr.bf16.mxu0 0
      %213 = vmatpush1.bf16.xpose.msra.mxu0 0
      %214 = vmatprep.subr.bf16.mxu0 0
      %215 = vmatpush1.bf16.xpose.msra.mxu0 0
      %216 = vmatprep.subr.bf16.mxu0 0
      %217 = vmatpush1.bf16.xpose.msra.mxu0 0
      %218 = vmatprep.mubr.bf16.mxu0 0
      %219 = vmatmul.mubr.bf16.gmra.mrb[0].mxu0 %v184
      %v220 = vpop.f32.mrb[0].mxu0
      %v221 = vadd.f32 0.0, %v220
      %v222 = vpop.f32.mrb[0].mxu0
      %v223 = vpop.f32.mrb[0].mxu0
      %v224 = vadd.f32 0.0, %v223
      %v225 = vpop.f32.mrb[0].mxu0
      %226 = vdwg.mxu0
      %v227 = vsel %vm169, %v221, -inf
      %228 = vmax.xlane.f32.xlu0 %v227
      %v229 = vpop.xlane.xlu0 %228
      %v230 = vsel %vm169, %v224, -inf
      %231 = vmax.xlane.f32.xlu0 %v230
      %v232 = vpop.xlane.xlu0 %231
      %v233 = vsub.f32 %v221, %v229
      %v234 = vsub.f32 %v224, %v232
      %v235 = vmul.f32 %v233, 1.442695
      %v236 = vpow.pop %v235
      %v237 = vmul.f32 %v234, 1.442695
      %v238 = vpow.pop %v237
      %v239 = vsel %vm169, %v236, 0.0
      %240 = vadd.xlane.f32.xlu0 %v239
      %v241 = vpop.xlane.xlu0 %240
      %v242 = vsel %vm169, %v238, 0.0
      %243 = vadd.xlane.f32.xlu0 %v242
      %v244 = vpop.xlane.xlu0 %243
      %v245 = vrcp.pop %v241
      %v246 = vmul.f32 %v236, %v245
      %v247 = vrcp.pop %v244
      %v248 = vmul.f32 %v238, %v247
      %v249 = vpack.c.bf16 %v248, %v246
      %v250 = vld [vmem:[%s158] sm:$0xff]
      %v251 = vld [vmem:[%s158 + $0x8] sm:$0xff]
      %v254 = vunpack.c.l.b16 %v250
      %v255 = vunpack.c.h.b16 %v250
      %v256 = vunpack.c.l.b16 %v251
      %v257 = vunpack.c.h.b16 %v251
      %v258 = vpack.c.b16 %v256, %v254
      %v259 = vpack.c.b16 %v257, %v255
      %v263 = vsel %vm169, %v249, 0
      %265 = vmatprep.subr.bf16.mxu0 %v259
      %266 = vmatpush1.bf16.msra.mxu0 %v258
      %267 = vmatprep.subr.bf16.mxu0 0
      %268 = vmatpush1.bf16.msra.mxu0 0
      %269 = vmatprep.subr.bf16.mxu0 0
      %270 = vmatpush1.bf16.msra.mxu0 0
      %271 = vmatprep.subr.bf16.mxu0 0
      %272 = vmatpush1.bf16.msra.mxu0 0
      %273 = vmatprep.subr.bf16.mxu0 0
      %274 = vmatpush1.bf16.msra.mxu0 0
      %275 = vmatprep.subr.bf16.mxu0 0
      %276 = vmatpush1.bf16.msra.mxu0 0
      %277 = vmatprep.subr.bf16.mxu0 0
      %278 = vmatpush1.bf16.msra.mxu0 0
      %279 = vmatprep.subr.bf16.mxu0 0
      %280 = vmatpush1.bf16.msra.mxu0 0
      %281 = vmatprep.subr.bf16.mxu0 0
      %282 = vmatpush1.bf16.msra.mxu0 0
      %283 = vmatprep.subr.bf16.mxu0 0
      %284 = vmatpush1.bf16.msra.mxu0 0
      %285 = vmatprep.subr.bf16.mxu0 0
      %286 = vmatpush1.bf16.msra.mxu0 0
      %287 = vmatprep.subr.bf16.mxu0 0
      %288 = vmatpush1.bf16.msra.mxu0 0
      %289 = vmatprep.subr.bf16.mxu0 0
      %290 = vmatpush1.bf16.msra.mxu0 0
      %291 = vmatprep.subr.bf16.mxu0 0
      %292 = vmatpush1.bf16.msra.mxu0 0
      %293 = vmatprep.subr.bf16.mxu0 0
      %294 = vmatpush1.bf16.msra.mxu0 0
      %295 = vmatprep.subr.bf16.mxu0 0
      %296 = vmatpush1.bf16.msra.mxu0 0
      %297 = vmatprep.mubr.bf16.mxu0 0
      %298 = vmatmul.mubr.bf16.gmra.mrb[0].mxu0 %v263
      %v299 = vpop.f32.mrb[0].mxu0
      %v300 = vadd.f32 0.0, %v299
      %v301 = vpop.f32.mrb[0].mxu0
      %v302 = vadd.f32 0.0, %v301
      %v303 = vpop.f32.mrb[0].mxu0
      %v304 = vadd.f32 0.0, %v303
      %v305 = vpop.f32.mrb[0].mxu0
      %v306 = vadd.f32 0.0, %v305
      %307 = vdwg.mxu0
      %308 = vst [vmem:[%s163] sm:$0xff] %v300
      %309 = vst [vmem:[%s163 + $0x8] sm:$0xff] %v302
      %310 = vst [vmem:[%s163 + $0x10] sm:$0xff] %v304
      %311 = vst [vmem:[%s163 + $0x18] sm:$0xff] %v306
      %p312 = scmp.lt.s32.totalorder %s13, 1
      %s313 = scalar_select %p312, %s13, 1
      %s314 = smul.addr %s313, 4
      %s315 = smul.addr %s314, 8
      %s316 = scalar_lea.vmem %s2, %s315
      // Predicated region
      $region29: #{transformer_block_with_mask.5} parent=27 // pred_check
        %p317 = pneg %p83
      $region30: #{transformer_block_with_mask.5} parent=27 // pred_check_branch
        %319 = sbr.rel (%p317) target = $region32
      $region31: #{transformer_block_with_mask.5} parent=27 // pred_region
        _
      $region32: #{transformer_block_with_mask.5} parent=27 // pred_fallthru
        _
    $region28: #{transformer_block_with_mask.5} parent=5 // pred_fallthru
      _
    %p320 = scmp.le.s32.totalorder 2, %s8
    // Predicated region
    $region33: #{transformer_block_with_mask.5} parent=5 // pred_check
      %p321 = pneg %p320
    $region34: #{transformer_block_with_mask.5} parent=5 // pred_check_branch
      %323 = sbr.rel (%p321) target = $region36
    $region35: #{transformer_block_with_mask.5} parent=5 // pred_region
      %s324 = ssub.s32 %s8, 2
      // Predicated region
      $region37: #{transformer_block_with_mask.5} parent=35 // pred_check
        %p325 = pneg %p89
      $region38: #{transformer_block_with_mask.5} parent=35 // pred_check_branch
        %327 = sbr.rel (%p325) target = $region40
      $region39: #{transformer_block_with_mask.5} parent=35 // pred_region
        %p328 = scmp.lt.s32.totalorder %s14, 1
        %s329 = scalar_select %p328, %s14, 1
        %s330 = smul.addr %s329, 4
        %s331 = smul.addr %s330, 8
        %s332 = scalar_lea.vmem %s2, %s331
      $region40: #{transformer_block_with_mask.5} parent=35 // pred_fallthru
        _
    $region36: #{transformer_block_with_mask.5} parent=5 // pred_fallthru
      _
  $region6: #{transformer_block_with_mask.5} parent=0 // loop_footer
    %s12 = sadd.s32 1, %s8
  $region7: #{transformer_block_with_mask.5} parent=0 // loop_footer_branch
    %7 = sbr.rel target = $region3
  $region8: #{transformer_block_with_mask.5} parent=0 // loop_exit
    _

// kernel: transformer_block_with_mask.6
$region0: #{transformer_block_with_mask.6}
  #allocation0 [shape = 'u32[]', space=smem, size = 0x4, offset = 0x4, fixed_abs, tag = 'smem constant byte address 0x4 - core index']
  #allocation1 [shape = 'u32[144,128]{1,0:T(1,128)}', space=vmem, size = 0x12000, scoped, tag = 'internal scratch']
  %s0 = inlined_call_operand.vmem [shape: f32[2,16,256], index: 0, kind: input, shape index: {}]
  %s1 = inlined_call_operand.vmem [shape: f32[2,16,256], index: 1, kind: input, shape index: {}]
  %s2 = inlined_call_operand.vmem [shape: f32[16,1], index: 2, kind: input, shape index: {}]
  %s3 = inlined_call_operand.vmem [shape: f32[16,1], index: 3, kind: input, shape index: {}]
  %s4 = inlined_call_operand.vmem [shape: bf16[48,144], index: 4, kind: input, shape index: {}]
  %s5 = inlined_call_operand.vmem [shape: bf16[16,16], index: 5, kind: input, shape index: {}]
  %s6 = inlined_call_operand.vmem [shape: f32[16,1], index: 6, kind: input, shape index: {}]
  %s7 = inlined_call_operand.vmem [shape: f32[16,16], index: 7, kind: input, shape index: {}]
  %s8 = inlined_call_operand.vmem [shape: f32[2,256], index: 8, kind: input, shape index: {}]
  %s9 = inlined_call_operand.vmem [shape: f32[2,16,256], index: 9, kind: output, shape index: {}]
  %s10 = sld [smem:[#allocation0]]
  $region69: #{transformer_block_with_mask.6} parent=0
    _
  %s12 = ssub.s32 1, %s10
  %s13 = scalar_select 0, %s12, %s10
  loop: start=0, step=1, limit=4
  $region2: #{transformer_block_with_mask.6} parent=0 // loop_pre_header
    _
  $region3: #{transformer_block_with_mask.6} parent=0 // loop_header
    %s15 = sphi 0, %s19
    %p16 = scmp.ge.s32.totalorder %s15, 4
    %s25 = sphi 0, %s27
    %s28 = sphi 0, %s25
    %s29 = sphi 0, %s28
    %s45 = sphi 0, %s29
    %s51 = sphi 0, %s53
    %s54 = sphi 0, %s51
    %s55 = sphi 0, %s54
    %s71 = sphi 0, %s55
    %s75 = sphi 0, %s75
    %s77 = sphi 0, %s75
    %s78 = sphi 0, %s77
    %s92 = sphi 0, %s78
    %s96 = sphi 0, %s96
    %s98 = sphi 0, %s96
    %s99 = sphi 0, %s98
    %s113 = sphi 0, %s99
    %s117 = sphi 0, %s117
    %s119 = sphi 0, %s117
    %s120 = sphi 0, %s119
    %s134 = sphi 0, %s120
    %s138 = sphi 0, %s138
    %s140 = sphi 0, %s138
    %s141 = sphi 0, %s140
    %s155 = sphi 0, %s141
    %s159 = sphi 0, %s159
    %s161 = sphi 0, %s159
    %s162 = sphi 0, %s161
    %s176 = sphi 0, %s162
    %s180 = sphi 0, %s180
    %s182 = sphi 0, %s180
    %s183 = sphi 0, %s182
    %s197 = sphi 0, %s183
    %s201 = sphi 0, %s201
    %s203 = sphi 0, %s201
    %s204 = sphi 0, %s203
    %s218 = sphi 0, %s204
    %s224 = sphi 0, %s226
    %s227 = sphi 0, %s224
    %s228 = sphi 0, %s227
    %s244 = sphi 0, %s228
  $region4: #{transformer_block_with_mask.6} parent=0 // loop_header_branch
    %18 = sbr.rel (%p16) target = $region8
  $region5: #{transformer_block_with_mask.6} parent=0 // loop_body
    %s20 = ssub.s32 %s15, 1
    %s21 = ssub.s32 %s15, 2
    %s22 = sadd.s32 %s15, 1
    %s23 = ssub.s32 %s15, %s22
    %p24 = scmp.eq.s32.totalorder %s23, 0
    %s26 = sadd.s32 %s25, 1
    %s27 = scalar_select %p24, %s25, %s26
    %p30 = pneg %p24
    %p31 = scmp.eq.s32.totalorder %s15, 1
    %p32 = por %p30, %p31
    %p33 = scmp.ne.s32.totalorder %s25, %s28
    %p34 = scmp.eq.s32.totalorder %s15, 0
    %p35 = por %p33, %p34
    %p36 = scmp.ne.s32.totalorder %s25, %s28
    %p37 = scmp.eq.s32.totalorder %s20, 1
    %p38 = por %p36, %p37
    %p39 = scmp.ne.s32.totalorder %s28, %s29
    %p40 = scmp.eq.s32.totalorder %s20, 0
    %p41 = por %p39, %p40
    %p42 = scmp.ne.s32.totalorder %s28, %s29
    %p43 = scmp.eq.s32.totalorder %s21, 1
    %p44 = por %p42, %p43
    %p46 = scmp.ne.s32.totalorder %s29, %s45
    %p47 = scmp.eq.s32.totalorder %s21, 0
    %p48 = por %p46, %p47
    %s49 = ssub.s32 %s15, %s22
    %p50 = scmp.eq.s32.totalorder %s49, 0
    %s52 = sadd.s32 %s51, 1
    %s53 = scalar_select %p50, %s51, %s52
    %p56 = pneg %p50
    %p57 = scmp.eq.s32.totalorder %s15, 1
    %p58 = por %p56, %p57
    %p59 = scmp.ne.s32.totalorder %s51, %s54
    %p60 = scmp.eq.s32.totalorder %s15, 0
    %p61 = por %p59, %p60
    %p62 = scmp.ne.s32.totalorder %s51, %s54
    %p63 = scmp.eq.s32.totalorder %s20, 1
    %p64 = por %p62, %p63
    %p65 = scmp.ne.s32.totalorder %s54, %s55
    %p66 = scmp.eq.s32.totalorder %s20, 0
    %p67 = por %p65, %p66
    %p68 = scmp.ne.s32.totalorder %s54, %s55
    %p69 = scmp.eq.s32.totalorder %s21, 1
    %p70 = por %p68, %p69
    %p72 = scmp.ne.s32.totalorder %s55, %s71
    %p73 = scmp.eq.s32.totalorder %s21, 0
    %p74 = por %p72, %p73
    %s76 = sadd.s32 %s75, 1
    %p79 = scmp.eq.s32.totalorder %s15, 1
    %p80 = scmp.ne.s32.totalorder %s75, %s77
    %p81 = scmp.eq.s32.totalorder %s15, 0
    %p82 = por %p80, %p81
    %p83 = scmp.ne.s32.totalorder %s75, %s77
    %p84 = scmp.eq.s32.totalorder %s20, 1
    %p85 = por %p83, %p84
    %p86 = scmp.ne.s32.totalorder %s77, %s78
    %p87 = scmp.eq.s32.totalorder %s20, 0
    %p88 = por %p86, %p87
    %p89 = scmp.ne.s32.totalorder %s77, %s78
    %p90 = scmp.eq.s32.totalorder %s21, 1
    %p91 = por %p89, %p90
    %p93 = scmp.ne.s32.totalorder %s78, %s92
    %p94 = scmp.eq.s32.totalorder %s21, 0
    %p95 = por %p93, %p94
    %s97 = sadd.s32 %s96, 1
    %p100 = scmp.eq.s32.totalorder %s15, 1
    %p101 = scmp.ne.s32.totalorder %s96, %s98
    %p102 = scmp.eq.s32.totalorder %s15, 0
    %p103 = por %p101, %p102
    %p104 = scmp.ne.s32.totalorder %s96, %s98
    %p105 = scmp.eq.s32.totalorder %s20, 1
    %p106 = por %p104, %p105
    %p107 = scmp.ne.s32.totalorder %s98, %s99
    %p108 = scmp.eq.s32.totalorder %s20, 0
    %p109 = por %p107, %p108
    %p110 = scmp.ne.s32.totalorder %s98, %s99
    %p111 = scmp.eq.s32.totalorder %s21, 1
    %p112 = por %p110, %p111
    %p114 = scmp.ne.s32.totalorder %s99, %s113
    %p115 = scmp.eq.s32.totalorder %s21, 0
    %p116 = por %p114, %p115
    %s118 = sadd.s32 %s117, 1
    %p121 = scmp.eq.s32.totalorder %s15, 1
    %p122 = scmp.ne.s32.totalorder %s117, %s119
    %p123 = scmp.eq.s32.totalorder %s15, 0
    %p124 = por %p122, %p123
    %p125 = scmp.ne.s32.totalorder %s117, %s119
    %p126 = scmp.eq.s32.totalorder %s20, 1
    %p127 = por %p125, %p126
    %p128 = scmp.ne.s32.totalorder %s119, %s120
    %p129 = scmp.eq.s32.totalorder %s20, 0
    %p130 = por %p128, %p129
    %p131 = scmp.ne.s32.totalorder %s119, %s120
    %p132 = scmp.eq.s32.totalorder %s21, 1
    %p133 = por %p131, %p132
    %p135 = scmp.ne.s32.totalorder %s120, %s134
    %p136 = scmp.eq.s32.totalorder %s21, 0
    %p137 = por %p135, %p136
    %s139 = sadd.s32 %s138, 1
    %p142 = scmp.eq.s32.totalorder %s15, 1
    %p143 = scmp.ne.s32.totalorder %s138, %s140
    %p144 = scmp.eq.s32.totalorder %s15, 0
    %p145 = por %p143, %p144
    %p146 = scmp.ne.s32.totalorder %s138, %s140
    %p147 = scmp.eq.s32.totalorder %s20, 1
    %p148 = por %p146, %p147
    %p149 = scmp.ne.s32.totalorder %s140, %s141
    %p150 = scmp.eq.s32.totalorder %s20, 0
    %p151 = por %p149, %p150
    %p152 = scmp.ne.s32.totalorder %s140, %s141
    %p153 = scmp.eq.s32.totalorder %s21, 1
    %p154 = por %p152, %p153
    %p156 = scmp.ne.s32.totalorder %s141, %s155
    %p157 = scmp.eq.s32.totalorder %s21, 0
    %p158 = por %p156, %p157
    %s160 = sadd.s32 %s159, 1
    %p163 = scmp.eq.s32.totalorder %s15, 1
    %p164 = scmp.ne.s32.totalorder %s159, %s161
    %p165 = scmp.eq.s32.totalorder %s15, 0
    %p166 = por %p164, %p165
    %p167 = scmp.ne.s32.totalorder %s159, %s161
    %p168 = scmp.eq.s32.totalorder %s20, 1
    %p169 = por %p167, %p168
    %p170 = scmp.ne.s32.totalorder %s161, %s162
    %p171 = scmp.eq.s32.totalorder %s20, 0
    %p172 = por %p170, %p171
    %p173 = scmp.ne.s32.totalorder %s161, %s162
    %p174 = scmp.eq.s32.totalorder %s21, 1
    %p175 = por %p173, %p174
    %p177 = scmp.ne.s32.totalorder %s162, %s176
    %p178 = scmp.eq.s32.totalorder %s21, 0
    %p179 = por %p177, %p178
    %s181 = sadd.s32 %s180, 1
    %p184 = scmp.eq.s32.totalorder %s15, 1
    %p185 = scmp.ne.s32.totalorder %s180, %s182
    %p186 = scmp.eq.s32.totalorder %s15, 0
    %p187 = por %p185, %p186
    %p188 = scmp.ne.s32.totalorder %s180, %s182
    %p189 = scmp.eq.s32.totalorder %s20, 1
    %p190 = por %p188, %p189
    %p191 = scmp.ne.s32.totalorder %s182, %s183
    %p192 = scmp.eq.s32.totalorder %s20, 0
    %p193 = por %p191, %p192
    %p194 = scmp.ne.s32.totalorder %s182, %s183
    %p195 = scmp.eq.s32.totalorder %s21, 1
    %p196 = por %p194, %p195
    %p198 = scmp.ne.s32.totalorder %s183, %s197
    %p199 = scmp.eq.s32.totalorder %s21, 0
    %p200 = por %p198, %p199
    %s202 = sadd.s32 %s201, 1
    %p205 = scmp.eq.s32.totalorder %s15, 1
    %p206 = scmp.ne.s32.totalorder %s201, %s203
    %p207 = scmp.eq.s32.totalorder %s15, 0
    %p208 = por %p206, %p207
    %p209 = scmp.ne.s32.totalorder %s201, %s203
    %p210 = scmp.eq.s32.totalorder %s20, 1
    %p211 = por %p209, %p210
    %p212 = scmp.ne.s32.totalorder %s203, %s204
    %p213 = scmp.eq.s32.totalorder %s20, 0
    %p214 = por %p212, %p213
    %p215 = scmp.ne.s32.totalorder %s203, %s204
    %p216 = scmp.eq.s32.totalorder %s21, 1
    %p217 = por %p215, %p216
    %p219 = scmp.ne.s32.totalorder %s204, %s218
    %p220 = scmp.eq.s32.totalorder %s21, 0
    %p221 = por %p219, %p220
    %s222 = ssub.s32 %s15, %s22
    %p223 = scmp.eq.s32.totalorder %s222, 0
    %s225 = sadd.s32 %s224, 1
    %s226 = scalar_select %p223, %s224, %s225
    %p229 = pneg %p223
    %p230 = scmp.eq.s32.totalorder %s15, 1
    %p231 = por %p229, %p230
    %p232 = scmp.ne.s32.totalorder %s224, %s227
    %p233 = scmp.eq.s32.totalorder %s15, 0
    %p234 = por %p232, %p233
    %p235 = scmp.ne.s32.totalorder %s224, %s227
    %p236 = scmp.eq.s32.totalorder %s20, 1
    %p237 = por %p235, %p236
    %p238 = scmp.ne.s32.totalorder %s227, %s228
    %p239 = scmp.eq.s32.totalorder %s20, 0
    %p240 = por %p238, %p239
    %p241 = scmp.ne.s32.totalorder %s227, %s228
    %p242 = scmp.eq.s32.totalorder %s21, 1
    %p243 = por %p241, %p242
    %p245 = scmp.ne.s32.totalorder %s228, %s244
    %p246 = scmp.eq.s32.totalorder %s21, 0
    %p247 = por %p245, %p246
    %p248 = scmp.le.s32.totalorder 1, %s15
    %p249 = scmp.lt.s32.totalorder %s15, 3
    %p250 = pnand %p248, %p249
    %p251 = pneg %p250
    // Predicated region
    $region9: #{transformer_block_with_mask.6} parent=5 // pred_check
      _
    $region10: #{transformer_block_with_mask.6} parent=5 // pred_check_branch
      %253 = sbr.rel (%p250) target = $region12
    $region11: #{transformer_block_with_mask.6} parent=5 // pred_region
      %s254 = ssub.s32 %s15, 1
      // Predicated region
      $region13: #{transformer_block_with_mask.6} parent=11 // pred_check
        %p255 = pneg %p88
      $region14: #{transformer_block_with_mask.6} parent=11 // pred_check_branch
        %257 = sbr.rel (%p255) target = $region16
      $region15: #{transformer_block_with_mask.6} parent=11 // pred_region
        _
      $region16: #{transformer_block_with_mask.6} parent=11 // pred_fallthru
        _
      // Predicated region
      $region17: #{transformer_block_with_mask.6} parent=11 // pred_check
        %p258 = pneg %p109
      $region18: #{transformer_block_with_mask.6} parent=11 // pred_check_branch
        %260 = sbr.rel (%p258) target = $region20
      $region19: #{transformer_block_with_mask.6} parent=11 // pred_region
        _
      $region20: #{transformer_block_with_mask.6} parent=11 // pred_fallthru
        _
      // Predicated region
      $region21: #{transformer_block_with_mask.6} parent=11 // pred_check
        %p261 = pneg %p130
      $region22: #{transformer_block_with_mask.6} parent=11 // pred_check_branch
        %263 = sbr.rel (%p261) target = $region24
      $region23: #{transformer_block_with_mask.6} parent=11 // pred_region
        _
      $region24: #{transformer_block_with_mask.6} parent=11 // pred_fallthru
        _
      // Predicated region
      $region25: #{transformer_block_with_mask.6} parent=11 // pred_check
        %p264 = pneg %p151
      $region26: #{transformer_block_with_mask.6} parent=11 // pred_check_branch
        %266 = sbr.rel (%p264) target = $region28
      $region27: #{transformer_block_with_mask.6} parent=11 // pred_region
        _
      $region28: #{transformer_block_with_mask.6} parent=11 // pred_fallthru
        _
      // Predicated region
      $region29: #{transformer_block_with_mask.6} parent=11 // pred_check
        %p267 = pneg %p172
      $region30: #{transformer_block_with_mask.6} parent=11 // pred_check_branch
        %269 = sbr.rel (%p267) target = $region32
      $region31: #{transformer_block_with_mask.6} parent=11 // pred_region
        _
      $region32: #{transformer_block_with_mask.6} parent=11 // pred_fallthru
        _
      // Predicated region
      $region33: #{transformer_block_with_mask.6} parent=11 // pred_check
        %p270 = pneg %p193
      $region34: #{transformer_block_with_mask.6} parent=11 // pred_check_branch
        %272 = sbr.rel (%p270) target = $region36
      $region35: #{transformer_block_with_mask.6} parent=11 // pred_region
        _
      $region36: #{transformer_block_with_mask.6} parent=11 // pred_fallthru
        _
      // Predicated region
      $region37: #{transformer_block_with_mask.6} parent=11 // pred_check
        %p273 = pneg %p214
      $region38: #{transformer_block_with_mask.6} parent=11 // pred_check_branch
        %275 = sbr.rel (%p273) target = $region40
      $region39: #{transformer_block_with_mask.6} parent=11 // pred_region
        _
      $region40: #{transformer_block_with_mask.6} parent=11 // pred_fallthru
        _
    $region12: #{transformer_block_with_mask.6} parent=5 // pred_fallthru
      _
    %p276 = scmp.lt.s32.totalorder %s15, 2
    // Predicated region
    $region41: #{transformer_block_with_mask.6} parent=5 // pred_check
      %p277 = pneg %p276
    $region42: #{transformer_block_with_mask.6} parent=5 // pred_check_branch
      %279 = sbr.rel (%p277) target = $region44
    $region43: #{transformer_block_with_mask.6} parent=5 // pred_region
      // Predicated region
      $region45: #{transformer_block_with_mask.6} parent=43 // pred_check
        %p280 = pneg %p35
      $region46: #{transformer_block_with_mask.6} parent=43 // pred_check_branch
        %282 = sbr.rel (%p280) target = $region48
      $region47: #{transformer_block_with_mask.6} parent=43 // pred_region
        %p283 = scmp.lt.s32.totalorder %s15, 1
        %s284 = scalar_select %p283, %s15, 1
        %s285 = smul.addr %s284, 4
        %s286 = smul.addr %s285, 8
        %s287 = scalar_lea.vmem %s0, %s286
      $region48: #{transformer_block_with_mask.6} parent=43 // pred_fallthru
        _
      // Predicated region
      $region49: #{transformer_block_with_mask.6} parent=43 // pred_check
        %p288 = pneg %p61
      $region50: #{transformer_block_with_mask.6} parent=43 // pred_check_branch
        %290 = sbr.rel (%p288) target = $region52
      $region51: #{transformer_block_with_mask.6} parent=43 // pred_region
        %p291 = scmp.lt.s32.totalorder %s15, 1
        %s292 = scalar_select %p291, %s15, 1
        %s293 = smul.addr %s292, 4
        %s294 = smul.addr %s293, 8
        %s295 = scalar_lea.vmem %s1, %s294
      $region52: #{transformer_block_with_mask.6} parent=43 // pred_fallthru
        _
    $region44: #{transformer_block_with_mask.6} parent=5 // pred_fallthru
      _
    %p296 = scmp.le.s32.totalorder 1, %s15
    %p297 = scmp.lt.s32.totalorder %s15, 3
    %p298 = pnand %p296, %p297
    %p299 = pneg %p298
    // Predicated region
    $region53: #{transformer_block_with_mask.6} parent=5 // pred_check
      _
    $region54: #{transformer_block_with_mask.6} parent=5 // pred_check_branch
      %301 = sbr.rel (%p298) target = $region56
    $region55: #{transformer_block_with_mask.6} parent=5 // pred_region
      %s302 = ssub.s32 %s15, 1
      %p303 = scmp.lt.s32.totalorder %s20, 1
      %s304 = scalar_select %p303, %s20, 1
      %s305 = smul.addr %s304, 4
      %s306 = smul.addr %s305, 8
      %s307 = scalar_lea.vmem %s0, %s306
      %p308 = pneg %p41
      %p309 = pneg %p38
      %p310 = scmp.lt.s32.totalorder %s20, 1
      %s311 = scalar_select %p310, %s20, 1
      %s312 = smul.addr %s311, 4
      %s313 = smul.addr %s312, 8
      %s314 = scalar_lea.vmem %s1, %s313
      %p315 = pneg %p67
      %p316 = pneg %p64
      %p317 = pneg %p88
      %p318 = pneg %p85
      %p319 = pneg %p109
      %p320 = pneg %p106
      %p321 = pneg %p130
      %p322 = pneg %p127
      %p323 = pneg %p151
      %p324 = pneg %p148
      %p325 = pneg %p172
      %p326 = pneg %p169
      %p327 = pneg %p193
      %p328 = pneg %p190
      %p329 = pneg %p214
      %p330 = pneg %p211
      %p331 = pneg %p240
      %p332 = pneg %p237
      %p333 = scmp.lt.s32.totalorder %s20, 1
      %s334 = scalar_select %p333, %s20, 1
      %s335 = smul.addr %s334, 4
      %s336 = smul.addr %s335, 8
      %s337 = scalar_lea.vmem %s9, %s336
      %p338 = scmp.lt.s32.totalorder %s20, 1
      %s339 = scalar_select %p338, %s20, 1
      %s340 = smul.addr %s339, 4
      %s341 = smul.addr %s340, 8
      %s342 = scalar_lea.vmem %s0, %s341
      %p343 = scmp.lt.s32.totalorder %s20, 1
      %s344 = scalar_select %p343, %s20, 1
      %s345 = smul.addr %s344, 4
      %s346 = smul.addr %s345, 8
      %s347 = scalar_lea.vmem %s1, %s346
      %p348 = scmp.lt.s32.totalorder %s20, 1
      %s349 = scalar_select %p348, %s20, 1
      %s350 = smul.addr %s349, 4
      %s351 = smul.addr %s350, 8
      %s352 = scalar_lea.vmem %s9, %s351
      %v354 = vld [vmem:[%s342] sm:$0xff]
      %v355 = vld [vmem:[%s342 + $0x8] sm:$0xff]
      %v356 = vld [vmem:[%s342 + $0x10] sm:$0xff]
      %v357 = vld [vmem:[%s342 + $0x18] sm:$0xff]
      %v358 = vld [vmem:[%s347] sm:$0xff]
      %v359 = vld [vmem:[%s347 + $0x8] sm:$0xff]
      %v360 = vld [vmem:[%s347 + $0x10] sm:$0xff]
      %v361 = vld [vmem:[%s347 + $0x18] sm:$0xff]
      %v362 = vadd.f32 %v354, %v358
      %v363 = vadd.f32 %v355, %v359
      %v364 = vadd.f32 %v356, %v360
      %v365 = vadd.f32 %v357, %v361
      %v366 = vld [vmem:[%s2] sm:$0xff]
      %v367 = vld [vmem:[%s2 + $0x8] sm:$0xff]
      %v368 = vld [vmem:[%s3] sm:$0xff]
      %v369 = vld [vmem:[%s3 + $0x8] sm:$0xff]
      %v370 = vadd.f32 %v362, %v364
      %v371 = vrot.slane %v370, 4
      %v372 = vadd.f32 %v370, %v371
      %v373 = vrot.slane %v372, 2
      %v374 = vadd.f32 %v372, %v373
      %v375 = vrot.slane %v374, 1
      %v376 = vadd.f32 %v374, %v375
      %v377 = vadd.f32 %v363, %v365
      %v378 = vrot.slane %v377, 4
      %v379 = vadd.f32 %v377, %v378
      %v380 = vrot.slane %v379, 2
      %v381 = vadd.f32 %v379, %v380
      %v382 = vrot.slane %v381, 1
      %v383 = vadd.f32 %v381, %v382
      %v384 = vrcp.pop 16.0
      %v385 = vmul.f32 %v376, %v384
      %v386 = vmul.f32 %v383, %v384
      %v387 = vsub.f32 %v362, %v385
      %v388 = vsub.f32 %v363, %v386
      %v389 = vsub.f32 %v364, %v385
      %v390 = vsub.f32 %v365, %v386
      %v391 = vmul.f32 %v387, %v387
      %v392 = vmul.f32 %v388, %v388
      %v393 = vmul.f32 %v389, %v389
      %v394 = vmul.f32 %v390, %v390
      %v395 = vadd.f32 %v391, %v393
      %v396 = vrot.slane %v395, 4
      %v397 = vadd.f32 %v395, %v396
      %v398 = vrot.slane %v397, 2
      %v399 = vadd.f32 %v397, %v398
      %v400 = vrot.slane %v399, 1
      %v401 = vadd.f32 %v399, %v400
      %v402 = vadd.f32 %v392, %v394
      %v403 = vrot.slane %v402, 4
      %v404 = vadd.f32 %v402, %v403
      %v405 = vrot.slane %v404, 2
      %v406 = vadd.f32 %v404, %v405
      %v407 = vrot.slane %v406, 1
      %v408 = vadd.f32 %v406, %v407
      %v409 = vmul.f32 %v401, %v384
      %v410 = vmul.f32 %v408, %v384
      %v411 = vadd.f32 %v409, 1e-05
      %v412 = vadd.f32 %v410, 1e-05
      %v413 = vrsqrt.pop %v411
      %v414 = vrsqrt.pop %v412
      %v415 = vmul.f32 %v387, %v413
      %v416 = vmul.f32 %v388, %v414
      %v417 = vmul.f32 %v389, %v413
      %v418 = vmul.f32 %v390, %v414
      %420 = vset.pattern.permute.xlu0 0
      %421 = vperm.xlu0 %420, %v366
      %v422 = vpop.permute.xlu0 %421
      %425 = vset.pattern.permute.xlu0 0
      %426 = vperm.xlu0 %425, %v367
      %v427 = vpop.permute.xlu0 %426
      %v429 = vmul.f32 %v415, %v422
      %v430 = vmul.f32 %v416, %v422
      %v431 = vmul.f32 %v417, %v427
      %v432 = vmul.f32 %v418, %v427
      %434 = vset.pattern.permute.xlu0 0
      %435 = vperm.xlu0 %434, %v368
      %v436 = vpop.permute.xlu0 %435
      %439 = vset.pattern.permute.xlu0 0
      %440 = vperm.xlu0 %439, %v369
      %v441 = vpop.permute.xlu0 %440
      %v443 = vadd.f32 %v429, %v436
      %v444 = vadd.f32 %v430, %v436
      %v445 = vadd.f32 %v431, %v441
      %v446 = vadd.f32 %v432, %v441
      %v447 = vld [vmem:[%s8] sm:$0xf]
      %452 = vrot.lane.b32.xlu0 %v443, 17
      %v453 = vpop.permute.xlu0 %452
      %454 = vrot.lane.b32.xlu0 %v444, 17
      %v455 = vpop.permute.xlu0 %454
      %456 = vrot.lane.b32.xlu0 %v445, 17
      %v457 = vpop.permute.xlu0 %456
      %458 = vrot.lane.b32.xlu0 %v446, 17
      %v459 = vpop.permute.xlu0 %458
      %vm460 = vcmask 138240
      %v461 = vsel %vm460, %v453, %v455
      %v462 = vsel %vm460, %v457, %v459
      %v469 = vsel %vm460, 0.0, %v453
      %v470 = vsel %vm460, 0.0, %v457
      %v471 = vsel %vm460, %v455, 0.0
      %v472 = vsel %vm460, %v459, 0.0
      %v474 = vlaneseq
      %v475 = vshrl.u32 %v474, 7
      %v476 = vsub.s32 0, %v475
      %v477 = vrot.slane %v447, %v476
      %v478 = vlaneseq
      %v479 = vshrl.u32 %v478, 7
      %v480 = vsub.s32 2, %v479
      %v481 = vrot.slane %v447, %v480
      %v484 = vlaneseq
      %v485 = vshrl.u32 %v484, 7
      %v486 = vsub.s32 0, %v485
      %v487 = vrot.slane %v477, %v486
      %v488 = vlaneseq
      %v489 = vshrl.u32 %v488, 7
      %v490 = vsub.s32 0, %v489
      %v491 = vrot.slane %v481, %v490
      %v492 = vlaneseq
      %v493 = vshrl.u32 %v492, 7
      %v494 = vsub.s32 1, %v493
      %v495 = vrot.slane %v447, %v494
      %v496 = vlaneseq
      %v497 = vshrl.u32 %v496, 7
      %v498 = vsub.s32 3, %v497
      %v499 = vrot.slane %v447, %v498
      %v502 = vlaneseq
      %v503 = vshrl.u32 %v502, 7
      %v504 = vsub.s32 1, %v503
      %v505 = vrot.slane %v495, %v504
      %v506 = vlaneseq
      %v507 = vshrl.u32 %v506, 7
      %v508 = vsub.s32 1, %v507
      %v509 = vrot.slane %v499, %v508
      %v510 = vmul.f32 %v469, %v487
      %v511 = vmul.f32 %v461, %v491
      %v512 = vmul.f32 %v470, %v487
      %v513 = vmul.f32 %v462, %v491
      %v514 = vpack.c.bf16 %v512, %v510
      %v515 = vpack.c.bf16 %v513, %v511
      %v516 = vpack.c.bf16 %v470, %v469
      %v517 = vpack.c.bf16 %v462, %v461
      %v518 = vpack.c.bf16 %v472, %v471
      %521 = vrot.lane.b32.xlu0 %v505, 2
      %v522 = vpop.permute.xlu0 %521
      %523 = vrot.lane.b32.xlu0 %v509, 2
      %v524 = vpop.permute.xlu0 %523
      %vm525 = vcmask 15360
      %v526 = vsel %vm525, %v522, %v524
      %v530 = vmul.f32 %v469, %v522
      %v531 = vmul.f32 %v461, %v526
      %v532 = vmul.f32 %v471, %v524
      %v533 = vmul.f32 %v470, %v522
      %v534 = vmul.f32 %v462, %v526
      %v535 = vmul.f32 %v472, %v524
      %v536 = vpack.c.bf16 %v533, %v530
      %v537 = vpack.c.bf16 %v534, %v531
      %v538 = vpack.c.bf16 %v535, %v532
      %541 = vrot.lane.b32.xlu0 %v487, 16
      %v542 = vpop.permute.xlu0 %541
      %543 = vrot.lane.b32.xlu0 %v491, 16
      %v544 = vpop.permute.xlu0 %543
      %vm545 = vcmask 130048
      %v546 = vsel %vm545, %v542, %v544
      %v550 = vmul.f32 %v469, %v542
      %v551 = vmul.f32 %v461, %v546
      %v552 = vmul.f32 %v471, %v544
      %v553 = vmul.f32 %v470, %v542
      %v554 = vmul.f32 %v462, %v546
      %v555 = vmul.f32 %v472, %v544
      %v556 = vpack.c.bf16 %v553, %v550
      %v557 = vpack.c.bf16 %v554, %v551
      %v558 = vpack.c.bf16 %v555, %v552
      %v559 = vpack.c.bf16 %v445, %v443
      %v560 = vpack.c.bf16 %v446, %v444
      %561 = vrot.lane.b32.xlu0 %v505, 18
      %v562 = vpop.permute.xlu0 %561
      %563 = vrot.lane.b32.xlu0 %v509, 18
      %v564 = vpop.permute.xlu0 %563
      %vm565 = vcmask 146432
      %v566 = vsel %vm565, %v562, %v564
      %v570 = vmul.f32 %v469, %v562
      %v571 = vmul.f32 %v461, %v566
      %v572 = vmul.f32 %v471, %v564
      %v573 = vmul.f32 %v470, %v562
      %v574 = vmul.f32 %v462, %v566
      %v575 = vmul.f32 %v472, %v564
      %v576 = vpack.c.bf16 %v573, %v570
      %v577 = vpack.c.bf16 %v574, %v571
      %v578 = vpack.c.bf16 %v575, %v572
      %579 = vrot.lane.b32.xlu0 %v487, 32
      %v580 = vpop.permute.xlu0 %579
      %581 = vrot.lane.b32.xlu0 %v491, 32
      %v582 = vpop.permute.xlu0 %581
      %vm583 = vcmask 261120
      %v584 = vsel %vm583, %v580, %v582
      %v588 = vmul.f32 %v469, %v580
      %v589 = vmul.f32 %v461, %v584
      %v590 = vmul.f32 %v471, %v582
      %v591 = vmul.f32 %v470, %v580
      %v592 = vmul.f32 %v462, %v584
      %v593 = vmul.f32 %v472, %v582
      %v594 = vpack.c.bf16 %v591, %v588
      %v595 = vpack.c.bf16 %v592, %v589
      %v596 = vpack.c.bf16 %v593, %v590
      %597 = vrot.lane.b32.xlu0 %v505, 34
      %v598 = vpop.permute.xlu0 %597
      %599 = vrot.lane.b32.xlu0 %v509, 34
      %v600 = vpop.permute.xlu0 %599
      %vm601 = vcmask 277504
      %v602 = vsel %vm601, %v598, %v600
      %v606 = vmul.f32 %v469, %v598
      %v607 = vmul.f32 %v461, %v602
      %v608 = vmul.f32 %v471, %v600
      %v609 = vmul.f32 %v470, %v598
      %v610 = vmul.f32 %v462, %v602
      %v611 = vmul.f32 %v472, %v600
      %v612 = vpack.c.bf16 %v609, %v606
      %v613 = vpack.c.bf16 %v610, %v607
      %v614 = vpack.c.bf16 %v611, %v608
      %618 = vrot.lane.b32.xlu0 %v516, 127
      %v619 = vpop.permute.xlu0 %618
      %620 = vrot.lane.b32.xlu0 %v517, 127
      %v621 = vpop.permute.xlu0 %620
      %622 = vrot.lane.b32.xlu0 %v518, 127
      %v623 = vpop.permute.xlu0 %622
      %vm624 = vcmask 1039360
      %v625 = vsel %vm624, %v619, %v621
      %v626 = vsel %vm624, %v621, %v623
      %632 = vrot.lane.b32.xlu0 %v536, 126
      %v633 = vpop.permute.xlu0 %632
      %634 = vrot.lane.b32.xlu0 %v537, 126
      %v635 = vpop.permute.xlu0 %634
      %636 = vrot.lane.b32.xlu0 %v538, 126
      %v637 = vpop.permute.xlu0 %636
      %vm638 = vcmask 1031168
      %v639 = vsel %vm638, %v633, %v635
      %v640 = vsel %vm638, %v635, %v637
      %646 = vrot.lane.b32.xlu0 %v556, 112
      %v647 = vpop.permute.xlu0 %646
      %648 = vrot.lane.b32.xlu0 %v557, 112
      %v649 = vpop.permute.xlu0 %648
      %650 = vrot.lane.b32.xlu0 %v558, 112
      %v651 = vpop.permute.xlu0 %650
      %vm652 = vcmask 916480
      %v653 = vsel %vm652, %v647, %v649
      %v654 = vsel %vm652, %v649, %v651
      %660 = vrot.lane.b32.xlu0 %v576, 110
      %v661 = vpop.permute.xlu0 %660
      %662 = vrot.lane.b32.xlu0 %v577, 110
      %v663 = vpop.permute.xlu0 %662
      %664 = vrot.lane.b32.xlu0 %v578, 110
      %v665 = vpop.permute.xlu0 %664
      %vm666 = vcmask 900096
      %v667 = vsel %vm666, %v661, %v663
      %v668 = vsel %vm666, %v663, %v665
      %674 = vrot.lane.b32.xlu0 %v594, 96
      %v675 = vpop.permute.xlu0 %674
      %676 = vrot.lane.b32.xlu0 %v595, 96
      %v677 = vpop.permute.xlu0 %676
      %678 = vrot.lane.b32.xlu0 %v596, 96
      %v679 = vpop.permute.xlu0 %678
      %vm680 = vcmask 785408
      %v681 = vsel %vm680, %v675, %v677
      %v682 = vsel %vm680, %v677, %v679
      %685 = vrot.lane.b32.xlu0 %v516, 95
      %v686 = vpop.permute.xlu0 %685
      %687 = vrot.lane.b32.xlu0 %v517, 95
      %v688 = vpop.permute.xlu0 %687
      %689 = vrot.lane.b32.xlu0 %v518, 95
      %v690 = vpop.permute.xlu0 %689
      %vm691 = vcmask 777216
      %v692 = vsel %vm691, %v686, %v688
      %v693 = vsel %vm691, %v688, %v690
      %699 = vrot.lane.b32.xlu0 %v612, 94
      %v700 = vpop.permute.xlu0 %699
      %701 = vrot.lane.b32.xlu0 %v613, 94
      %v702 = vpop.permute.xlu0 %701
      %703 = vrot.lane.b32.xlu0 %v614, 94
      %v704 = vpop.permute.xlu0 %703
      %vm705 = vcmask 769024
      %v706 = vsel %vm705, %v700, %v702
      %v707 = vsel %vm705, %v702, %v704
      %v710 = vld [vmem:[%s4] sm:$0xff]
      %v711 = vld [vmem:[%s4 + $0x8] sm:$0xff]
      %v712 = vld [vmem:[%s4 + $0x10] sm:$0xff]
      %v713 = vld [vmem:[%s4 + $0x18] sm:$0xff]
      %v714 = vld [vmem:[%s4 + $0x20] sm:$0xff]
      %v715 = vld [vmem:[%s4 + $0x28] sm:$0xff]
      %v722 = vunpack.c.l.b16 %v710
      %v723 = vunpack.c.h.b16 %v710
      %v724 = vunpack.c.l.b16 %v711
      %v725 = vunpack.c.h.b16 %v711
      %v726 = vunpack.c.l.b16 %v712
      %v727 = vunpack.c.h.b16 %v712
      %v728 = vunpack.c.l.b16 %v713
      %v729 = vunpack.c.h.b16 %v713
      %v730 = vunpack.c.l.b16 %v714
      %v731 = vunpack.c.h.b16 %v714
      %v732 = vunpack.c.l.b16 %v715
      %v733 = vunpack.c.h.b16 %v715
      %v734 = vpack.c.b16 %v724, %v722
      %v735 = vpack.c.b16 %v725, %v723
      %v736 = vpack.c.b16 %v728, %v726
      %v737 = vpack.c.b16 %v729, %v727
      %v738 = vpack.c.b16 %v732, %v730
      %v739 = vpack.c.b16 %v733, %v731
      %v744 = vsel %vm545, %v735, 0
      %v747 = vsel %vm545, %v737, 0
      %v750 = vsel %vm545, %v739, 0
      %752 = vmatprep.subr.bf16.mxu0 %v515
      %753 = vmatpush1.bf16.msra.mxu0 %v514
      %754 = vmatprep.subr.bf16.mxu0 %v626
      %755 = vmatpush1.bf16.msra.mxu0 %v625
      %756 = vmatprep.subr.bf16.mxu0 %v640
      %757 = vmatpush1.bf16.msra.mxu0 %v639
      %758 = vmatprep.subr.bf16.mxu0 %v654
      %759 = vmatpush1.bf16.msra.mxu0 %v653
      %760 = vmatprep.subr.bf16.mxu0 %v560
      %761 = vmatpush1.bf16.msra.mxu0 %v559
      %762 = vmatprep.subr.bf16.mxu0 %v668
      %763 = vmatpush1.bf16.msra.mxu0 %v667
      %764 = vmatprep.subr.bf16.mxu0 %v682
      %765 = vmatpush1.bf16.msra.mxu0 %v681
      %766 = vmatprep.subr.bf16.mxu0 %v693
      %767 = vmatpush1.bf16.msra.mxu0 %v692
      %768 = vmatprep.subr.bf16.mxu0 %v707
      %769 = vmatpush1.bf16.msra.mxu0 %v706
      %770 = vmatprep.subr.bf16.mxu0 0
      %771 = vmatpush1.bf16.msra.mxu0 0
      %772 = vmatprep.subr.bf16.mxu0 0
      %773 = vmatpush1.bf16.msra.mxu0 0
      %774 = vmatprep.subr.bf16.mxu0 0
      %775 = vmatpush1.bf16.msra.mxu0 0
      %776 = vmatprep.subr.bf16.mxu0 0
      %777 = vmatpush1.bf16.msra.mxu0 0
      %778 = vmatprep.subr.bf16.mxu0 0
      %779 = vmatpush1.bf16.msra.mxu0 0
      %780 = vmatprep.subr.bf16.mxu0 0
      %781 = vmatpush1.bf16.msra.mxu0 0
      %782 = vmatprep.subr.bf16.mxu0 0
      %783 = vmatpush1.bf16.msra.mxu0 0
      %784 = vmatprep.mubr.bf16.mxu0 %v744
      %785 = vmatmul.mubr.bf16.gmra.mrb[0].mxu0 %v734
      %v786 = vpop.f32.mrb[0].mxu0
      %v787 = vadd.f32 0.0, %v786
      %v788 = vpop.f32.mrb[0].mxu0
      %v789 = vadd.f32 0.0, %v788
      %v790 = vpop.f32.mrb[0].mxu0
      %v791 = vadd.f32 0.0, %v790
      %v792 = vpop.f32.mrb[0].mxu0
      %v793 = vadd.f32 0.0, %v792
      %794 = vmatprep.mubr.bf16.mxu0 %v747
      %795 = vmatmul.mubr.bf16.gmra.mrb[0].mxu0 %v736
      %v796 = vpop.f32.mrb[0].mxu0
      %v797 = vadd.f32 0.0, %v796
      %v798 = vpop.f32.mrb[0].mxu0
      %v799 = vadd.f32 0.0, %v798
      %v800 = vpop.f32.mrb[0].mxu0
      %v801 = vadd.f32 0.0, %v800
      %v802 = vpop.f32.mrb[0].mxu0
      %v803 = vadd.f32 0.0, %v802
      %804 = vmatprep.mubr.bf16.mxu0 %v750
      %805 = vmatmul.mubr.bf16.gmra.mrb[0].mxu0 %v738
      %v806 = vpop.f32.mrb[0].mxu0
      %v807 = vadd.f32 0.0, %v806
      %v808 = vpop.f32.mrb[0].mxu0
      %v809 = vadd.f32 0.0, %v808
      %v810 = vpop.f32.mrb[0].mxu0
      %v811 = vadd.f32 0.0, %v810
      %v812 = vpop.f32.mrb[0].mxu0
      %v813 = vadd.f32 0.0, %v812
      %814 = vdwg.mxu0
      %v815 = vmul.f32 %v787, %v787
      %v816 = vmul.f32 %v789, %v789
      %v817 = vmul.f32 %v791, %v791
      %v818 = vmul.f32 %v793, %v793
      %v819 = vadd.f32 %v815, %v816
      %820 = vadd.xlane.f32.xlu0 %v819
      %v821 = vpop.xlane.xlu0 %820
      %v822 = vadd.f32 %v817, %v818
      %823 = vadd.xlane.f32.xlu0 %v822
      %v824 = vpop.xlane.xlu0 %823
      %v825 = vrsqrt.pop %v821
      %v826 = vrsqrt.pop %v824
      %v827 = vmin.f32 %v825, 1e+12
      %v828 = vmin.f32 %v826, 1e+12
      %v829 = vmul.f32 %v787, %v827
      %v830 = vmul.f32 %v789, %v827
      %v831 = vmul.f32 %v791, %v828
      %v832 = vmul.f32 %v793, %v828
      %v833 = vld [vmem:[%s6] sm:$0xff]
      %v834 = vld [vmem:[%s6 + $0x8] sm:$0xff]
      %836 = vset.pattern.permute.xlu0 0
      %837 = vperm.xlu0 %836, %v833
      %v838 = vpop.permute.xlu0 %837
      %841 = vset.pattern.permute.xlu0 0
      %842 = vperm.xlu0 %841, %v834
      %v843 = vpop.permute.xlu0 %842
      %v845 = vmul.f32 %v829, %v838
      %v846 = vmul.f32 %v830, %v838
      %v847 = vmul.f32 %v831, %v843
      %v848 = vmul.f32 %v832, %v843
      %v849 = vmul.f32 %v797, %v797
      %v850 = vmul.f32 %v799, %v799
      %v851 = vmul.f32 %v801, %v801
      %v852 = vmul.f32 %v803, %v803
      %v853 = vadd.f32 %v849, %v850
      %854 = vadd.xlane.f32.xlu0 %v853
      %v855 = vpop.xlane.xlu0 %854
      %v856 = vadd.f32 %v851, %v852
      %857 = vadd.xlane.f32.xlu0 %v856
      %v858 = vpop.xlane.xlu0 %857
      %v859 = vrsqrt.pop %v855
      %v860 = vrsqrt.pop %v858
      %v861 = vmin.f32 %v859, 1e+12
      %v862 = vmin.f32 %v860, 1e+12
      %v863 = vmul.f32 %v797, %v861
      %v864 = vmul.f32 %v799, %v861
      %v865 = vmul.f32 %v801, %v862
      %v866 = vmul.f32 %v803, %v862
      %v867 = vpack.c.bf16 %v847, %v845
      %v868 = vpack.c.bf16 %v848, %v846
      %v869 = vpack.c.bf16 %v865, %v863
      %v870 = vpack.c.bf16 %v866, %v864
      %v871 = vld [vmem:[%s7] sm:$0xff]
      %v872 = vld [vmem:[%s7 + $0x8] sm:$0xff]
      %873 = vmatprep.subr.bf16.mxu0 %v870
      %874 = vmatpush1.bf16.xpose.msra.mxu0 %v869
      %875 = vmatprep.subr.bf16.mxu0 0
      %876 = vmatpush1.bf16.xpose.msra.mxu0 0
      %877 = vmatprep.subr.bf16.mxu0 0
      %878 = vmatpush1.bf16.xpose.msra.mxu0 0
      %879 = vmatprep.subr.bf16.mxu0 0
      %880 = vmatpush1.bf16.xpose.msra.mxu0 0
      %881 = vmatprep.subr.bf16.mxu0 0
      %882 = vmatpush1.bf16.xpose.msra.mxu0 0
      %883 = vmatprep.subr.bf16.mxu0 0
      %884 = vmatpush1.bf16.xpose.msra.mxu0 0
      %885 = vmatprep.subr.bf16.mxu0 0
      %886 = vmatpush1.bf16.xpose.msra.mxu0 0
      %887 = vmatprep.subr.bf16.mxu0 0
      %888 = vmatpush1.bf16.xpose.msra.mxu0 0
      %889 = vmatprep.subr.bf16.mxu0 0
      %890 = vmatpush1.bf16.xpose.msra.mxu0 0
      %891 = vmatprep.subr.bf16.mxu0 0
      %892 = vmatpush1.bf16.xpose.msra.mxu0 0
      %893 = vmatprep.subr.bf16.mxu0 0
      %894 = vmatpush1.bf16.xpose.msra.mxu0 0
      %895 = vmatprep.subr.bf16.mxu0 0
      %896 = vmatpush1.bf16.xpose.msra.mxu0 0
      %897 = vmatprep.subr.bf16.mxu0 0
      %898 = vmatpush1.bf16.xpose.msra.mxu0 0
      %899 = vmatprep.subr.bf16.mxu0 0
      %900 = vmatpush1.bf16.xpose.msra.mxu0 0
      %901 = vmatprep.subr.bf16.mxu0 0
      %902 = vmatpush1.bf16.xpose.msra.mxu0 0
      %903 = vmatprep.subr.bf16.mxu0 0
      %904 = vmatpush1.bf16.xpose.msra.mxu0 0
      %905 = vmatprep.mubr.bf16.mxu0 %v868
      %906 = vmatmul.mubr.bf16.gmra.mrb[0].mxu0 %v867
      %v907 = vpop.f32.mrb[0].mxu0
      %v908 = vadd.f32 %v871, %v907
      %v909 = vpop.f32.mrb[0].mxu0
      %v910 = vpop.f32.mrb[0].mxu0
      %v911 = vadd.f32 %v872, %v910
      %v912 = vpop.f32.mrb[0].mxu0
      %913 = vdwg.mxu0
      %v914 = vsel %vm545, %v908, -inf
      %915 = vmax.xlane.f32.xlu0 %v914
      %v916 = vpop.xlane.xlu0 %915
      %v917 = vsel %vm545, %v911, -inf
      %918 = vmax.xlane.f32.xlu0 %v917
      %v919 = vpop.xlane.xlu0 %918
      %v920 = vsub.f32 %v908, %v916
      %v921 = vsub.f32 %v911, %v919
      %v922 = vmul.f32 %v920, 1.442695
      %v923 = vpow.pop %v922
      %v924 = vmul.f32 %v921, 1.442695
      %v925 = vpow.pop %v924
      %v926 = vsel %vm545, %v923, 0.0
      %927 = vadd.xlane.f32.xlu0 %v926
      %v928 = vpop.xlane.xlu0 %927
      %v929 = vsel %vm545, %v925, 0.0
      %930 = vadd.xlane.f32.xlu0 %v929
      %v931 = vpop.xlane.xlu0 %930
      %v932 = vrcp.pop %v928
      %v933 = vmul.f32 %v923, %v932
      %v934 = vrcp.pop %v931
      %v935 = vmul.f32 %v925, %v934
      %v936 = vpack.c.bf16 %v935, %v933
      %v937 = vpack.c.bf16 %v811, %v807
      %v938 = vpack.c.bf16 %v813, %v809
      %v940 = vsel %vm545, %v936, 0
      %942 = vmatprep.subr.bf16.mxu0 %v938
      %943 = vmatpush1.bf16.msra.mxu0 %v937
      %944 = vmatprep.subr.bf16.mxu0 0
      %945 = vmatpush1.bf16.msra.mxu0 0
      %946 = vmatprep.subr.bf16.mxu0 0
      %947 = vmatpush1.bf16.msra.mxu0 0
      %948 = vmatprep.subr.bf16.mxu0 0
      %949 = vmatpush1.bf16.msra.mxu0 0
      %950 = vmatprep.subr.bf16.mxu0 0
      %951 = vmatpush1.bf16.msra.mxu0 0
      %952 = vmatprep.subr.bf16.mxu0 0
      %953 = vmatpush1.bf16.msra.mxu0 0
      %954 = vmatprep.subr.bf16.mxu0 0
      %955 = vmatpush1.bf16.msra.mxu0 0
      %956 = vmatprep.subr.bf16.mxu0 0
      %957 = vmatpush1.bf16.msra.mxu0 0
      %958 = vmatprep.subr.bf16.mxu0 0
      %959 = vmatpush1.bf16.msra.mxu0 0
      %960 = vmatprep.subr.bf16.mxu0 0
      %961 = vmatpush1.bf16.msra.mxu0 0
      %962 = vmatprep.subr.bf16.mxu0 0
      %963 = vmatpush1.bf16.msra.mxu0 0
      %964 = vmatprep.subr.bf16.mxu0 0
      %965 = vmatpush1.bf16.msra.mxu0 0
      %966 = vmatprep.subr.bf16.mxu0 0
      %967 = vmatpush1.bf16.msra.mxu0 0
      %968 = vmatprep.subr.bf16.mxu0 0
      %969 = vmatpush1.bf16.msra.mxu0 0
      %970 = vmatprep.subr.bf16.mxu0 0
      %971 = vmatpush1.bf16.msra.mxu0 0
      %972 = vmatprep.subr.bf16.mxu0 0
      %973 = vmatpush1.bf16.msra.mxu0 0
      %974 = vmatprep.mubr.bf16.mxu0 0
      %975 = vmatmul.mubr.bf16.gmra.mrb[0].mxu0 %v940
      %v976 = vpop.f32.mrb[0].mxu0
      %v977 = vadd.f32 0.0, %v976
      %v978 = vpop.f32.mrb[0].mxu0
      %v979 = vadd.f32 0.0, %v978
      %v980 = vpop.f32.mrb[0].mxu0
      %v981 = vadd.f32 0.0, %v980
      %v982 = vpop.f32.mrb[0].mxu0
      %v983 = vadd.f32 0.0, %v982
      %984 = vdwg.mxu0
      %v985 = vld [vmem:[%s5] sm:$0xf]
      %v986 = vld [vmem:[%s5 + $0x4] sm:$0xf]
      %v987 = vpack.c.bf16 %v981, %v977
      %v988 = vpack.c.bf16 %v983, %v979
      %v991 = vunpack.c.l.b16 %v985
      %v992 = vunpack.c.l.b16 %v986
      %v993 = vpack.c.b16 %v992, %v991
      %v995 = vsel %vm545, %v993, 0
      %997 = vmatprep.subr.bf16.mxu0 %v988
      %998 = vmatpush1.bf16.msra.mxu0 %v987
      %999 = vmatprep.subr.bf16.mxu0 0
      %1000 = vmatpush1.bf16.msra.mxu0 0
      %1001 = vmatprep.subr.bf16.mxu0 0
      %1002 = vmatpush1.bf16.msra.mxu0 0
      %1003 = vmatprep.subr.bf16.mxu0 0
      %1004 = vmatpush1.bf16.msra.mxu0 0
      %1005 = vmatprep.subr.bf16.mxu0 0
      %1006 = vmatpush1.bf16.msra.mxu0 0
      %1007 = vmatprep.subr.bf16.mxu0 0
      %1008 = vmatpush1.bf16.msra.mxu0 0
      %1009 = vmatprep.subr.bf16.mxu0 0
      %1010 = vmatpush1.bf16.msra.mxu0 0
      %1011 = vmatprep.subr.bf16.mxu0 0
      %1012 = vmatpush1.bf16.msra.mxu0 0
      %1013 = vmatprep.subr.bf16.mxu0 0
      %1014 = vmatpush1.bf16.msra.mxu0 0
      %1015 = vmatprep.subr.bf16.mxu0 0
      %1016 = vmatpush1.bf16.msra.mxu0 0
      %1017 = vmatprep.subr.bf16.mxu0 0
      %1018 = vmatpush1.bf16.msra.mxu0 0
      %1019 = vmatprep.subr.bf16.mxu0 0
      %1020 = vmatpush1.bf16.msra.mxu0 0
      %1021 = vmatprep.subr.bf16.mxu0 0
      %1022 = vmatpush1.bf16.msra.mxu0 0
      %1023 = vmatprep.subr.bf16.mxu0 0
      %1024 = vmatpush1.bf16.msra.mxu0 0
      %1025 = vmatprep.subr.bf16.mxu0 0
      %1026 = vmatpush1.bf16.msra.mxu0 0
      %1027 = vmatprep.subr.bf16.mxu0 0
      %1028 = vmatpush1.bf16.msra.mxu0 0
      %1029 = vmatprep.mubr.bf16.mxu0 0
      %1030 = vmatmul.mubr.bf16.gmra.mrb[0].mxu0 %v995
      %v1031 = vpop.f32.mrb[0].mxu0
      %v1032 = vadd.f32 0.0, %v1031
      %v1033 = vpop.f32.mrb[0].mxu0
      %v1034 = vadd.f32 0.0, %v1033
      %v1035 = vpop.f32.mrb[0].mxu0
      %v1036 = vadd.f32 0.0, %v1035
      %v1037 = vpop.f32.mrb[0].mxu0
      %v1038 = vadd.f32 0.0, %v1037
      %1039 = vdwg.mxu0
      %v1040 = vadd.f32 %v362, %v1032
      %v1041 = vadd.f32 %v363, %v1034
      %v1042 = vadd.f32 %v364, %v1036
      %v1043 = vadd.f32 %v365, %v1038
      %1044 = vst [vmem:[%s352] sm:$0xff] %v1040
      %1045 = vst [vmem:[%s352 + $0x8] sm:$0xff] %v1041
      %1046 = vst [vmem:[%s352 + $0x10] sm:$0xff] %v1042
      %1047 = vst [vmem:[%s352 + $0x18] sm:$0xff] %v1043
      %p1048 = scmp.lt.s32.totalorder %s20, 1
      %s1049 = scalar_select %p1048, %s20, 1
      %s1050 = smul.addr %s1049, 4
      %s1051 = smul.addr %s1050, 8
      %s1052 = scalar_lea.vmem %s9, %s1051
      // Predicated region
      $region57: #{transformer_block_with_mask.6} parent=55 // pred_check
        %p1053 = pneg %p237
      $region58: #{transformer_block_with_mask.6} parent=55 // pred_check_branch
        %1055 = sbr.rel (%p1053) target = $region60
      $region59: #{transformer_block_with_mask.6} parent=55 // pred_region
        _
      $region60: #{transformer_block_with_mask.6} parent=55 // pred_fallthru
        _
    $region56: #{transformer_block_with_mask.6} parent=5 // pred_fallthru
      _
    %p1056 = scmp.le.s32.totalorder 2, %s15
    // Predicated region
    $region61: #{transformer_block_with_mask.6} parent=5 // pred_check
      %p1057 = pneg %p1056
    $region62: #{transformer_block_with_mask.6} parent=5 // pred_check_branch
      %1059 = sbr.rel (%p1057) target = $region64
    $region63: #{transformer_block_with_mask.6} parent=5 // pred_region
      %s1060 = ssub.s32 %s15, 2
      // Predicated region
      $region65: #{transformer_block_with_mask.6} parent=63 // pred_check
        %p1061 = pneg %p243
      $region66: #{transformer_block_with_mask.6} parent=63 // pred_check_branch
        %1063 = sbr.rel (%p1061) target = $region68
      $region67: #{transformer_block_with_mask.6} parent=63 // pred_region
        %p1064 = scmp.lt.s32.totalorder %s21, 1
        %s1065 = scalar_select %p1064, %s21, 1
        %s1066 = smul.addr %s1065, 4
        %s1067 = smul.addr %s1066, 8
        %s1068 = scalar_lea.vmem %s9, %s1067
      $region68: #{transformer_block_with_mask.6} parent=63 // pred_fallthru
        _
    $region64: #{transformer_block_with_mask.6} parent=5 // pred_fallthru
      _
  $region6: #{transformer_block_with_mask.6} parent=0 // loop_footer
    %s19 = sadd.s32 1, %s15
  $region7: #{transformer_block_with_mask.6} parent=0 // loop_footer_branch
    %14 = sbr.rel target = $region3
  $region8: #{transformer_block_with_mask.6} parent=0 // loop_exit
    _

// kernel: transformer_block_with_mask.7
$region0: #{transformer_block_with_mask.7}
  #allocation0 [shape = 'u32[]', space=smem, size = 0x4, offset = 0x4, fixed_abs, tag = 'smem constant byte address 0x4 - core index']
  #allocation1 [shape = 'u32[144,128]{1,0:T(1,128)}', space=vmem, size = 0x12000, scoped, tag = 'internal scratch']
  %s0 = inlined_call_operand.vmem [shape: f32[2,16,256], index: 0, kind: input, shape index: {}]
  %s1 = inlined_call_operand.vmem [shape: f32[16,1], index: 1, kind: input, shape index: {}]
  %s2 = inlined_call_operand.vmem [shape: f32[16,1], index: 2, kind: input, shape index: {}]
  %s3 = inlined_call_operand.vmem [shape: bf16[64,144], index: 3, kind: input, shape index: {}]
  %s4 = inlined_call_operand.vmem [shape: bf16[16,32], index: 4, kind: input, shape index: {}]
  %s5 = inlined_call_operand.vmem [shape: f32[2,256], index: 5, kind: input, shape index: {}]
  %s6 = inlined_call_operand.vmem [shape: f32[2,16,256], index: 6, kind: output, shape index: {}]
  %s7 = sld [smem:[#allocation0]]
  $region57: #{transformer_block_with_mask.7} parent=0
    _
  %s9 = ssub.s32 1, %s7
  %s10 = scalar_select 0, %s9, %s7
  loop: start=0, step=1, limit=4
  $region2: #{transformer_block_with_mask.7} parent=0 // loop_pre_header
    _
  $region3: #{transformer_block_with_mask.7} parent=0 // loop_header
    %s12 = sphi 0, %s16
    %p13 = scmp.ge.s32.totalorder %s12, 4
    %s22 = sphi 0, %s24
    %s25 = sphi 0, %s22
    %s26 = sphi 0, %s25
    %s42 = sphi 0, %s26
    %s46 = sphi 0, %s46
    %s48 = sphi 0, %s46
    %s49 = sphi 0, %s48
    %s63 = sphi 0, %s49
    %s67 = sphi 0, %s67
    %s69 = sphi 0, %s67
    %s70 = sphi 0, %s69
    %s84 = sphi 0, %s70
    %s88 = sphi 0, %s88
    %s90 = sphi 0, %s88
    %s91 = sphi 0, %s90
    %s105 = sphi 0, %s91
    %s109 = sphi 0, %s109
    %s111 = sphi 0, %s109
    %s112 = sphi 0, %s111
    %s126 = sphi 0, %s112
    %s130 = sphi 0, %s130
    %s132 = sphi 0, %s130
    %s133 = sphi 0, %s132
    %s147 = sphi 0, %s133
    %s153 = sphi 0, %s155
    %s156 = sphi 0, %s153
    %s157 = sphi 0, %s156
    %s173 = sphi 0, %s157
  $region4: #{transformer_block_with_mask.7} parent=0 // loop_header_branch
    %15 = sbr.rel (%p13) target = $region8
  $region5: #{transformer_block_with_mask.7} parent=0 // loop_body
    %s17 = ssub.s32 %s12, 1
    %s18 = ssub.s32 %s12, 2
    %s19 = sadd.s32 %s12, 1
    %s20 = ssub.s32 %s12, %s19
    %p21 = scmp.eq.s32.totalorder %s20, 0
    %s23 = sadd.s32 %s22, 1
    %s24 = scalar_select %p21, %s22, %s23
    %p27 = pneg %p21
    %p28 = scmp.eq.s32.totalorder %s12, 1
    %p29 = por %p27, %p28
    %p30 = scmp.ne.s32.totalorder %s22, %s25
    %p31 = scmp.eq.s32.totalorder %s12, 0
    %p32 = por %p30, %p31
    %p33 = scmp.ne.s32.totalorder %s22, %s25
    %p34 = scmp.eq.s32.totalorder %s17, 1
    %p35 = por %p33, %p34
    %p36 = scmp.ne.s32.totalorder %s25, %s26
    %p37 = scmp.eq.s32.totalorder %s17, 0
    %p38 = por %p36, %p37
    %p39 = scmp.ne.s32.totalorder %s25, %s26
    %p40 = scmp.eq.s32.totalorder %s18, 1
    %p41 = por %p39, %p40
    %p43 = scmp.ne.s32.totalorder %s26, %s42
    %p44 = scmp.eq.s32.totalorder %s18, 0
    %p45 = por %p43, %p44
    %s47 = sadd.s32 %s46, 1
    %p50 = scmp.eq.s32.totalorder %s12, 1
    %p51 = scmp.ne.s32.totalorder %s46, %s48
    %p52 = scmp.eq.s32.totalorder %s12, 0
    %p53 = por %p51, %p52
    %p54 = scmp.ne.s32.totalorder %s46, %s48
    %p55 = scmp.eq.s32.totalorder %s17, 1
    %p56 = por %p54, %p55
    %p57 = scmp.ne.s32.totalorder %s48, %s49
    %p58 = scmp.eq.s32.totalorder %s17, 0
    %p59 = por %p57, %p58
    %p60 = scmp.ne.s32.totalorder %s48, %s49
    %p61 = scmp.eq.s32.totalorder %s18, 1
    %p62 = por %p60, %p61
    %p64 = scmp.ne.s32.totalorder %s49, %s63
    %p65 = scmp.eq.s32.totalorder %s18, 0
    %p66 = por %p64, %p65
    %s68 = sadd.s32 %s67, 1
    %p71 = scmp.eq.s32.totalorder %s12, 1
    %p72 = scmp.ne.s32.totalorder %s67, %s69
    %p73 = scmp.eq.s32.totalorder %s12, 0
    %p74 = por %p72, %p73
    %p75 = scmp.ne.s32.totalorder %s67, %s69
    %p76 = scmp.eq.s32.totalorder %s17, 1
    %p77 = por %p75, %p76
    %p78 = scmp.ne.s32.totalorder %s69, %s70
    %p79 = scmp.eq.s32.totalorder %s17, 0
    %p80 = por %p78, %p79
    %p81 = scmp.ne.s32.totalorder %s69, %s70
    %p82 = scmp.eq.s32.totalorder %s18, 1
    %p83 = por %p81, %p82
    %p85 = scmp.ne.s32.totalorder %s70, %s84
    %p86 = scmp.eq.s32.totalorder %s18, 0
    %p87 = por %p85, %p86
    %s89 = sadd.s32 %s88, 1
    %p92 = scmp.eq.s32.totalorder %s12, 1
    %p93 = scmp.ne.s32.totalorder %s88, %s90
    %p94 = scmp.eq.s32.totalorder %s12, 0
    %p95 = por %p93, %p94
    %p96 = scmp.ne.s32.totalorder %s88, %s90
    %p97 = scmp.eq.s32.totalorder %s17, 1
    %p98 = por %p96, %p97
    %p99 = scmp.ne.s32.totalorder %s90, %s91
    %p100 = scmp.eq.s32.totalorder %s17, 0
    %p101 = por %p99, %p100
    %p102 = scmp.ne.s32.totalorder %s90, %s91
    %p103 = scmp.eq.s32.totalorder %s18, 1
    %p104 = por %p102, %p103
    %p106 = scmp.ne.s32.totalorder %s91, %s105
    %p107 = scmp.eq.s32.totalorder %s18, 0
    %p108 = por %p106, %p107
    %s110 = sadd.s32 %s109, 1
    %p113 = scmp.eq.s32.totalorder %s12, 1
    %p114 = scmp.ne.s32.totalorder %s109, %s111
    %p115 = scmp.eq.s32.totalorder %s12, 0
    %p116 = por %p114, %p115
    %p117 = scmp.ne.s32.totalorder %s109, %s111
    %p118 = scmp.eq.s32.totalorder %s17, 1
    %p119 = por %p117, %p118
    %p120 = scmp.ne.s32.totalorder %s111, %s112
    %p121 = scmp.eq.s32.totalorder %s17, 0
    %p122 = por %p120, %p121
    %p123 = scmp.ne.s32.totalorder %s111, %s112
    %p124 = scmp.eq.s32.totalorder %s18, 1
    %p125 = por %p123, %p124
    %p127 = scmp.ne.s32.totalorder %s112, %s126
    %p128 = scmp.eq.s32.totalorder %s18, 0
    %p129 = por %p127, %p128
    %s131 = sadd.s32 %s130, 1
    %p134 = scmp.eq.s32.totalorder %s12, 1
    %p135 = scmp.ne.s32.totalorder %s130, %s132
    %p136 = scmp.eq.s32.totalorder %s12, 0
    %p137 = por %p135, %p136
    %p138 = scmp.ne.s32.totalorder %s130, %s132
    %p139 = scmp.eq.s32.totalorder %s17, 1
    %p140 = por %p138, %p139
    %p141 = scmp.ne.s32.totalorder %s132, %s133
    %p142 = scmp.eq.s32.totalorder %s17, 0
    %p143 = por %p141, %p142
    %p144 = scmp.ne.s32.totalorder %s132, %s133
    %p145 = scmp.eq.s32.totalorder %s18, 1
    %p146 = por %p144, %p145
    %p148 = scmp.ne.s32.totalorder %s133, %s147
    %p149 = scmp.eq.s32.totalorder %s18, 0
    %p150 = por %p148, %p149
    %s151 = ssub.s32 %s12, %s19
    %p152 = scmp.eq.s32.totalorder %s151, 0
    %s154 = sadd.s32 %s153, 1
    %s155 = scalar_select %p152, %s153, %s154
    %p158 = pneg %p152
    %p159 = scmp.eq.s32.totalorder %s12, 1
    %p160 = por %p158, %p159
    %p161 = scmp.ne.s32.totalorder %s153, %s156
    %p162 = scmp.eq.s32.totalorder %s12, 0
    %p163 = por %p161, %p162
    %p164 = scmp.ne.s32.totalorder %s153, %s156
    %p165 = scmp.eq.s32.totalorder %s17, 1
    %p166 = por %p164, %p165
    %p167 = scmp.ne.s32.totalorder %s156, %s157
    %p168 = scmp.eq.s32.totalorder %s17, 0
    %p169 = por %p167, %p168
    %p170 = scmp.ne.s32.totalorder %s156, %s157
    %p171 = scmp.eq.s32.totalorder %s18, 1
    %p172 = por %p170, %p171
    %p174 = scmp.ne.s32.totalorder %s157, %s173
    %p175 = scmp.eq.s32.totalorder %s18, 0
    %p176 = por %p174, %p175
    %p177 = scmp.le.s32.totalorder 1, %s12
    %p178 = scmp.lt.s32.totalorder %s12, 3
    %p179 = pnand %p177, %p178
    %p180 = pneg %p179
    // Predicated region
    $region9: #{transformer_block_with_mask.7} parent=5 // pred_check
      _
    $region10: #{transformer_block_with_mask.7} parent=5 // pred_check_branch
      %182 = sbr.rel (%p179) target = $region12
    $region11: #{transformer_block_with_mask.7} parent=5 // pred_region
      %s183 = ssub.s32 %s12, 1
      // Predicated region
      $region13: #{transformer_block_with_mask.7} parent=11 // pred_check
        %p184 = pneg %p59
      $region14: #{transformer_block_with_mask.7} parent=11 // pred_check_branch
        %186 = sbr.rel (%p184) target = $region16
      $region15: #{transformer_block_with_mask.7} parent=11 // pred_region
        _
      $region16: #{transformer_block_with_mask.7} parent=11 // pred_fallthru
        _
      // Predicated region
      $region17: #{transformer_block_with_mask.7} parent=11 // pred_check
        %p187 = pneg %p80
      $region18: #{transformer_block_with_mask.7} parent=11 // pred_check_branch
        %189 = sbr.rel (%p187) target = $region20
      $region19: #{transformer_block_with_mask.7} parent=11 // pred_region
        _
      $region20: #{transformer_block_with_mask.7} parent=11 // pred_fallthru
        _
      // Predicated region
      $region21: #{transformer_block_with_mask.7} parent=11 // pred_check
        %p190 = pneg %p101
      $region22: #{transformer_block_with_mask.7} parent=11 // pred_check_branch
        %192 = sbr.rel (%p190) target = $region24
      $region23: #{transformer_block_with_mask.7} parent=11 // pred_region
        _
      $region24: #{transformer_block_with_mask.7} parent=11 // pred_fallthru
        _
      // Predicated region
      $region25: #{transformer_block_with_mask.7} parent=11 // pred_check
        %p193 = pneg %p122
      $region26: #{transformer_block_with_mask.7} parent=11 // pred_check_branch
        %195 = sbr.rel (%p193) target = $region28
      $region27: #{transformer_block_with_mask.7} parent=11 // pred_region
        _
      $region28: #{transformer_block_with_mask.7} parent=11 // pred_fallthru
        _
      // Predicated region
      $region29: #{transformer_block_with_mask.7} parent=11 // pred_check
        %p196 = pneg %p143
      $region30: #{transformer_block_with_mask.7} parent=11 // pred_check_branch
        %198 = sbr.rel (%p196) target = $region32
      $region31: #{transformer_block_with_mask.7} parent=11 // pred_region
        _
      $region32: #{transformer_block_with_mask.7} parent=11 // pred_fallthru
        _
    $region12: #{transformer_block_with_mask.7} parent=5 // pred_fallthru
      _
    %p199 = scmp.lt.s32.totalorder %s12, 2
    // Predicated region
    $region33: #{transformer_block_with_mask.7} parent=5 // pred_check
      %p200 = pneg %p199
    $region34: #{transformer_block_with_mask.7} parent=5 // pred_check_branch
      %202 = sbr.rel (%p200) target = $region36
    $region35: #{transformer_block_with_mask.7} parent=5 // pred_region
      // Predicated region
      $region37: #{transformer_block_with_mask.7} parent=35 // pred_check
        %p203 = pneg %p32
      $region38: #{transformer_block_with_mask.7} parent=35 // pred_check_branch
        %205 = sbr.rel (%p203) target = $region40
      $region39: #{transformer_block_with_mask.7} parent=35 // pred_region
        %p206 = scmp.lt.s32.totalorder %s12, 1
        %s207 = scalar_select %p206, %s12, 1
        %s208 = smul.addr %s207, 4
        %s209 = smul.addr %s208, 8
        %s210 = scalar_lea.vmem %s0, %s209
      $region40: #{transformer_block_with_mask.7} parent=35 // pred_fallthru
        _
    $region36: #{transformer_block_with_mask.7} parent=5 // pred_fallthru
      _
    %p211 = scmp.le.s32.totalorder 1, %s12
    %p212 = scmp.lt.s32.totalorder %s12, 3
    %p213 = pnand %p211, %p212
    %p214 = pneg %p213
    // Predicated region
    $region41: #{transformer_block_with_mask.7} parent=5 // pred_check
      _
    $region42: #{transformer_block_with_mask.7} parent=5 // pred_check_branch
      %216 = sbr.rel (%p213) target = $region44
    $region43: #{transformer_block_with_mask.7} parent=5 // pred_region
      %s217 = ssub.s32 %s12, 1
      %p218 = scmp.lt.s32.totalorder %s17, 1
      %s219 = scalar_select %p218, %s17, 1
      %s220 = smul.addr %s219, 4
      %s221 = smul.addr %s220, 8
      %s222 = scalar_lea.vmem %s0, %s221
      %p223 = pneg %p38
      %p224 = pneg %p35
      %p225 = pneg %p59
      %p226 = pneg %p56
      %p227 = pneg %p80
      %p228 = pneg %p77
      %p229 = pneg %p101
      %p230 = pneg %p98
      %p231 = pneg %p122
      %p232 = pneg %p119
      %p233 = pneg %p143
      %p234 = pneg %p140
      %p235 = pneg %p169
      %p236 = pneg %p166
      %p237 = scmp.lt.s32.totalorder %s17, 1
      %s238 = scalar_select %p237, %s17, 1
      %s239 = smul.addr %s238, 4
      %s240 = smul.addr %s239, 8
      %s241 = scalar_lea.vmem %s6, %s240
      %p242 = scmp.lt.s32.totalorder %s17, 1
      %s243 = scalar_select %p242, %s17, 1
      %s244 = smul.addr %s243, 4
      %s245 = smul.addr %s244, 8
      %s246 = scalar_lea.vmem %s0, %s245
      %p247 = scmp.lt.s32.totalorder %s17, 1
      %s248 = scalar_select %p247, %s17, 1
      %s249 = smul.addr %s248, 4
      %s250 = smul.addr %s249, 8
      %s251 = scalar_lea.vmem %s6, %s250
      %v253 = vld [vmem:[%s246] sm:$0xff]
      %v254 = vld [vmem:[%s246 + $0x8] sm:$0xff]
      %v255 = vld [vmem:[%s246 + $0x10] sm:$0xff]
      %v256 = vld [vmem:[%s246 + $0x18] sm:$0xff]
      %v257 = vld [vmem:[%s1] sm:$0xff]
      %v258 = vld [vmem:[%s1 + $0x8] sm:$0xff]
      %v259 = vld [vmem:[%s2] sm:$0xff]
      %v260 = vld [vmem:[%s2 + $0x8] sm:$0xff]
      %v261 = vadd.f32 %v253, %v255
      %v262 = vrot.slane %v261, 4
      %v263 = vadd.f32 %v261, %v262
      %v264 = vrot.slane %v263, 2
      %v265 = vadd.f32 %v263, %v264
      %v266 = vrot.slane %v265, 1
      %v267 = vadd.f32 %v265, %v266
      %v268 = vadd.f32 %v254, %v256
      %v269 = vrot.slane %v268, 4
      %v270 = vadd.f32 %v268, %v269
      %v271 = vrot.slane %v270, 2
      %v272 = vadd.f32 %v270, %v271
      %v273 = vrot.slane %v272, 1
      %v274 = vadd.f32 %v272, %v273
      %v275 = vrcp.pop 16.0
      %v276 = vmul.f32 %v267, %v275
      %v277 = vmul.f32 %v274, %v275
      %v278 = vsub.f32 %v253, %v276
      %v279 = vsub.f32 %v254, %v277
      %v280 = vsub.f32 %v255, %v276
      %v281 = vsub.f32 %v256, %v277
      %v282 = vmul.f32 %v278, %v278
      %v283 = vmul.f32 %v279, %v279
      %v284 = vmul.f32 %v280, %v280
      %v285 = vmul.f32 %v281, %v281
      %v286 = vadd.f32 %v282, %v284
      %v287 = vrot.slane %v286, 4
      %v288 = vadd.f32 %v286, %v287
      %v289 = vrot.slane %v288, 2
      %v290 = vadd.f32 %v288, %v289
      %v291 = vrot.slane %v290, 1
      %v292 = vadd.f32 %v290, %v291
      %v293 = vadd.f32 %v283, %v285
      %v294 = vrot.slane %v293, 4
      %v295 = vadd.f32 %v293, %v294
      %v296 = vrot.slane %v295, 2
      %v297 = vadd.f32 %v295, %v296
      %v298 = vrot.slane %v297, 1
      %v299 = vadd.f32 %v297, %v298
      %v300 = vmul.f32 %v292, %v275
      %v301 = vmul.f32 %v299, %v275
      %v302 = vadd.f32 %v300, 1e-05
      %v303 = vadd.f32 %v301, 1e-05
      %v304 = vrsqrt.pop %v302
      %v305 = vrsqrt.pop %v303
      %v306 = vmul.f32 %v278, %v304
      %v307 = vmul.f32 %v279, %v305
      %v308 = vmul.f32 %v280, %v304
      %v309 = vmul.f32 %v281, %v305
      %311 = vset.pattern.permute.xlu0 0
      %312 = vperm.xlu0 %311, %v257
      %v313 = vpop.permute.xlu0 %312
      %316 = vset.pattern.permute.xlu0 0
      %317 = vperm.xlu0 %316, %v258
      %v318 = vpop.permute.xlu0 %317
      %v320 = vmul.f32 %v306, %v313
      %v321 = vmul.f32 %v307, %v313
      %v322 = vmul.f32 %v308, %v318
      %v323 = vmul.f32 %v309, %v318
      %325 = vset.pattern.permute.xlu0 0
      %326 = vperm.xlu0 %325, %v259
      %v327 = vpop.permute.xlu0 %326
      %330 = vset.pattern.permute.xlu0 0
      %331 = vperm.xlu0 %330, %v260
      %v332 = vpop.permute.xlu0 %331
      %v334 = vadd.f32 %v320, %v327
      %v335 = vadd.f32 %v321, %v327
      %v336 = vadd.f32 %v322, %v332
      %v337 = vadd.f32 %v323, %v332
      %v338 = vld [vmem:[%s5] sm:$0xf]
      %343 = vrot.lane.b32.xlu0 %v334, 17
      %v344 = vpop.permute.xlu0 %343
      %345 = vrot.lane.b32.xlu0 %v335, 17
      %v346 = vpop.permute.xlu0 %345
      %347 = vrot.lane.b32.xlu0 %v336, 17
      %v348 = vpop.permute.xlu0 %347
      %349 = vrot.lane.b32.xlu0 %v337, 17
      %v350 = vpop.permute.xlu0 %349
      %vm351 = vcmask 138240
      %v352 = vsel %vm351, %v344, %v346
      %v353 = vsel %vm351, %v348, %v350
      %v360 = vsel %vm351, 0.0, %v344
      %v361 = vsel %vm351, 0.0, %v348
      %v362 = vsel %vm351, %v346, 0.0
      %v363 = vsel %vm351, %v350, 0.0
      %v365 = vlaneseq
      %v366 = vshrl.u32 %v365, 7
      %v367 = vsub.s32 0, %v366
      %v368 = vrot.slane %v338, %v367
      %v369 = vlaneseq
      %v370 = vshrl.u32 %v369, 7
      %v371 = vsub.s32 2, %v370
      %v372 = vrot.slane %v338, %v371
      %v375 = vlaneseq
      %v376 = vshrl.u32 %v375, 7
      %v377 = vsub.s32 0, %v376
      %v378 = vrot.slane %v368, %v377
      %v379 = vlaneseq
      %v380 = vshrl.u32 %v379, 7
      %v381 = vsub.s32 0, %v380
      %v382 = vrot.slane %v372, %v381
      %v383 = vlaneseq
      %v384 = vshrl.u32 %v383, 7
      %v385 = vsub.s32 1, %v384
      %v386 = vrot.slane %v338, %v385
      %v387 = vlaneseq
      %v388 = vshrl.u32 %v387, 7
      %v389 = vsub.s32 3, %v388
      %v390 = vrot.slane %v338, %v389
      %v393 = vlaneseq
      %v394 = vshrl.u32 %v393, 7
      %v395 = vsub.s32 1, %v394
      %v396 = vrot.slane %v386, %v395
      %v397 = vlaneseq
      %v398 = vshrl.u32 %v397, 7
      %v399 = vsub.s32 1, %v398
      %v400 = vrot.slane %v390, %v399
      %v401 = vmul.f32 %v360, %v378
      %v402 = vmul.f32 %v352, %v382
      %v403 = vmul.f32 %v361, %v378
      %v404 = vmul.f32 %v353, %v382
      %v405 = vpack.c.bf16 %v403, %v401
      %v406 = vpack.c.bf16 %v404, %v402
      %v407 = vpack.c.bf16 %v361, %v360
      %v408 = vpack.c.bf16 %v353, %v352
      %v409 = vpack.c.bf16 %v363, %v362
      %412 = vrot.lane.b32.xlu0 %v396, 2
      %v413 = vpop.permute.xlu0 %412
      %414 = vrot.lane.b32.xlu0 %v400, 2
      %v415 = vpop.permute.xlu0 %414
      %vm416 = vcmask 15360
      %v417 = vsel %vm416, %v413, %v415
      %v421 = vmul.f32 %v360, %v413
      %v422 = vmul.f32 %v352, %v417
      %v423 = vmul.f32 %v362, %v415
      %v424 = vmul.f32 %v361, %v413
      %v425 = vmul.f32 %v353, %v417
      %v426 = vmul.f32 %v363, %v415
      %v427 = vpack.c.bf16 %v424, %v421
      %v428 = vpack.c.bf16 %v425, %v422
      %v429 = vpack.c.bf16 %v426, %v423
      %432 = vrot.lane.b32.xlu0 %v378, 16
      %v433 = vpop.permute.xlu0 %432
      %434 = vrot.lane.b32.xlu0 %v382, 16
      %v435 = vpop.permute.xlu0 %434
      %vm436 = vcmask 130048
      %v437 = vsel %vm436, %v433, %v435
      %v441 = vmul.f32 %v360, %v433
      %v442 = vmul.f32 %v352, %v437
      %v443 = vmul.f32 %v362, %v435
      %v444 = vmul.f32 %v361, %v433
      %v445 = vmul.f32 %v353, %v437
      %v446 = vmul.f32 %v363, %v435
      %v447 = vpack.c.bf16 %v444, %v441
      %v448 = vpack.c.bf16 %v445, %v442
      %v449 = vpack.c.bf16 %v446, %v443
      %v450 = vpack.c.bf16 %v336, %v334
      %v451 = vpack.c.bf16 %v337, %v335
      %452 = vrot.lane.b32.xlu0 %v396, 18
      %v453 = vpop.permute.xlu0 %452
      %454 = vrot.lane.b32.xlu0 %v400, 18
      %v455 = vpop.permute.xlu0 %454
      %vm456 = vcmask 146432
      %v457 = vsel %vm456, %v453, %v455
      %v461 = vmul.f32 %v360, %v453
      %v462 = vmul.f32 %v352, %v457
      %v463 = vmul.f32 %v362, %v455
      %v464 = vmul.f32 %v361, %v453
      %v465 = vmul.f32 %v353, %v457
      %v466 = vmul.f32 %v363, %v455
      %v467 = vpack.c.bf16 %v464, %v461
      %v468 = vpack.c.bf16 %v465, %v462
      %v469 = vpack.c.bf16 %v466, %v463
      %470 = vrot.lane.b32.xlu0 %v378, 32
      %v471 = vpop.permute.xlu0 %470
      %472 = vrot.lane.b32.xlu0 %v382, 32
      %v473 = vpop.permute.xlu0 %472
      %vm474 = vcmask 261120
      %v475 = vsel %vm474, %v471, %v473
      %v479 = vmul.f32 %v360, %v471
      %v480 = vmul.f32 %v352, %v475
      %v481 = vmul.f32 %v362, %v473
      %v482 = vmul.f32 %v361, %v471
      %v483 = vmul.f32 %v353, %v475
      %v484 = vmul.f32 %v363, %v473
      %v485 = vpack.c.bf16 %v482, %v479
      %v486 = vpack.c.bf16 %v483, %v480
      %v487 = vpack.c.bf16 %v484, %v481
      %488 = vrot.lane.b32.xlu0 %v396, 34
      %v489 = vpop.permute.xlu0 %488
      %490 = vrot.lane.b32.xlu0 %v400, 34
      %v491 = vpop.permute.xlu0 %490
      %vm492 = vcmask 277504
      %v493 = vsel %vm492, %v489, %v491
      %v497 = vmul.f32 %v360, %v489
      %v498 = vmul.f32 %v352, %v493
      %v499 = vmul.f32 %v362, %v491
      %v500 = vmul.f32 %v361, %v489
      %v501 = vmul.f32 %v353, %v493
      %v502 = vmul.f32 %v363, %v491
      %v503 = vpack.c.bf16 %v500, %v497
      %v504 = vpack.c.bf16 %v501, %v498
      %v505 = vpack.c.bf16 %v502, %v499
      %509 = vrot.lane.b32.xlu0 %v407, 127
      %v510 = vpop.permute.xlu0 %509
      %511 = vrot.lane.b32.xlu0 %v408, 127
      %v512 = vpop.permute.xlu0 %511
      %513 = vrot.lane.b32.xlu0 %v409, 127
      %v514 = vpop.permute.xlu0 %513
      %vm515 = vcmask 1039360
      %v516 = vsel %vm515, %v510, %v512
      %v517 = vsel %vm515, %v512, %v514
      %523 = vrot.lane.b32.xlu0 %v427, 126
      %v524 = vpop.permute.xlu0 %523
      %525 = vrot.lane.b32.xlu0 %v428, 126
      %v526 = vpop.permute.xlu0 %525
      %527 = vrot.lane.b32.xlu0 %v429, 126
      %v528 = vpop.permute.xlu0 %527
      %vm529 = vcmask 1031168
      %v530 = vsel %vm529, %v524, %v526
      %v531 = vsel %vm529, %v526, %v528
      %537 = vrot.lane.b32.xlu0 %v447, 112
      %v538 = vpop.permute.xlu0 %537
      %539 = vrot.lane.b32.xlu0 %v448, 112
      %v540 = vpop.permute.xlu0 %539
      %541 = vrot.lane.b32.xlu0 %v449, 112
      %v542 = vpop.permute.xlu0 %541
      %vm543 = vcmask 916480
      %v544 = vsel %vm543, %v538, %v540
      %v545 = vsel %vm543, %v540, %v542
      %551 = vrot.lane.b32.xlu0 %v467, 110
      %v552 = vpop.permute.xlu0 %551
      %553 = vrot.lane.b32.xlu0 %v468, 110
      %v554 = vpop.permute.xlu0 %553
      %555 = vrot.lane.b32.xlu0 %v469, 110
      %v556 = vpop.permute.xlu0 %555
      %vm557 = vcmask 900096
      %v558 = vsel %vm557, %v552, %v554
      %v559 = vsel %vm557, %v554, %v556
      %565 = vrot.lane.b32.xlu0 %v485, 96
      %v566 = vpop.permute.xlu0 %565
      %567 = vrot.lane.b32.xlu0 %v486, 96
      %v568 = vpop.permute.xlu0 %567
      %569 = vrot.lane.b32.xlu0 %v487, 96
      %v570 = vpop.permute.xlu0 %569
      %vm571 = vcmask 785408
      %v572 = vsel %vm571, %v566, %v568
      %v573 = vsel %vm571, %v568, %v570
      %576 = vrot.lane.b32.xlu0 %v407, 95
      %v577 = vpop.permute.xlu0 %576
      %578 = vrot.lane.b32.xlu0 %v408, 95
      %v579 = vpop.permute.xlu0 %578
      %580 = vrot.lane.b32.xlu0 %v409, 95
      %v581 = vpop.permute.xlu0 %580
      %vm582 = vcmask 777216
      %v583 = vsel %vm582, %v577, %v579
      %v584 = vsel %vm582, %v579, %v581
      %590 = vrot.lane.b32.xlu0 %v503, 94
      %v591 = vpop.permute.xlu0 %590
      %592 = vrot.lane.b32.xlu0 %v504, 94
      %v593 = vpop.permute.xlu0 %592
      %594 = vrot.lane.b32.xlu0 %v505, 94
      %v595 = vpop.permute.xlu0 %594
      %vm596 = vcmask 769024
      %v597 = vsel %vm596, %v591, %v593
      %v598 = vsel %vm596, %v593, %v595
      %v601 = vld [vmem:[%s3] sm:$0xff]
      %v602 = vld [vmem:[%s3 + $0x8] sm:$0xff]
      %v603 = vld [vmem:[%s3 + $0x10] sm:$0xff]
      %v604 = vld [vmem:[%s3 + $0x18] sm:$0xff]
      %v605 = vld [vmem:[%s3 + $0x20] sm:$0xff]
      %v606 = vld [vmem:[%s3 + $0x28] sm:$0xff]
      %v607 = vld [vmem:[%s3 + $0x30] sm:$0xff]
      %v608 = vld [vmem:[%s3 + $0x38] sm:$0xff]
      %v617 = vunpack.c.l.b16 %v601
      %v618 = vunpack.c.h.b16 %v601
      %v619 = vunpack.c.l.b16 %v602
      %v620 = vunpack.c.h.b16 %v602
      %v621 = vunpack.c.l.b16 %v603
      %v622 = vunpack.c.h.b16 %v603
      %v623 = vunpack.c.l.b16 %v604
      %v624 = vunpack.c.h.b16 %v604
      %v625 = vunpack.c.l.b16 %v605
      %v626 = vunpack.c.h.b16 %v605
      %v627 = vunpack.c.l.b16 %v606
      %v628 = vunpack.c.h.b16 %v606
      %v629 = vunpack.c.l.b16 %v607
      %v630 = vunpack.c.h.b16 %v607
      %v631 = vunpack.c.l.b16 %v608
      %v632 = vunpack.c.h.b16 %v608
      %v633 = vpack.c.b16 %v619, %v617
      %v634 = vpack.c.b16 %v620, %v618
      %v635 = vpack.c.b16 %v623, %v621
      %v636 = vpack.c.b16 %v624, %v622
      %v637 = vpack.c.b16 %v627, %v625
      %v638 = vpack.c.b16 %v628, %v626
      %v639 = vpack.c.b16 %v631, %v629
      %v640 = vpack.c.b16 %v632, %v630
      %v646 = vsel %vm436, %v634, 0
      %v649 = vsel %vm436, %v636, 0
      %v652 = vsel %vm436, %v638, 0
      %v655 = vsel %vm436, %v640, 0
      %657 = vmatprep.subr.bf16.mxu0 %v406
      %658 = vmatpush1.bf16.msra.mxu0 %v405
      %659 = vmatprep.subr.bf16.mxu0 %v517
      %660 = vmatpush1.bf16.msra.mxu0 %v516
      %661 = vmatprep.subr.bf16.mxu0 %v531
      %662 = vmatpush1.bf16.msra.mxu0 %v530
      %663 = vmatprep.subr.bf16.mxu0 %v545
      %664 = vmatpush1.bf16.msra.mxu0 %v544
      %665 = vmatprep.subr.bf16.mxu0 %v451
      %666 = vmatpush1.bf16.msra.mxu0 %v450
      %667 = vmatprep.subr.bf16.mxu0 %v559
      %668 = vmatpush1.bf16.msra.mxu0 %v558
      %669 = vmatprep.subr.bf16.mxu0 %v573
      %670 = vmatpush1.bf16.msra.mxu0 %v572
      %671 = vmatprep.subr.bf16.mxu0 %v584
      %672 = vmatpush1.bf16.msra.mxu0 %v583
      %673 = vmatprep.subr.bf16.mxu0 %v598
      %674 = vmatpush1.bf16.msra.mxu0 %v597
      %675 = vmatprep.subr.bf16.mxu0 0
      %676 = vmatpush1.bf16.msra.mxu0 0
      %677 = vmatprep.subr.bf16.mxu0 0
      %678 = vmatpush1.bf16.msra.mxu0 0
      %679 = vmatprep.subr.bf16.mxu0 0
      %680 = vmatpush1.bf16.msra.mxu0 0
      %681 = vmatprep.subr.bf16.mxu0 0
      %682 = vmatpush1.bf16.msra.mxu0 0
      %683 = vmatprep.subr.bf16.mxu0 0
      %684 = vmatpush1.bf16.msra.mxu0 0
      %685 = vmatprep.subr.bf16.mxu0 0
      %686 = vmatpush1.bf16.msra.mxu0 0
      %687 = vmatprep.subr.bf16.mxu0 0
      %688 = vmatpush1.bf16.msra.mxu0 0
      %689 = vmatprep.mubr.bf16.mxu0 %v646
      %690 = vmatmul.mubr.bf16.gmra.mrb[0].mxu0 %v633
      %v691 = vpop.f32.mrb[0].mxu0
      %v692 = vadd.f32 0.0, %v691
      %v693 = vpop.f32.mrb[0].mxu0
      %v694 = vadd.f32 0.0, %v693
      %v695 = vpop.f32.mrb[0].mxu0
      %v696 = vadd.f32 0.0, %v695
      %v697 = vpop.f32.mrb[0].mxu0
      %v698 = vadd.f32 0.0, %v697
      %699 = vmatprep.mubr.bf16.mxu0 %v649
      %700 = vmatmul.mubr.bf16.gmra.mrb[0].mxu0 %v635
      %v701 = vpop.f32.mrb[0].mxu0
      %v702 = vadd.f32 0.0, %v701
      %v703 = vpop.f32.mrb[0].mxu0
      %v704 = vadd.f32 0.0, %v703
      %v705 = vpop.f32.mrb[0].mxu0
      %v706 = vadd.f32 0.0, %v705
      %v707 = vpop.f32.mrb[0].mxu0
      %v708 = vadd.f32 0.0, %v707
      %709 = vmatprep.mubr.bf16.mxu0 %v652
      %710 = vmatmul.mubr.bf16.gmra.mrb[0].mxu0 %v637
      %v711 = vpop.f32.mrb[0].mxu0
      %v712 = vadd.f32 0.0, %v711
      %v713 = vpop.f32.mrb[0].mxu0
      %v714 = vadd.f32 0.0, %v713
      %v715 = vpop.f32.mrb[0].mxu0
      %v716 = vadd.f32 0.0, %v715
      %v717 = vpop.f32.mrb[0].mxu0
      %v718 = vadd.f32 0.0, %v717
      %719 = vmatprep.mubr.bf16.mxu0 %v655
      %720 = vmatmul.mubr.bf16.gmra.mrb[0].mxu0 %v639
      %v721 = vpop.f32.mrb[0].mxu0
      %v722 = vadd.f32 0.0, %v721
      %v723 = vpop.f32.mrb[0].mxu0
      %v724 = vadd.f32 0.0, %v723
      %v725 = vpop.f32.mrb[0].mxu0
      %v726 = vadd.f32 0.0, %v725
      %v727 = vpop.f32.mrb[0].mxu0
      %v728 = vadd.f32 0.0, %v727
      %729 = vdwg.mxu0
      %v730 = vmul.f32 %v692, 0.5
      %v731 = vmul.f32 %v694, 0.5
      %v732 = vmul.f32 %v696, 0.5
      %v733 = vmul.f32 %v698, 0.5
      %v734 = vmul.f32 %v702, 0.5
      %v735 = vmul.f32 %v704, 0.5
      %v736 = vmul.f32 %v706, 0.5
      %v737 = vmul.f32 %v708, 0.5
      %v738 = vmul.f32 %v692, 0.70710677
      %v739 = vmul.f32 %v694, 0.70710677
      %v740 = vmul.f32 %v696, 0.70710677
      %v741 = vmul.f32 %v698, 0.70710677
      %v742 = vmul.f32 %v702, 0.70710677
      %v743 = vmul.f32 %v704, 0.70710677
      %v744 = vmul.f32 %v706, 0.70710677
      %v745 = vmul.f32 %v708, 0.70710677
      %v746 = verf.f32.pop %v738
      %v747 = verf.f32.pop %v739
      %v748 = verf.f32.pop %v740
      %v749 = verf.f32.pop %v741
      %v750 = verf.f32.pop %v742
      %v751 = verf.f32.pop %v743
      %v752 = verf.f32.pop %v744
      %v753 = verf.f32.pop %v745
      %v754 = vadd.f32 %v746, 1.0
      %v755 = vadd.f32 %v747, 1.0
      %v756 = vadd.f32 %v748, 1.0
      %v757 = vadd.f32 %v749, 1.0
      %v758 = vadd.f32 %v750, 1.0
      %v759 = vadd.f32 %v751, 1.0
      %v760 = vadd.f32 %v752, 1.0
      %v761 = vadd.f32 %v753, 1.0
      %v762 = vmul.f32 %v730, %v754
      %v763 = vmul.f32 %v731, %v755
      %v764 = vmul.f32 %v732, %v756
      %v765 = vmul.f32 %v733, %v757
      %v766 = vmul.f32 %v734, %v758
      %v767 = vmul.f32 %v735, %v759
      %v768 = vmul.f32 %v736, %v760
      %v769 = vmul.f32 %v737, %v761
      %v770 = vmul.f32 %v762, %v712
      %v771 = vmul.f32 %v763, %v714
      %v772 = vmul.f32 %v764, %v716
      %v773 = vmul.f32 %v765, %v718
      %v774 = vmul.f32 %v766, %v722
      %v775 = vmul.f32 %v767, %v724
      %v776 = vmul.f32 %v768, %v726
      %v777 = vmul.f32 %v769, %v728
      %v778 = vld [vmem:[%s4] sm:$0xf]
      %v779 = vld [vmem:[%s4 + $0x4] sm:$0xf]
      %v780 = vpack.c.bf16 %v772, %v770
      %v781 = vpack.c.bf16 %v773, %v771
      %v782 = vpack.c.bf16 %v776, %v774
      %v783 = vpack.c.bf16 %v777, %v775
      %v786 = vunpack.c.l.b16 %v778
      %v787 = vunpack.c.l.b16 %v779
      %v788 = vpack.c.b16 %v787, %v786
      %v790 = vsel %vm474, %v788, 0
      %792 = vmatprep.subr.bf16.mxu0 %v781
      %793 = vmatpush1.bf16.msra.mxu0 %v780
      %794 = vmatprep.subr.bf16.mxu0 %v783
      %795 = vmatpush1.bf16.msra.mxu0 %v782
      %796 = vmatprep.subr.bf16.mxu0 0
      %797 = vmatpush1.bf16.msra.mxu0 0
      %798 = vmatprep.subr.bf16.mxu0 0
      %799 = vmatpush1.bf16.msra.mxu0 0
      %800 = vmatprep.subr.bf16.mxu0 0
      %801 = vmatpush1.bf16.msra.mxu0 0
      %802 = vmatprep.subr.bf16.mxu0 0
      %803 = vmatpush1.bf16.msra.mxu0 0
      %804 = vmatprep.subr.bf16.mxu0 0
      %805 = vmatpush1.bf16.msra.mxu0 0
      %806 = vmatprep.subr.bf16.mxu0 0
      %807 = vmatpush1.bf16.msra.mxu0 0
      %808 = vmatprep.subr.bf16.mxu0 0
      %809 = vmatpush1.bf16.msra.mxu0 0
      %810 = vmatprep.subr.bf16.mxu0 0
      %811 = vmatpush1.bf16.msra.mxu0 0
      %812 = vmatprep.subr.bf16.mxu0 0
      %813 = vmatpush1.bf16.msra.mxu0 0
      %814 = vmatprep.subr.bf16.mxu0 0
      %815 = vmatpush1.bf16.msra.mxu0 0
      %816 = vmatprep.subr.bf16.mxu0 0
      %817 = vmatpush1.bf16.msra.mxu0 0
      %818 = vmatprep.subr.bf16.mxu0 0
      %819 = vmatpush1.bf16.msra.mxu0 0
      %820 = vmatprep.subr.bf16.mxu0 0
      %821 = vmatpush1.bf16.msra.mxu0 0
      %822 = vmatprep.subr.bf16.mxu0 0
      %823 = vmatpush1.bf16.msra.mxu0 0
      %824 = vmatprep.mubr.bf16.mxu0 0
      %825 = vmatmul.mubr.bf16.gmra.mrb[0].mxu0 %v790
      %v826 = vpop.f32.mrb[0].mxu0
      %v827 = vadd.f32 0.0, %v826
      %v828 = vpop.f32.mrb[0].mxu0
      %v829 = vadd.f32 0.0, %v828
      %v830 = vpop.f32.mrb[0].mxu0
      %v831 = vadd.f32 0.0, %v830
      %v832 = vpop.f32.mrb[0].mxu0
      %v833 = vadd.f32 0.0, %v832
      %834 = vdwg.mxu0
      %v835 = vadd.f32 %v253, %v827
      %v836 = vadd.f32 %v254, %v829
      %v837 = vadd.f32 %v255, %v831
      %v838 = vadd.f32 %v256, %v833
      %839 = vst [vmem:[%s251] sm:$0xff] %v835
      %840 = vst [vmem:[%s251 + $0x8] sm:$0xff] %v836
      %841 = vst [vmem:[%s251 + $0x10] sm:$0xff] %v837
      %842 = vst [vmem:[%s251 + $0x18] sm:$0xff] %v838
      %p843 = scmp.lt.s32.totalorder %s17, 1
      %s844 = scalar_select %p843, %s17, 1
      %s845 = smul.addr %s844, 4
      %s846 = smul.addr %s845, 8
      %s847 = scalar_lea.vmem %s6, %s846
      // Predicated region
      $region45: #{transformer_block_with_mask.7} parent=43 // pred_check
        %p848 = pneg %p166
      $region46: #{transformer_block_with_mask.7} parent=43 // pred_check_branch
        %850 = sbr.rel (%p848) target = $region48
      $region47: #{transformer_block_with_mask.7} parent=43 // pred_region
        _
      $region48: #{transformer_block_with_mask.7} parent=43 // pred_fallthru
        _
    $region44: #{transformer_block_with_mask.7} parent=5 // pred_fallthru
      _
    %p851 = scmp.le.s32.totalorder 2, %s12
    // Predicated region
    $region49: #{transformer_block_with_mask.7} parent=5 // pred_check
      %p852 = pneg %p851
    $region50: #{transformer_block_with_mask.7} parent=5 // pred_check_branch
      %854 = sbr.rel (%p852) target = $region52
    $region51: #{transformer_block_with_mask.7} parent=5 // pred_region
      %s855 = ssub.s32 %s12, 2
      // Predicated region
      $region53: #{transformer_block_with_mask.7} parent=51 // pred_check
        %p856 = pneg %p172
      $region54: #{transformer_block_with_mask.7} parent=51 // pred_check_branch
        %858 = sbr.rel (%p856) target = $region56
      $region55: #{transformer_block_with_mask.7} parent=51 // pred_region
        %p859 = scmp.lt.s32.totalorder %s18, 1
        %s860 = scalar_select %p859, %s18, 1
        %s861 = smul.addr %s860, 4
        %s862 = smul.addr %s861, 8
        %s863 = scalar_lea.vmem %s6, %s862
      $region56: #{transformer_block_with_mask.7} parent=51 // pred_fallthru
        _
    $region52: #{transformer_block_with_mask.7} parent=5 // pred_fallthru
      _
  $region6: #{transformer_block_with_mask.7} parent=0 // loop_footer
    %s16 = sadd.s32 1, %s12
  $region7: #{transformer_block_with_mask.7} parent=0 // loop_footer_branch
    %11 = sbr.rel target = $region3
  $region8: #{transformer_block_with_mask.7} parent=0 // loop_exit
    _

</llo_original>
